<compile_context>
chip_gen: v7x
topology: tpu7x:2x2x1
jax: 0.10.0
libtpu: 0.0.40
codegen_flags: <defaults>
</compile_context>

<pallas_src>
import functools

import jax
import jax.numpy as jnp
from jax import lax
from jax.experimental import pallas as pl
from jax.experimental.pallas import tpu as pltpu

NEG_INF = -1e30


def _full_spec(shape):
    zeros = (0,) * len(shape)
    return pl.BlockSpec(shape, lambda i, z=zeros: z)


# ---------------------------------------------------------------------------
# Single fused kernel: GATConv1 -> BN -> ReLU -> pool, GATConv2 -> BN -> ReLU
# -> pool, (p1 + p2) -> fc+ReLU -> fc1 -> log_softmax
# ---------------------------------------------------------------------------
def gat_fused_kernel(x_ref, mask_ref, pool_ref,
                     w1_ref, asrc1_ref, adst1_ref, b1_ref, s1_ref, sh1_ref,
                     w2_ref, asrc2_ref, adst2_ref, b2_ref, s2_ref, sh2_ref,
                     wfc_ref, bfc_ref, wfc1_ref, bfc1_ref,
                     out_ref):
    mask = mask_ref[...].astype(jnp.float32)      # [Np, Np] additive bias
    pool_bf = pool_ref[...]                       # [G, Np] bf16

    def gat_layer(x_bf, w_ref, asrc_ref, adst_ref, bias_ref, scale_ref,
                  shift_ref):
        # h = x @ W  (bf16 operands, f32 accumulation on the MXU)
        h = jnp.dot(x_bf, w_ref[...],
                    preferred_element_type=jnp.float32)            # [Np, H]

        # attention logits e[i, j] = LeakyReLU(a_dst[i] + a_src[j], 0.2)
        # a_dst: VPU multiply + lane reduce -> [Np, 1]
        a_dst = jnp.sum(h * adst_ref[...], axis=-1, keepdims=True)
        # a_src: tiny matvec, keeps the [1, Np] broadcast layout for free
        a_src = lax.dot_general(asrc_ref[...], h, (((1,), (1,)), ((), ())),
                                preferred_element_type=jnp.float32)  # [1, Np]
        e = a_dst + a_src                                            # [Np, Np]
        e = jnp.where(e > 0, e, 0.2 * e)                             # LeakyReLU
        e = e + mask                                                 # mask edges

        # softmax over incoming edges (per destination row)
        m = jnp.max(e, axis=-1, keepdims=True)
        p = jnp.exp(e - m)
        denom = jnp.sum(p, axis=-1, keepdims=True)
        alpha = p * pl.reciprocal(denom, approx=True)                # [Np, Np]

        out = jnp.dot(alpha.astype(jnp.bfloat16), h.astype(jnp.bfloat16),
                      preferred_element_type=jnp.float32) + bias_ref[...]

        # BatchNorm (inference, folded) + ReLU
        y = jnp.maximum(out * scale_ref[...] + shift_ref[...], 0.0)  # [Np, H]

        # global_mean_pool (pool_mat already row-normalized one-hot(batch))
        pooled = jnp.dot(pool_bf, y.astype(jnp.bfloat16),
                         preferred_element_type=jnp.float32)         # [G, H]
        return y, pooled

    x0 = x_ref[...]                                                  # bf16
    y1, p1 = gat_layer(x0, w1_ref, asrc1_ref, adst1_ref, b1_ref, s1_ref,
                       sh1_ref)
    _, p2 = gat_layer(y1.astype(jnp.bfloat16), w2_ref, asrc2_ref, adst2_ref,
                      b2_ref, s2_ref, sh2_ref)

    # classifier head: (x1 + x2) -> fc + ReLU -> (dropout = id) -> fc1
    s = (p1 + p2).astype(jnp.bfloat16)                               # [G, 512]
    hfc = jnp.dot(s, wfc_ref[...],
                  preferred_element_type=jnp.float32) + bfc_ref[...]
    hfc = jnp.maximum(hfc, 0.0)                                      # [G, 256]
    # TODO(synk): nn.Dropout(0.2) is stochastic only in training; identity here.
    logits = jnp.dot(hfc.astype(jnp.bfloat16), wfc1_ref[...],
                     preferred_element_type=jnp.float32) + bfc1_ref[...]

    # log_softmax(dim=1)
    mm = jnp.max(logits, axis=-1, keepdims=True)
    z = logits - mm
    lse = jnp.log(jnp.sum(jnp.exp(z), axis=-1, keepdims=True))
    out_ref[...] = z - lse                                           # [G, C]


def gat_forward(params, x, mask_bias, pool_mat):
    G = pool_mat.shape[0]
    C = params["w_fc1"].shape[1]
    args = (x, mask_bias, pool_mat,
            params["w_g1"], params["asrc1"], params["adst1"],
            params["bias_g1"], params["bn1_scale"], params["bn1_shift"],
            params["w_g2"], params["asrc2"], params["adst2"],
            params["bias_g2"], params["bn2_scale"], params["bn2_shift"],
            params["w_fc"], params["b_fc"], params["w_fc1"], params["b_fc1"])
    return pl.pallas_call(
        gat_fused_kernel,
        out_shape=jax.ShapeDtypeStruct((G, C), jnp.float32),
        grid=(1,),
        in_specs=[_full_spec(a.shape) for a in args],
        out_specs=_full_spec((G, C)),
        compiler_params=pltpu.CompilerParams(
            dimension_semantics=("arbitrary",),
            vmem_limit_bytes=64 * 1024 * 1024),
    )(*args)


# ---------------------------------------------------------------------------
# Parameter / data construction
# ---------------------------------------------------------------------------
def fold_bn(gamma, beta, mean, var, eps=1e-5):
    scale = gamma / jnp.sqrt(var + eps)
    shift = beta - mean * scale
    return scale, shift


def make_params(key, feature, hidden, out_channel):
    ks = jax.random.split(key, 16)
    f32 = jnp.float32
    bf16 = jnp.bfloat16

    def glorot(k, shape):
        fan_in, fan_out = shape[0], shape[-1]
        lim = jnp.sqrt(6.0 / (fan_in + fan_out))
        return jax.random.uniform(k, shape, f32, -lim, lim)

    params = {}
    # GATConv1
    params["w_g1"] = glorot(ks[0], (feature, hidden)).astype(bf16)
    params["asrc1"] = glorot(ks[1], (1, hidden))
    params["adst1"] = glorot(ks[2], (1, hidden))
    params["bias_g1"] = jnp.zeros((1, hidden), f32)
    g1 = 1.0 + 0.1 * jax.random.normal(ks[3], (1, hidden), f32)
    b1 = 0.1 * jax.random.normal(ks[4], (1, hidden), f32)
    m1 = 0.1 * jax.random.normal(ks[5], (1, hidden), f32)
    v1 = 1.0 + 0.1 * jax.random.uniform(ks[6], (1, hidden), f32)
    params["bn1_scale"], params["bn1_shift"] = fold_bn(g1, b1, m1, v1)
    # GATConv2
    params["w_g2"] = glorot(ks[7], (hidden, hidden)).astype(bf16)
    params["asrc2"] = glorot(ks[8], (1, hidden))
    params["adst2"] = glorot(ks[9], (1, hidden))
    params["bias_g2"] = jnp.zeros((1, hidden), f32)
    g2 = 1.0 + 0.1 * jax.random.normal(ks[10], (1, hidden), f32)
    b2 = 0.1 * jax.random.normal(ks[11], (1, hidden), f32)
    m2 = 0.1 * jax.random.normal(ks[12], (1, hidden), f32)
    v2 = 1.0 + 0.1 * jax.random.uniform(ks[13], (1, hidden), f32)
    params["bn2_scale"], params["bn2_shift"] = fold_bn(g2, b2, m2, v2)
    # fc: 512 -> 256 (ReLU), fc1: 256 -> out_channel
    params["w_fc"] = glorot(ks[14], (hidden, 256)).astype(bf16)
    params["b_fc"] = jnp.zeros((1, 256), f32)
    params["w_fc1"] = glorot(ks[15], (256, out_channel)).astype(bf16)
    params["b_fc1"] = jnp.zeros((1, out_channel), f32)
    return params


def build_graph(key, num_graphs, nodes_per_graph, feature):
    """Deterministic synthetic batched graph (ring per graph + self loops),
    padded to a lane-dense node count (multiple of 128)."""
    N = num_graphs * nodes_per_graph
    N_pad = ((N + 127) // 128) * 128

    x = jax.random.normal(key, (N, feature), jnp.float32)
    x_pad = jnp.zeros((N_pad, feature), jnp.float32).at[:N].set(x)

    batch = jnp.repeat(jnp.arange(num_graphs), nodes_per_graph)

    adj = jnp.zeros((N_pad, N_pad), jnp.float32)
    for g in range(num_graphs):
        base = g * nodes_per_graph
        for i in range(nodes_per_graph):
            src = base + i
            dst = base + (i + 1) % nodes_per_graph
            # bidirectional ring edges: adj[dst, src] = 1 means edge src -> dst
            adj = adj.at[dst, src].set(1.0)
            adj = adj.at[src, dst].set(1.0)
    # self loops for ALL rows (PyG GATConv default add_self_loops=True; padded
    # rows also get one so the masked softmax never sees an all -inf row)
    adj = adj + jnp.eye(N_pad, dtype=jnp.float32)
    adj = jnp.minimum(adj, 1.0)

    # additive mask bias: 0 on edges, -1e30 elsewhere (bf16, halves DMA bytes)
    mask_bias = jnp.where(adj > 0, 0.0, NEG_INF).astype(jnp.bfloat16)

    # global_mean_pool matrix: [G, N_pad], row g = one_hot(batch == g) / count
    onehot = (batch[None, :] == jnp.arange(num_graphs)[:, None]).astype(
        jnp.float32)
    counts = jnp.sum(onehot, axis=1, keepdims=True)
    pool_real = onehot / counts
    pool_mat = jnp.zeros((num_graphs, N_pad), jnp.float32).at[:, :N].set(
        pool_real).astype(jnp.bfloat16)

    return x_pad.astype(jnp.bfloat16), mask_bias, pool_mat


if __name__ == "__main__":
    FEATURE = 16         # GAT(feature=16, ...)
    HIDDEN = 512         # fixed by the module
    OUT_CHANNEL = 8
    NUM_GRAPHS = 4
    NODES_PER_GRAPH = 8  # N = 32 real nodes, padded to 128 in the wrapper

    key = jax.random.PRNGKey(0)
    k_params, k_data = jax.random.split(key)

    params = make_params(k_params, FEATURE, HIDDEN, OUT_CHANNEL)
    x, mask_bias, pool_mat = build_graph(k_data, NUM_GRAPHS, NODES_PER_GRAPH,
                                         FEATURE)

    fwd = jax.jit(functools.partial(gat_forward, params))
    log_probs = fwd(x, mask_bias, pool_mat)
    jax.block_until_ready(log_probs)

    assert log_probs.shape == (NUM_GRAPHS, OUT_CHANNEL)
    assert bool(jnp.all(jnp.isfinite(log_probs)))
    # log_softmax rows must sum to ~1 in probability space
    assert bool(jnp.allclose(jnp.sum(jnp.exp(log_probs), axis=1), 1.0,
                             atol=1e-4))
    print("KERNEL_OK")
</pallas_src>

<mosaic_0001>
module attributes {stable_mosaic.version = 11 : i64} {
  func.func @gat_fused_kernel(%arg0: i32, %arg1: memref<128x16xbf16, #tpu.memory_space<vmem>>, %arg2: memref<128x128xbf16, #tpu.memory_space<vmem>>, %arg3: memref<4x128xbf16, #tpu.memory_space<vmem>>, %arg4: memref<16x512xbf16, #tpu.memory_space<vmem>>, %arg5: memref<1x512xf32, #tpu.memory_space<vmem>>, %arg6: memref<1x512xf32, #tpu.memory_space<vmem>>, %arg7: memref<1x512xf32, #tpu.memory_space<vmem>>, %arg8: memref<1x512xf32, #tpu.memory_space<vmem>>, %arg9: memref<1x512xf32, #tpu.memory_space<vmem>>, %arg10: memref<512x512xbf16, #tpu.memory_space<vmem>>, %arg11: memref<1x512xf32, #tpu.memory_space<vmem>>, %arg12: memref<1x512xf32, #tpu.memory_space<vmem>>, %arg13: memref<1x512xf32, #tpu.memory_space<vmem>>, %arg14: memref<1x512xf32, #tpu.memory_space<vmem>>, %arg15: memref<1x512xf32, #tpu.memory_space<vmem>>, %arg16: memref<512x256xbf16, #tpu.memory_space<vmem>>, %arg17: memref<1x256xf32, #tpu.memory_space<vmem>>, %arg18: memref<256x8xbf16, #tpu.memory_space<vmem>>, %arg19: memref<1x8xf32, #tpu.memory_space<vmem>>, %arg20: memref<4x8xf32, #tpu.memory_space<vmem>>) attributes {dimension_semantics = [#tpu.dimension_semantics<arbitrary>], iteration_bounds = array<i64: 1>, scalar_prefetch = 0 : i64, scratch_operands = 0 : i64, tpu.core_type = #tpu.core_type<tc>, window_params = [{pipeline_mode = #tpu.pipeline_mode<synchronous>, transform_indices = @transform_0, window_bounds = array<i64: 128, 16>}, {pipeline_mode = #tpu.pipeline_mode<synchronous>, transform_indices = @transform_1, window_bounds = array<i64: 128, 128>}, {pipeline_mode = #tpu.pipeline_mode<synchronous>, transform_indices = @transform_2, window_bounds = array<i64: 4, 128>}, {pipeline_mode = #tpu.pipeline_mode<synchronous>, transform_indices = @transform_3, window_bounds = array<i64: 16, 512>}, {pipeline_mode = #tpu.pipeline_mode<synchronous>, transform_indices = @transform_4, window_bounds = array<i64: 1, 512>}, {pipeline_mode = #tpu.pipeline_mode<synchronous>, transform_indices = @transform_5, window_bounds = array<i64: 1, 512>}, {pipeline_mode = #tpu.pipeline_mode<synchronous>, transform_indices = @transform_6, window_bounds = array<i64: 1, 512>}, {pipeline_mode = #tpu.pipeline_mode<synchronous>, transform_indices = @transform_7, window_bounds = array<i64: 1, 512>}, {pipeline_mode = #tpu.pipeline_mode<synchronous>, transform_indices = @transform_8, window_bounds = array<i64: 1, 512>}, {pipeline_mode = #tpu.pipeline_mode<synchronous>, transform_indices = @transform_9, window_bounds = array<i64: 512, 512>}, {pipeline_mode = #tpu.pipeline_mode<synchronous>, transform_indices = @transform_10, window_bounds = array<i64: 1, 512>}, {pipeline_mode = #tpu.pipeline_mode<synchronous>, transform_indices = @transform_11, window_bounds = array<i64: 1, 512>}, {pipeline_mode = #tpu.pipeline_mode<synchronous>, transform_indices = @transform_12, window_bounds = array<i64: 1, 512>}, {pipeline_mode = #tpu.pipeline_mode<synchronous>, transform_indices = @transform_13, window_bounds = array<i64: 1, 512>}, {pipeline_mode = #tpu.pipeline_mode<synchronous>, transform_indices = @transform_14, window_bounds = array<i64: 1, 512>}, {pipeline_mode = #tpu.pipeline_mode<synchronous>, transform_indices = @transform_15, window_bounds = array<i64: 512, 256>}, {pipeline_mode = #tpu.pipeline_mode<synchronous>, transform_indices = @transform_16, window_bounds = array<i64: 1, 256>}, {pipeline_mode = #tpu.pipeline_mode<synchronous>, transform_indices = @transform_17, window_bounds = array<i64: 256, 8>}, {pipeline_mode = #tpu.pipeline_mode<synchronous>, transform_indices = @transform_18, window_bounds = array<i64: 1, 8>}, {pipeline_mode = #tpu.pipeline_mode<synchronous>, transform_indices = @transform_19, window_bounds = array<i64: 4, 8>}]} {
    %c0 = arith.constant 0 : index
    %c0_0 = arith.constant 0 : index
    %0 = vector.load %arg2[%c0, %c0_0] : memref<128x128xbf16, #tpu.memory_space<vmem>>, vector<128x128xbf16>
    %1 = arith.extf %0 : vector<128x128xbf16> to vector<128x128xf32>
    %c0_1 = arith.constant 0 : index
    %c0_2 = arith.constant 0 : index
    %2 = vector.load %arg3[%c0_1, %c0_2] : memref<4x128xbf16, #tpu.memory_space<vmem>>, vector<4x128xbf16>
    %c0_3 = arith.constant 0 : index
    %c0_4 = arith.constant 0 : index
    %3 = vector.load %arg1[%c0_3, %c0_4] : memref<128x16xbf16, #tpu.memory_space<vmem>>, vector<128x16xbf16>
    %c0_5 = arith.constant 0 : index
    %c0_6 = arith.constant 0 : index
    %4 = vector.load %arg4[%c0_5, %c0_6] : memref<16x512xbf16, #tpu.memory_space<vmem>>, vector<16x512xbf16>
    %cst = arith.constant dense<0.000000e+00> : vector<128x512xf32>
    %5 = tpu.matmul %3, %4, %cst {dimension_numbers = #tpu.dot_dimension_numbers<[1], [0], [0], [1], [0, 0, 1, 1], [], []>} : vector<128x16xbf16>, vector<16x512xbf16>, vector<128x512xf32> -> vector<128x512xf32>
    %c0_7 = arith.constant 0 : index
    %c0_8 = arith.constant 0 : index
    %6 = vector.load %arg6[%c0_7, %c0_8] : memref<1x512xf32, #tpu.memory_space<vmem>>, vector<1x512xf32>
    %7 = vector.broadcast %6 : vector<1x512xf32> to vector<128x512xf32>
    %8 = arith.mulf %5, %7 : vector<128x512xf32>
    %cst_9 = arith.constant dense<0.000000e+00> : vector<128xf32>
    %9 = vector.multi_reduction <add>, %8, %cst_9 [1] : vector<128x512xf32> to vector<128xf32>
    %10 = vector.shape_cast %9 : vector<128xf32> to vector<128x1xf32>
    %c0_10 = arith.constant 0 : index
    %c0_11 = arith.constant 0 : index
    %11 = vector.load %arg5[%c0_10, %c0_11] : memref<1x512xf32, #tpu.memory_space<vmem>>, vector<1x512xf32>
    %cst_12 = arith.constant dense<0.000000e+00> : vector<1x128xf32>
    %12 = tpu.matmul %11, %5, %cst_12 {dimension_numbers = #tpu.dot_dimension_numbers<[1], [1], [0], [0], [0, 0, 1, 0], [], []>} : vector<1x512xf32>, vector<128x512xf32>, vector<1x128xf32> -> vector<1x128xf32>
    %13 = vector.broadcast %10 : vector<128x1xf32> to vector<128x128xf32>
    %14 = vector.broadcast %12 : vector<1x128xf32> to vector<128x128xf32>
    %15 = arith.addf %13, %14 : vector<128x128xf32>
    %cst_13 = arith.constant 0.000000e+00 : f32
    %16 = vector.broadcast %cst_13 : f32 to vector<128x128xf32>
    %17 = arith.cmpf ogt, %15, %16 : vector<128x128xf32>
    %cst_14 = arith.constant 2.000000e-01 : f32
    %18 = vector.broadcast %cst_14 : f32 to vector<128x128xf32>
    %19 = arith.mulf %18, %15 : vector<128x128xf32>
    %20 = arith.select %17, %15, %19 : vector<128x128xi1>, vector<128x128xf32>
    %21 = arith.addf %20, %1 : vector<128x128xf32>
    %cst_15 = arith.constant dense<0xFF800000> : vector<128xf32>
    %22 = vector.multi_reduction <maximumf>, %21, %cst_15 [1] : vector<128x128xf32> to vector<128xf32>
    %23 = vector.shape_cast %22 : vector<128xf32> to vector<128x1xf32>
    %24 = vector.broadcast %23 : vector<128x1xf32> to vector<128x128xf32>
    %25 = arith.subf %21, %24 : vector<128x128xf32>
    %26 = math.exp %25 : vector<128x128xf32>
    %cst_16 = arith.constant dense<0.000000e+00> : vector<128xf32>
    %27 = vector.multi_reduction <add>, %26, %cst_16 [1] : vector<128x128xf32> to vector<128xf32>
    %28 = vector.shape_cast %27 : vector<128xf32> to vector<128x1xf32>
    %29 = tpu.reciprocal %28 {approx = true} : vector<128x1xf32> -> vector<128x1xf32>
    %30 = vector.broadcast %29 : vector<128x1xf32> to vector<128x128xf32>
    %31 = arith.mulf %26, %30 : vector<128x128xf32>
    %32 = arith.truncf %31 : vector<128x128xf32> to vector<128x128xbf16>
    %33 = arith.truncf %5 : vector<128x512xf32> to vector<128x512xbf16>
    %cst_17 = arith.constant dense<0.000000e+00> : vector<128x512xf32>
    %34 = tpu.matmul %32, %33, %cst_17 {dimension_numbers = #tpu.dot_dimension_numbers<[1], [0], [0], [1], [0, 0, 1, 1], [], []>} : vector<128x128xbf16>, vector<128x512xbf16>, vector<128x512xf32> -> vector<128x512xf32>
    %c0_18 = arith.constant 0 : index
    %c0_19 = arith.constant 0 : index
    %35 = vector.load %arg7[%c0_18, %c0_19] : memref<1x512xf32, #tpu.memory_space<vmem>>, vector<1x512xf32>
    %36 = vector.broadcast %35 : vector<1x512xf32> to vector<128x512xf32>
    %37 = arith.addf %34, %36 : vector<128x512xf32>
    %c0_20 = arith.constant 0 : index
    %c0_21 = arith.constant 0 : index
    %38 = vector.load %arg8[%c0_20, %c0_21] : memref<1x512xf32, #tpu.memory_space<vmem>>, vector<1x512xf32>
    %39 = vector.broadcast %38 : vector<1x512xf32> to vector<128x512xf32>
    %40 = arith.mulf %37, %39 : vector<128x512xf32>
    %c0_22 = arith.constant 0 : index
    %c0_23 = arith.constant 0 : index
    %41 = vector.load %arg9[%c0_22, %c0_23] : memref<1x512xf32, #tpu.memory_space<vmem>>, vector<1x512xf32>
    %42 = vector.broadcast %41 : vector<1x512xf32> to vector<128x512xf32>
    %43 = arith.addf %40, %42 : vector<128x512xf32>
    %cst_24 = arith.constant 0.000000e+00 : f32
    %44 = vector.broadcast %cst_24 : f32 to vector<128x512xf32>
    %45 = arith.maximumf %43, %44 : vector<128x512xf32>
    %46 = arith.truncf %45 : vector<128x512xf32> to vector<128x512xbf16>
    %cst_25 = arith.constant dense<0.000000e+00> : vector<4x512xf32>
    %47 = tpu.matmul %2, %46, %cst_25 {dimension_numbers = #tpu.dot_dimension_numbers<[1], [0], [0], [1], [0, 0, 1, 1], [], []>} : vector<4x128xbf16>, vector<128x512xbf16>, vector<4x512xf32> -> vector<4x512xf32>
    %48 = arith.truncf %45 : vector<128x512xf32> to vector<128x512xbf16>
    %c0_26 = arith.constant 0 : index
    %c0_27 = arith.constant 0 : index
    %49 = vector.load %arg10[%c0_26, %c0_27] : memref<512x512xbf16, #tpu.memory_space<vmem>>, vector<512x512xbf16>
    %cst_28 = arith.constant dense<0.000000e+00> : vector<128x512xf32>
    %50 = tpu.matmul %48, %49, %cst_28 {dimension_numbers = #tpu.dot_dimension_numbers<[1], [0], [0], [1], [0, 0, 1, 1], [], []>} : vector<128x512xbf16>, vector<512x512xbf16>, vector<128x512xf32> -> vector<128x512xf32>
    %c0_29 = arith.constant 0 : index
    %c0_30 = arith.constant 0 : index
    %51 = vector.load %arg12[%c0_29, %c0_30] : memref<1x512xf32, #tpu.memory_space<vmem>>, vector<1x512xf32>
    %52 = vector.broadcast %51 : vector<1x512xf32> to vector<128x512xf32>
    %53 = arith.mulf %50, %52 : vector<128x512xf32>
    %cst_31 = arith.constant dense<0.000000e+00> : vector<128xf32>
    %54 = vector.multi_reduction <add>, %53, %cst_31 [1] : vector<128x512xf32> to vector<128xf32>
    %55 = vector.shape_cast %54 : vector<128xf32> to vector<128x1xf32>
    %c0_32 = arith.constant 0 : index
    %c0_33 = arith.constant 0 : index
    %56 = vector.load %arg11[%c0_32, %c0_33] : memref<1x512xf32, #tpu.memory_space<vmem>>, vector<1x512xf32>
    %cst_34 = arith.constant dense<0.000000e+00> : vector<1x128xf32>
    %57 = tpu.matmul %56, %50, %cst_34 {dimension_numbers = #tpu.dot_dimension_numbers<[1], [1], [0], [0], [0, 0, 1, 0], [], []>} : vector<1x512xf32>, vector<128x512xf32>, vector<1x128xf32> -> vector<1x128xf32>
    %58 = vector.broadcast %55 : vector<128x1xf32> to vector<128x128xf32>
    %59 = vector.broadcast %57 : vector<1x128xf32> to vector<128x128xf32>
    %60 = arith.addf %58, %59 : vector<128x128xf32>
    %cst_35 = arith.constant 0.000000e+00 : f32
    %61 = vector.broadcast %cst_35 : f32 to vector<128x128xf32>
    %62 = arith.cmpf ogt, %60, %61 : vector<128x128xf32>
    %cst_36 = arith.constant 2.000000e-01 : f32
    %63 = vector.broadcast %cst_36 : f32 to vector<128x128xf32>
    %64 = arith.mulf %63, %60 : vector<128x128xf32>
    %65 = arith.select %62, %60, %64 : vector<128x128xi1>, vector<128x128xf32>
    %66 = arith.addf %65, %1 : vector<128x128xf32>
    %cst_37 = arith.constant dense<0xFF800000> : vector<128xf32>
    %67 = vector.multi_reduction <maximumf>, %66, %cst_37 [1] : vector<128x128xf32> to vector<128xf32>
    %68 = vector.shape_cast %67 : vector<128xf32> to vector<128x1xf32>
    %69 = vector.broadcast %68 : vector<128x1xf32> to vector<128x128xf32>
    %70 = arith.subf %66, %69 : vector<128x128xf32>
    %71 = math.exp %70 : vector<128x128xf32>
    %cst_38 = arith.constant dense<0.000000e+00> : vector<128xf32>
    %72 = vector.multi_reduction <add>, %71, %cst_38 [1] : vector<128x128xf32> to vector<128xf32>
    %73 = vector.shape_cast %72 : vector<128xf32> to vector<128x1xf32>
    %74 = tpu.reciprocal %73 {approx = true} : vector<128x1xf32> -> vector<128x1xf32>
    %75 = vector.broadcast %74 : vector<128x1xf32> to vector<128x128xf32>
    %76 = arith.mulf %71, %75 : vector<128x128xf32>
    %77 = arith.truncf %76 : vector<128x128xf32> to vector<128x128xbf16>
    %78 = arith.truncf %50 : vector<128x512xf32> to vector<128x512xbf16>
    %cst_39 = arith.constant dense<0.000000e+00> : vector<128x512xf32>
    %79 = tpu.matmul %77, %78, %cst_39 {dimension_numbers = #tpu.dot_dimension_numbers<[1], [0], [0], [1], [0, 0, 1, 1], [], []>} : vector<128x128xbf16>, vector<128x512xbf16>, vector<128x512xf32> -> vector<128x512xf32>
    %c0_40 = arith.constant 0 : index
    %c0_41 = arith.constant 0 : index
    %80 = vector.load %arg13[%c0_40, %c0_41] : memref<1x512xf32, #tpu.memory_space<vmem>>, vector<1x512xf32>
    %81 = vector.broadcast %80 : vector<1x512xf32> to vector<128x512xf32>
    %82 = arith.addf %79, %81 : vector<128x512xf32>
    %c0_42 = arith.constant 0 : index
    %c0_43 = arith.constant 0 : index
    %83 = vector.load %arg14[%c0_42, %c0_43] : memref<1x512xf32, #tpu.memory_space<vmem>>, vector<1x512xf32>
    %84 = vector.broadcast %83 : vector<1x512xf32> to vector<128x512xf32>
    %85 = arith.mulf %82, %84 : vector<128x512xf32>
    %c0_44 = arith.constant 0 : index
    %c0_45 = arith.constant 0 : index
    %86 = vector.load %arg15[%c0_44, %c0_45] : memref<1x512xf32, #tpu.memory_space<vmem>>, vector<1x512xf32>
    %87 = vector.broadcast %86 : vector<1x512xf32> to vector<128x512xf32>
    %88 = arith.addf %85, %87 : vector<128x512xf32>
    %cst_46 = arith.constant 0.000000e+00 : f32
    %89 = vector.broadcast %cst_46 : f32 to vector<128x512xf32>
    %90 = arith.maximumf %88, %89 : vector<128x512xf32>
    %91 = arith.truncf %90 : vector<128x512xf32> to vector<128x512xbf16>
    %cst_47 = arith.constant dense<0.000000e+00> : vector<4x512xf32>
    %92 = tpu.matmul %2, %91, %cst_47 {dimension_numbers = #tpu.dot_dimension_numbers<[1], [0], [0], [1], [0, 0, 1, 1], [], []>} : vector<4x128xbf16>, vector<128x512xbf16>, vector<4x512xf32> -> vector<4x512xf32>
    %93 = arith.addf %47, %92 : vector<4x512xf32>
    %94 = arith.truncf %93 : vector<4x512xf32> to vector<4x512xbf16>
    %c0_48 = arith.constant 0 : index
    %c0_49 = arith.constant 0 : index
    %95 = vector.load %arg16[%c0_48, %c0_49] : memref<512x256xbf16, #tpu.memory_space<vmem>>, vector<512x256xbf16>
    %cst_50 = arith.constant dense<0.000000e+00> : vector<4x256xf32>
    %96 = tpu.matmul %94, %95, %cst_50 {dimension_numbers = #tpu.dot_dimension_numbers<[1], [0], [0], [1], [0, 0, 1, 1], [], []>} : vector<4x512xbf16>, vector<512x256xbf16>, vector<4x256xf32> -> vector<4x256xf32>
    %c0_51 = arith.constant 0 : index
    %c0_52 = arith.constant 0 : index
    %97 = vector.load %arg17[%c0_51, %c0_52] : memref<1x256xf32, #tpu.memory_space<vmem>>, vector<1x256xf32>
    %98 = vector.broadcast %97 : vector<1x256xf32> to vector<4x256xf32>
    %99 = arith.addf %96, %98 : vector<4x256xf32>
    %cst_53 = arith.constant 0.000000e+00 : f32
    %100 = vector.broadcast %cst_53 : f32 to vector<4x256xf32>
    %101 = arith.maximumf %99, %100 : vector<4x256xf32>
    %102 = arith.truncf %101 : vector<4x256xf32> to vector<4x256xbf16>
    %c0_54 = arith.constant 0 : index
    %c0_55 = arith.constant 0 : index
    %103 = vector.load %arg18[%c0_54, %c0_55] : memref<256x8xbf16, #tpu.memory_space<vmem>>, vector<256x8xbf16>
    %cst_56 = arith.constant dense<0.000000e+00> : vector<4x8xf32>
    %104 = tpu.matmul %102, %103, %cst_56 {dimension_numbers = #tpu.dot_dimension_numbers<[1], [0], [0], [1], [0, 0, 1, 1], [], []>} : vector<4x256xbf16>, vector<256x8xbf16>, vector<4x8xf32> -> vector<4x8xf32>
    %c0_57 = arith.constant 0 : index
    %c0_58 = arith.constant 0 : index
    %105 = vector.load %arg19[%c0_57, %c0_58] : memref<1x8xf32, #tpu.memory_space<vmem>>, vector<1x8xf32>
    %106 = vector.broadcast %105 : vector<1x8xf32> to vector<4x8xf32>
    %107 = arith.addf %104, %106 : vector<4x8xf32>
    %cst_59 = arith.constant dense<0xFF800000> : vector<4xf32>
    %108 = vector.multi_reduction <maximumf>, %107, %cst_59 [1] : vector<4x8xf32> to vector<4xf32>
    %109 = vector.shape_cast %108 : vector<4xf32> to vector<4x1xf32>
    %110 = vector.broadcast %109 : vector<4x1xf32> to vector<4x8xf32>
    %111 = arith.subf %107, %110 : vector<4x8xf32>
    %112 = math.exp %111 : vector<4x8xf32>
    %cst_60 = arith.constant dense<0.000000e+00> : vector<4xf32>
    %113 = vector.multi_reduction <add>, %112, %cst_60 [1] : vector<4x8xf32> to vector<4xf32>
    %114 = vector.shape_cast %113 : vector<4xf32> to vector<4x1xf32>
    %115 = math.log %114 : vector<4x1xf32>
    %116 = vector.broadcast %115 : vector<4x1xf32> to vector<4x8xf32>
    %117 = arith.subf %111, %116 : vector<4x8xf32>
    %c0_61 = arith.constant 0 : index
    %c0_62 = arith.constant 0 : index
    %118 = vector.load %arg20[%c0_61, %c0_62] : memref<4x8xf32, #tpu.memory_space<vmem>>, vector<4x8xf32>
    tpu.vector_store %arg20[%c0_61, %c0_62], %117 {strides = array<i32>} : memref<4x8xf32, #tpu.memory_space<vmem>>, vector<4x8xf32>,
    return
  }
  func.func @transform_0(%arg0: i32) -> (i32, i32) {
    %c0_i32 = arith.constant 0 : i32
    %c0_i32_0 = arith.constant 0 : i32
    %c0_i32_1 = arith.constant 0 : i32
    return %c0_i32, %c0_i32_0 : i32, i32
  }
  func.func @transform_1(%arg0: i32) -> (i32, i32) {
    %c0_i32 = arith.constant 0 : i32
    %c0_i32_0 = arith.constant 0 : i32
    %c0_i32_1 = arith.constant 0 : i32
    return %c0_i32, %c0_i32_0 : i32, i32
  }
  func.func @transform_2(%arg0: i32) -> (i32, i32) {
    %c0_i32 = arith.constant 0 : i32
    %c0_i32_0 = arith.constant 0 : i32
    %c0_i32_1 = arith.constant 0 : i32
    return %c0_i32, %c0_i32_0 : i32, i32
  }
  func.func @transform_3(%arg0: i32) -> (i32, i32) {
    %c0_i32 = arith.constant 0 : i32
    %c0_i32_0 = arith.constant 0 : i32
    %c0_i32_1 = arith.constant 0 : i32
    return %c0_i32, %c0_i32_0 : i32, i32
  }
  func.func @transform_4(%arg0: i32) -> (i32, i32) {
    %c0_i32 = arith.constant 0 : i32
    %c0_i32_0 = arith.constant 0 : i32
    %c0_i32_1 = arith.constant 0 : i32
    return %c0_i32, %c0_i32_0 : i32, i32
  }
  func.func @transform_5(%arg0: i32) -> (i32, i32) {
    %c0_i32 = arith.constant 0 : i32
    %c0_i32_0 = arith.constant 0 : i32
    %c0_i32_1 = arith.constant 0 : i32
    return %c0_i32, %c0_i32_0 : i32, i32
  }
  func.func @transform_6(%arg0: i32) -> (i32, i32) {
    %c0_i32 = arith.constant 0 : i32
    %c0_i32_0 = arith.constant 0 : i32
    %c0_i32_1 = arith.constant 0 : i32
    return %c0_i32, %c0_i32_0 : i32, i32
  }
  func.func @transform_7(%arg0: i32) -> (i32, i32) {
    %c0_i32 = arith.constant 0 : i32
    %c0_i32_0 = arith.constant 0 : i32
    %c0_i32_1 = arith.constant 0 : i32
    return %c0_i32, %c0_i32_0 : i32, i32
  }
  func.func @transform_8(%arg0: i32) -> (i32, i32) {
    %c0_i32 = arith.constant 0 : i32
    %c0_i32_0 = arith.constant 0 : i32
    %c0_i32_1 = arith.constant 0 : i32
    return %c0_i32, %c0_i32_0 : i32, i32
  }
  func.func @transform_9(%arg0: i32) -> (i32, i32) {
    %c0_i32 = arith.constant 0 : i32
    %c0_i32_0 = arith.constant 0 : i32
    %c0_i32_1 = arith.constant 0 : i32
    return %c0_i32, %c0_i32_0 : i32, i32
  }
  func.func @transform_10(%arg0: i32) -> (i32, i32) {
    %c0_i32 = arith.constant 0 : i32
    %c0_i32_0 = arith.constant 0 : i32
    %c0_i32_1 = arith.constant 0 : i32
    return %c0_i32, %c0_i32_0 : i32, i32
  }
  func.func @transform_11(%arg0: i32) -> (i32, i32) {
    %c0_i32 = arith.constant 0 : i32
    %c0_i32_0 = arith.constant 0 : i32
    %c0_i32_1 = arith.constant 0 : i32
    return %c0_i32, %c0_i32_0 : i32, i32
  }
  func.func @transform_12(%arg0: i32) -> (i32, i32) {
    %c0_i32 = arith.constant 0 : i32
    %c0_i32_0 = arith.constant 0 : i32
    %c0_i32_1 = arith.constant 0 : i32
    return %c0_i32, %c0_i32_0 : i32, i32
  }
  func.func @transform_13(%arg0: i32) -> (i32, i32) {
    %c0_i32 = arith.constant 0 : i32
    %c0_i32_0 = arith.constant 0 : i32
    %c0_i32_1 = arith.constant 0 : i32
    return %c0_i32, %c0_i32_0 : i32, i32
  }
  func.func @transform_14(%arg0: i32) -> (i32, i32) {
    %c0_i32 = arith.constant 0 : i32
    %c0_i32_0 = arith.constant 0 : i32
    %c0_i32_1 = arith.constant 0 : i32
    return %c0_i32, %c0_i32_0 : i32, i32
  }
  func.func @transform_15(%arg0: i32) -> (i32, i32) {
    %c0_i32 = arith.constant 0 : i32
    %c0_i32_0 = arith.constant 0 : i32
    %c0_i32_1 = arith.constant 0 : i32
    return %c0_i32, %c0_i32_0 : i32, i32
  }
  func.func @transform_16(%arg0: i32) -> (i32, i32) {
    %c0_i32 = arith.constant 0 : i32
    %c0_i32_0 = arith.constant 0 : i32
    %c0_i32_1 = arith.constant 0 : i32
    return %c0_i32, %c0_i32_0 : i32, i32
  }
  func.func @transform_17(%arg0: i32) -> (i32, i32) {
    %c0_i32 = arith.constant 0 : i32
    %c0_i32_0 = arith.constant 0 : i32
    %c0_i32_1 = arith.constant 0 : i32
    return %c0_i32, %c0_i32_0 : i32, i32
  }
  func.func @transform_18(%arg0: i32) -> (i32, i32) {
    %c0_i32 = arith.constant 0 : i32
    %c0_i32_0 = arith.constant 0 : i32
    %c0_i32_1 = arith.constant 0 : i32
    return %c0_i32, %c0_i32_0 : i32, i32
  }
  func.func @transform_19(%arg0: i32) -> (i32, i32) {
    %c0_i32 = arith.constant 0 : i32
    %c0_i32_0 = arith.constant 0 : i32
    %c0_i32_1 = arith.constant 0 : i32
    return %c0_i32, %c0_i32_0 : i32, i32
  }
}

</mosaic_0001>

<llo_original>
// kernel: gat_forward.1
$region0: #{gat_forward.1}
  #allocation0 [shape = 'u32[]', space=smem, size = 0x4, offset = 0x4, fixed_abs, tag = 'smem constant byte address 0x4 - core index']
  #allocation1 [shape = 'u32[144,128]{1,0:T(1,128)}', space=vmem, size = 0x12000, scoped, tag = 'internal scratch']
  %s0 = inlined_call_operand.hbm [shape: bf16[128,16], index: 0, kind: input, shape index: {}]
  %s1 = inlined_call_operand.hbm [shape: bf16[128,128], index: 1, kind: input, shape index: {}]
  %s2 = inlined_call_operand.hbm [shape: bf16[4,128], index: 2, kind: input, shape index: {}]
  %s3 = inlined_call_operand.hbm [shape: bf16[16,512], index: 3, kind: input, shape index: {}]
  %s4 = inlined_call_operand.hbm [shape: f32[1,512], index: 4, kind: input, shape index: {}]
  %s5 = inlined_call_operand.hbm [shape: f32[1,512], index: 5, kind: input, shape index: {}]
  %s6 = inlined_call_operand.hbm [shape: f32[1,512], index: 6, kind: input, shape index: {}, may-alias: {6,12}]
  %s7 = inlined_call_operand.hbm [shape: f32[1,512], index: 7, kind: input, shape index: {}]
  %s8 = inlined_call_operand.hbm [shape: f32[1,512], index: 8, kind: input, shape index: {}]
  %s9 = inlined_call_operand.hbm [shape: bf16[512,512], index: 9, kind: input, shape index: {}]
  %s10 = inlined_call_operand.hbm [shape: f32[1,512], index: 10, kind: input, shape index: {}]
  %s11 = inlined_call_operand.hbm [shape: f32[1,512], index: 11, kind: input, shape index: {}]
  %s12 = inlined_call_operand.hbm [shape: f32[1,512], index: 12, kind: input, shape index: {}, may-alias: {6,12}]
  %s13 = inlined_call_operand.hbm [shape: f32[1,512], index: 13, kind: input, shape index: {}]
  %s14 = inlined_call_operand.hbm [shape: f32[1,512], index: 14, kind: input, shape index: {}]
  %s15 = inlined_call_operand.hbm [shape: bf16[512,256], index: 15, kind: input, shape index: {}]
  %s16 = inlined_call_operand.hbm [shape: f32[1,256], index: 16, kind: input, shape index: {}]
  %s17 = inlined_call_operand.hbm [shape: bf16[256,8], index: 17, kind: input, shape index: {}]
  %s18 = inlined_call_operand.hbm [shape: f32[1,8], index: 18, kind: input, shape index: {}]
  %s19 = inlined_call_operand.hbm [shape: f32[4,8], index: 19, kind: output, shape index: {}]
  %s20 = sld [smem:[#allocation0]]
  $region162: #{gat_forward.1} parent=0
    _
  %s22 = ssub.s32 1, %s20
  %s23 = scalar_select 0, %s22, %s20
  $region1: #{gat_forward.1} parent=0
    #allocation2 [shape = 'u8[32768]{0}', space=vmem, size = 0x8000, scoped, tag = 'input window, operand 0, single buffered']
    #allocation3 [shape = 's32[1]{0}', space=sflag, size = 0x4, scoped, tag = 'scoped memory for gat_forward.1']
    #allocation4 [shape = 's32[1]{0}', space=sflag, size = 0x4, scoped, tag = 'scoped memory for gat_forward.1']
    #allocation5 [shape = 'u8[32768]{0}', space=vmem, size = 0x8000, scoped, tag = 'input window, operand 1, single buffered']
    #allocation6 [shape = 's32[1]{0}', space=sflag, size = 0x4, scoped, tag = 'scoped memory for gat_forward.1']
    #allocation7 [shape = 'u8[1024]{0}', space=vmem, size = 0x400, scoped, tag = 'input window, operand 2, single buffered']
    #allocation8 [shape = 'u8[16384]{0}', space=vmem, size = 0x4000, scoped, tag = 'input window, operand 3, single buffered']
    #allocation9 [shape = 's32[1]{0}', space=sflag, size = 0x4, scoped, tag = 'scoped memory for gat_forward.1']
    #allocation10 [shape = 'u8[2048]{0}', space=vmem, size = 0x800, scoped, tag = 'input window, operand 4, single buffered']
    #allocation11 [shape = 'u8[2048]{0}', space=vmem, size = 0x800, scoped, tag = 'input window, operand 5, single buffered']
    #allocation12 [shape = 's32[1]{0}', space=sflag, size = 0x4, scoped, tag = 'scoped memory for gat_forward.1']
    #allocation13 [shape = 'u8[2048]{0}', space=vmem, size = 0x800, scoped, tag = 'input window, operand 6, single buffered']
    #allocation14 [shape = 'u8[2048]{0}', space=vmem, size = 0x800, scoped, tag = 'input window, operand 7, single buffered']
    #allocation15 [shape = 's32[1]{0}', space=sflag, size = 0x4, scoped, tag = 'scoped memory for gat_forward.1']
    #allocation16 [shape = 'u8[2048]{0}', space=vmem, size = 0x800, scoped, tag = 'input window, operand 8, single buffered']
    #allocation17 [shape = 'u8[524288]{0}', space=vmem, size = 0x80000, scoped, tag = 'input window, operand 9, single buffered']
    #allocation18 [shape = 's32[1]{0}', space=sflag, size = 0x4, scoped, tag = 'scoped memory for gat_forward.1']
    #allocation19 [shape = 'u8[2048]{0}', space=vmem, size = 0x800, scoped, tag = 'input window, operand 10, single buffered']
    #allocation20 [shape = 'u8[2048]{0}', space=vmem, size = 0x800, scoped, tag = 'input window, operand 11, single buffered']
    #allocation21 [shape = 's32[1]{0}', space=sflag, size = 0x4, scoped, tag = 'scoped memory for gat_forward.1']
    #allocation22 [shape = 'u8[2048]{0}', space=vmem, size = 0x800, scoped, tag = 'input window, operand 12, single buffered']
    #allocation23 [shape = 'u8[2048]{0}', space=vmem, size = 0x800, scoped, tag = 'input window, operand 13, single buffered']
    #allocation24 [shape = 's32[1]{0}', space=sflag, size = 0x4, scoped, tag = 'scoped memory for gat_forward.1']
    #allocation25 [shape = 'u8[2048]{0}', space=vmem, size = 0x800, scoped, tag = 'input window, operand 14, single buffered']
    #allocation26 [shape = 'u8[262144]{0}', space=vmem, size = 0x40000, scoped, tag = 'input window, operand 15, single buffered']
    #allocation27 [shape = 's32[1]{0}', space=sflag, size = 0x4, scoped, tag = 'scoped memory for gat_forward.1']
    #allocation28 [shape = 'u8[1024]{0}', space=vmem, size = 0x400, scoped, tag = 'input window, operand 16, single buffered']
    #allocation29 [shape = 'u8[65536]{0}', space=vmem, size = 0x10000, scoped, tag = 'input window, operand 17, single buffered']
    #allocation30 [shape = 's32[1]{0}', space=sflag, size = 0x4, scoped, tag = 'scoped memory for gat_forward.1']
    #allocation31 [shape = 'u8[512]{0}', space=vmem, size = 0x400, scoped, tag = 'input window, operand 18, single buffered']
    #allocation32 [shape = 'u8[2048]{0}', space=vmem, size = 0x800, scoped, tag = 'output window, operand 0, single buffered']
    %24 = vsyncpa [#allocation3], 0
    %25 = vsyncpa [#allocation6], 0
    %26 = vsyncpa [#allocation9], 0
    %27 = vsyncpa [#allocation12], 0
    %28 = vsyncpa [#allocation15], 0
    %29 = vsyncpa [#allocation18], 0
    %30 = vsyncpa [#allocation21], 0
    %31 = vsyncpa [#allocation24], 0
    %32 = vsyncpa [#allocation27], 0
    %33 = vsyncpa [#allocation30], 0
    %34 = vsyncpa [#allocation4], 0
    // Predicated region
    $region2: #{gat_forward.1} parent=1 // pred_check
      _
    $region3: #{gat_forward.1} parent=1 // pred_check_branch
      %36 = sbr.rel (0) target = $region5
    $region4: #{gat_forward.1} parent=1 // pred_region
      %s38 = ssub.s32 1024, 1024
      %39 = vsyncadd [#allocation3], %s38
      %s40 = sshll.u32 [#allocation2], 4
      %s41 = int_to_ptr.vmem [resolvable:$true] %s40
      %46 = dma.hbm_to_vmem [thread:$0]  %s0, 1024, %s41, [#allocation3], 64, 64, 4
    $region5: #{gat_forward.1} parent=1 // pred_fallthru
      _
    // Predicated region
    $region6: #{gat_forward.1} parent=1 // pred_check
      _
    $region7: #{gat_forward.1} parent=1 // pred_check_branch
      %48 = sbr.rel (0) target = $region9
    $region8: #{gat_forward.1} parent=1 // pred_region
      %s50 = ssub.s32 1024, 1024
      %51 = vsyncadd [#allocation6], %s50
      %s52 = sshll.u32 [#allocation5], 4
      %s53 = int_to_ptr.vmem [resolvable:$true] %s52
      %58 = dma.hbm_to_vmem [thread:$0]  %s1, 1024, %s53, [#allocation6], 64, 64, 4
    $region9: #{gat_forward.1} parent=1 // pred_fallthru
      _
    // Predicated region
    $region10: #{gat_forward.1} parent=1 // pred_check
      _
    $region11: #{gat_forward.1} parent=1 // pred_check_branch
      %60 = sbr.rel (0) target = $region13
    $region12: #{gat_forward.1} parent=1 // pred_region
      %s62 = ssub.s32 32, 32
      %63 = vsyncadd [#allocation6], %s62
      %s65 = sshll.u32 [#allocation7], 4
      %s66 = int_to_ptr.vmem [resolvable:$true] %s65
      %68 = dma.hbm_to_vmem [thread:$0]  %s2, 32, %s66, [#allocation6]
    $region13: #{gat_forward.1} parent=1 // pred_fallthru
      _
    // Predicated region
    $region14: #{gat_forward.1} parent=1 // pred_check
      _
    $region15: #{gat_forward.1} parent=1 // pred_check_branch
      %70 = sbr.rel (0) target = $region17
    $region16: #{gat_forward.1} parent=1 // pred_region
      %s72 = ssub.s32 512, 512
      %73 = vsyncadd [#allocation9], %s72
      %s74 = sshll.u32 [#allocation8], 4
      %s75 = int_to_ptr.vmem [resolvable:$true] %s74
      %80 = dma.hbm_to_vmem [thread:$0]  %s3, 512, %s75, [#allocation9], 256, 256, 16
    $region17: #{gat_forward.1} parent=1 // pred_fallthru
      _
    // Predicated region
    $region18: #{gat_forward.1} parent=1 // pred_check
      _
    $region19: #{gat_forward.1} parent=1 // pred_check_branch
      %82 = sbr.rel (0) target = $region21
    $region20: #{gat_forward.1} parent=1 // pred_region
      %s84 = ssub.s32 64, 64
      %85 = vsyncadd [#allocation9], %s84
      %s87 = sshll.u32 [#allocation10], 4
      %s88 = int_to_ptr.vmem [resolvable:$true] %s87
      %90 = dma.hbm_to_vmem [thread:$0]  %s4, 64, %s88, [#allocation9]
    $region21: #{gat_forward.1} parent=1 // pred_fallthru
      _
    // Predicated region
    $region22: #{gat_forward.1} parent=1 // pred_check
      _
    $region23: #{gat_forward.1} parent=1 // pred_check_branch
      %92 = sbr.rel (0) target = $region25
    $region24: #{gat_forward.1} parent=1 // pred_region
      %s94 = ssub.s32 64, 64
      %95 = vsyncadd [#allocation12], %s94
      %s97 = sshll.u32 [#allocation11], 4
      %s98 = int_to_ptr.vmem [resolvable:$true] %s97
      %100 = dma.hbm_to_vmem [thread:$0]  %s5, 64, %s98, [#allocation12]
    $region25: #{gat_forward.1} parent=1 // pred_fallthru
      _
    // Predicated region
    $region26: #{gat_forward.1} parent=1 // pred_check
      _
    $region27: #{gat_forward.1} parent=1 // pred_check_branch
      %102 = sbr.rel (0) target = $region29
    $region28: #{gat_forward.1} parent=1 // pred_region
      %s104 = ssub.s32 64, 64
      %105 = vsyncadd [#allocation12], %s104
      %s107 = sshll.u32 [#allocation13], 4
      %s108 = int_to_ptr.vmem [resolvable:$true] %s107
      %110 = dma.hbm_to_vmem [thread:$0]  %s6, 64, %s108, [#allocation12]
    $region29: #{gat_forward.1} parent=1 // pred_fallthru
      _
    // Predicated region
    $region30: #{gat_forward.1} parent=1 // pred_check
      _
    $region31: #{gat_forward.1} parent=1 // pred_check_branch
      %112 = sbr.rel (0) target = $region33
    $region32: #{gat_forward.1} parent=1 // pred_region
      %s114 = ssub.s32 64, 64
      %115 = vsyncadd [#allocation15], %s114
      %s117 = sshll.u32 [#allocation14], 4
      %s118 = int_to_ptr.vmem [resolvable:$true] %s117
      %120 = dma.hbm_to_vmem [thread:$0]  %s7, 64, %s118, [#allocation15]
    $region33: #{gat_forward.1} parent=1 // pred_fallthru
      _
    // Predicated region
    $region34: #{gat_forward.1} parent=1 // pred_check
      _
    $region35: #{gat_forward.1} parent=1 // pred_check_branch
      %122 = sbr.rel (0) target = $region37
    $region36: #{gat_forward.1} parent=1 // pred_region
      %s124 = ssub.s32 64, 64
      %125 = vsyncadd [#allocation15], %s124
      %s127 = sshll.u32 [#allocation16], 4
      %s128 = int_to_ptr.vmem [resolvable:$true] %s127
      %130 = dma.hbm_to_vmem [thread:$0]  %s8, 64, %s128, [#allocation15]
    $region37: #{gat_forward.1} parent=1 // pred_fallthru
      _
    // Predicated region
    $region38: #{gat_forward.1} parent=1 // pred_check
      _
    $region39: #{gat_forward.1} parent=1 // pred_check_branch
      %132 = sbr.rel (0) target = $region41
    $region40: #{gat_forward.1} parent=1 // pred_region
      %s134 = ssub.s32 16384, 16384
      %135 = vsyncadd [#allocation18], %s134
      %s136 = sshll.u32 [#allocation17], 4
      %s137 = int_to_ptr.vmem [resolvable:$true] %s136
      %142 = dma.hbm_to_vmem [thread:$0]  %s9, 16384, %s137, [#allocation18], 256, 256, 16
    $region41: #{gat_forward.1} parent=1 // pred_fallthru
      _
    // Predicated region
    $region42: #{gat_forward.1} parent=1 // pred_check
      _
    $region43: #{gat_forward.1} parent=1 // pred_check_branch
      %144 = sbr.rel (0) target = $region45
    $region44: #{gat_forward.1} parent=1 // pred_region
      %s146 = ssub.s32 64, 64
      %147 = vsyncadd [#allocation18], %s146
      %s149 = sshll.u32 [#allocation19], 4
      %s150 = int_to_ptr.vmem [resolvable:$true] %s149
      %152 = dma.hbm_to_vmem [thread:$0]  %s10, 64, %s150, [#allocation18]
    $region45: #{gat_forward.1} parent=1 // pred_fallthru
      _
    // Predicated region
    $region46: #{gat_forward.1} parent=1 // pred_check
      _
    $region47: #{gat_forward.1} parent=1 // pred_check_branch
      %154 = sbr.rel (0) target = $region49
    $region48: #{gat_forward.1} parent=1 // pred_region
      %s156 = ssub.s32 64, 64
      %157 = vsyncadd [#allocation21], %s156
      %s159 = sshll.u32 [#allocation20], 4
      %s160 = int_to_ptr.vmem [resolvable:$true] %s159
      %162 = dma.hbm_to_vmem [thread:$0]  %s11, 64, %s160, [#allocation21]
    $region49: #{gat_forward.1} parent=1 // pred_fallthru
      _
    // Predicated region
    $region50: #{gat_forward.1} parent=1 // pred_check
      _
    $region51: #{gat_forward.1} parent=1 // pred_check_branch
      %164 = sbr.rel (0) target = $region53
    $region52: #{gat_forward.1} parent=1 // pred_region
      %s166 = ssub.s32 64, 64
      %167 = vsyncadd [#allocation21], %s166
      %s169 = sshll.u32 [#allocation22], 4
      %s170 = int_to_ptr.vmem [resolvable:$true] %s169
      %172 = dma.hbm_to_vmem [thread:$0]  %s12, 64, %s170, [#allocation21]
    $region53: #{gat_forward.1} parent=1 // pred_fallthru
      _
    // Predicated region
    $region54: #{gat_forward.1} parent=1 // pred_check
      _
    $region55: #{gat_forward.1} parent=1 // pred_check_branch
      %174 = sbr.rel (0) target = $region57
    $region56: #{gat_forward.1} parent=1 // pred_region
      %s176 = ssub.s32 64, 64
      %177 = vsyncadd [#allocation24], %s176
      %s179 = sshll.u32 [#allocation23], 4
      %s180 = int_to_ptr.vmem [resolvable:$true] %s179
      %182 = dma.hbm_to_vmem [thread:$0]  %s13, 64, %s180, [#allocation24]
    $region57: #{gat_forward.1} parent=1 // pred_fallthru
      _
    // Predicated region
    $region58: #{gat_forward.1} parent=1 // pred_check
      _
    $region59: #{gat_forward.1} parent=1 // pred_check_branch
      %184 = sbr.rel (0) target = $region61
    $region60: #{gat_forward.1} parent=1 // pred_region
      %s186 = ssub.s32 64, 64
      %187 = vsyncadd [#allocation24], %s186
      %s189 = sshll.u32 [#allocation25], 4
      %s190 = int_to_ptr.vmem [resolvable:$true] %s189
      %192 = dma.hbm_to_vmem [thread:$0]  %s14, 64, %s190, [#allocation24]
    $region61: #{gat_forward.1} parent=1 // pred_fallthru
      _
    // Predicated region
    $region62: #{gat_forward.1} parent=1 // pred_check
      _
    $region63: #{gat_forward.1} parent=1 // pred_check_branch
      %194 = sbr.rel (0) target = $region65
    $region64: #{gat_forward.1} parent=1 // pred_region
      %s196 = ssub.s32 8192, 8192
      %197 = vsyncadd [#allocation27], %s196
      %s198 = sshll.u32 [#allocation26], 4
      %s199 = int_to_ptr.vmem [resolvable:$true] %s198
      %204 = dma.hbm_to_vmem [thread:$0]  %s15, 8192, %s199, [#allocation27], 128, 128, 8
    $region65: #{gat_forward.1} parent=1 // pred_fallthru
      _
    // Predicated region
    $region66: #{gat_forward.1} parent=1 // pred_check
      _
    $region67: #{gat_forward.1} parent=1 // pred_check_branch
      %206 = sbr.rel (0) target = $region69
    $region68: #{gat_forward.1} parent=1 // pred_region
      %s208 = ssub.s32 32, 32
      %209 = vsyncadd [#allocation27], %s208
      %s211 = sshll.u32 [#allocation28], 4
      %s212 = int_to_ptr.vmem [resolvable:$true] %s211
      %214 = dma.hbm_to_vmem [thread:$0]  %s16, 32, %s212, [#allocation27]
    $region69: #{gat_forward.1} parent=1 // pred_fallthru
      _
    // Predicated region
    $region70: #{gat_forward.1} parent=1 // pred_check
      _
    $region71: #{gat_forward.1} parent=1 // pred_check_branch
      %216 = sbr.rel (0) target = $region73
    $region72: #{gat_forward.1} parent=1 // pred_region
      %s218 = ssub.s32 2048, 2048
      %219 = vsyncadd [#allocation30], %s218
      %s220 = sshll.u32 [#allocation29], 4
      %s221 = int_to_ptr.vmem [resolvable:$true] %s220
      %226 = dma.hbm_to_vmem [thread:$0]  %s17, 2048, %s221, [#allocation30], 64, 64, 4
    $region73: #{gat_forward.1} parent=1 // pred_fallthru
      _
    // Predicated region
    $region74: #{gat_forward.1} parent=1 // pred_check
      _
    $region75: #{gat_forward.1} parent=1 // pred_check_branch
      %228 = sbr.rel (0) target = $region77
    $region76: #{gat_forward.1} parent=1 // pred_region
      %s230 = ssub.s32 16, 16
      %231 = vsyncadd [#allocation30], %s230
      %s233 = sshll.u32 [#allocation31], 4
      %s234 = int_to_ptr.vmem [resolvable:$true] %s233
      %236 = dma.hbm_to_vmem [thread:$0]  %s18, 16, %s234, [#allocation30]
    $region77: #{gat_forward.1} parent=1 // pred_fallthru
      _
    // Predicated region
    $region78: #{gat_forward.1} parent=1 // pred_check
      _
    $region79: #{gat_forward.1} parent=1 // pred_check_branch
      %238 = sbr.rel (0) target = $region81
    $region80: #{gat_forward.1} parent=1 // pred_region
      %239 = dma.done [#allocation3], 1024
    $region81: #{gat_forward.1} parent=1 // pred_fallthru
      _
    // Predicated region
    $region82: #{gat_forward.1} parent=1 // pred_check
      _
    $region83: #{gat_forward.1} parent=1 // pred_check_branch
      %241 = sbr.rel (0) target = $region85
    $region84: #{gat_forward.1} parent=1 // pred_region
      %242 = dma.done [#allocation6], 1024
    $region85: #{gat_forward.1} parent=1 // pred_fallthru
      _
    // Predicated region
    $region86: #{gat_forward.1} parent=1 // pred_check
      _
    $region87: #{gat_forward.1} parent=1 // pred_check_branch
      %244 = sbr.rel (0) target = $region89
    $region88: #{gat_forward.1} parent=1 // pred_region
      %245 = dma.done [#allocation6], 32
    $region89: #{gat_forward.1} parent=1 // pred_fallthru
      _
    // Predicated region
    $region90: #{gat_forward.1} parent=1 // pred_check
      _
    $region91: #{gat_forward.1} parent=1 // pred_check_branch
      %247 = sbr.rel (0) target = $region93
    $region92: #{gat_forward.1} parent=1 // pred_region
      %248 = dma.done [#allocation9], 512
    $region93: #{gat_forward.1} parent=1 // pred_fallthru
      _
    // Predicated region
    $region94: #{gat_forward.1} parent=1 // pred_check
      _
    $region95: #{gat_forward.1} parent=1 // pred_check_branch
      %250 = sbr.rel (0) target = $region97
    $region96: #{gat_forward.1} parent=1 // pred_region
      %251 = dma.done [#allocation9], 64
    $region97: #{gat_forward.1} parent=1 // pred_fallthru
      _
    // Predicated region
    $region98: #{gat_forward.1} parent=1 // pred_check
      _
    $region99: #{gat_forward.1} parent=1 // pred_check_branch
      %253 = sbr.rel (0) target = $region101
    $region100: #{gat_forward.1} parent=1 // pred_region
      %254 = dma.done [#allocation12], 64
    $region101: #{gat_forward.1} parent=1 // pred_fallthru
      _
    // Predicated region
    $region102: #{gat_forward.1} parent=1 // pred_check
      _
    $region103: #{gat_forward.1} parent=1 // pred_check_branch
      %256 = sbr.rel (0) target = $region105
    $region104: #{gat_forward.1} parent=1 // pred_region
      %257 = dma.done [#allocation12], 64
    $region105: #{gat_forward.1} parent=1 // pred_fallthru
      _
    // Predicated region
    $region106: #{gat_forward.1} parent=1 // pred_check
      _
    $region107: #{gat_forward.1} parent=1 // pred_check_branch
      %259 = sbr.rel (0) target = $region109
    $region108: #{gat_forward.1} parent=1 // pred_region
      %260 = dma.done [#allocation15], 64
    $region109: #{gat_forward.1} parent=1 // pred_fallthru
      _
    // Predicated region
    $region110: #{gat_forward.1} parent=1 // pred_check
      _
    $region111: #{gat_forward.1} parent=1 // pred_check_branch
      %262 = sbr.rel (0) target = $region113
    $region112: #{gat_forward.1} parent=1 // pred_region
      %263 = dma.done [#allocation15], 64
    $region113: #{gat_forward.1} parent=1 // pred_fallthru
      _
    // Predicated region
    $region114: #{gat_forward.1} parent=1 // pred_check
      _
    $region115: #{gat_forward.1} parent=1 // pred_check_branch
      %265 = sbr.rel (0) target = $region117
    $region116: #{gat_forward.1} parent=1 // pred_region
      %266 = dma.done [#allocation18], 16384
    $region117: #{gat_forward.1} parent=1 // pred_fallthru
      _
    // Predicated region
    $region118: #{gat_forward.1} parent=1 // pred_check
      _
    $region119: #{gat_forward.1} parent=1 // pred_check_branch
      %268 = sbr.rel (0) target = $region121
    $region120: #{gat_forward.1} parent=1 // pred_region
      %269 = dma.done [#allocation18], 64
    $region121: #{gat_forward.1} parent=1 // pred_fallthru
      _
    // Predicated region
    $region122: #{gat_forward.1} parent=1 // pred_check
      _
    $region123: #{gat_forward.1} parent=1 // pred_check_branch
      %271 = sbr.rel (0) target = $region125
    $region124: #{gat_forward.1} parent=1 // pred_region
      %272 = dma.done [#allocation21], 64
    $region125: #{gat_forward.1} parent=1 // pred_fallthru
      _
    // Predicated region
    $region126: #{gat_forward.1} parent=1 // pred_check
      _
    $region127: #{gat_forward.1} parent=1 // pred_check_branch
      %274 = sbr.rel (0) target = $region129
    $region128: #{gat_forward.1} parent=1 // pred_region
      %275 = dma.done [#allocation21], 64
    $region129: #{gat_forward.1} parent=1 // pred_fallthru
      _
    // Predicated region
    $region130: #{gat_forward.1} parent=1 // pred_check
      _
    $region131: #{gat_forward.1} parent=1 // pred_check_branch
      %277 = sbr.rel (0) target = $region133
    $region132: #{gat_forward.1} parent=1 // pred_region
      %278 = dma.done [#allocation24], 64
    $region133: #{gat_forward.1} parent=1 // pred_fallthru
      _
    // Predicated region
    $region134: #{gat_forward.1} parent=1 // pred_check
      _
    $region135: #{gat_forward.1} parent=1 // pred_check_branch
      %280 = sbr.rel (0) target = $region137
    $region136: #{gat_forward.1} parent=1 // pred_region
      %281 = dma.done [#allocation24], 64
    $region137: #{gat_forward.1} parent=1 // pred_fallthru
      _
    // Predicated region
    $region138: #{gat_forward.1} parent=1 // pred_check
      _
    $region139: #{gat_forward.1} parent=1 // pred_check_branch
      %283 = sbr.rel (0) target = $region141
    $region140: #{gat_forward.1} parent=1 // pred_region
      %284 = dma.done [#allocation27], 8192
    $region141: #{gat_forward.1} parent=1 // pred_fallthru
      _
    // Predicated region
    $region142: #{gat_forward.1} parent=1 // pred_check
      _
    $region143: #{gat_forward.1} parent=1 // pred_check_branch
      %286 = sbr.rel (0) target = $region145
    $region144: #{gat_forward.1} parent=1 // pred_region
      %287 = dma.done [#allocation27], 32
    $region145: #{gat_forward.1} parent=1 // pred_fallthru
      _
    // Predicated region
    $region146: #{gat_forward.1} parent=1 // pred_check
      _
    $region147: #{gat_forward.1} parent=1 // pred_check_branch
      %289 = sbr.rel (0) target = $region149
    $region148: #{gat_forward.1} parent=1 // pred_region
      %290 = dma.done [#allocation30], 2048
    $region149: #{gat_forward.1} parent=1 // pred_fallthru
      _
    // Predicated region
    $region150: #{gat_forward.1} parent=1 // pred_check
      _
    $region151: #{gat_forward.1} parent=1 // pred_check_branch
      %292 = sbr.rel (0) target = $region153
    $region152: #{gat_forward.1} parent=1 // pred_region
      %293 = dma.done [#allocation30], 16
    $region153: #{gat_forward.1} parent=1 // pred_fallthru
      _
    %v295 = vld [vmem:[#allocation5] sm:$0xf]
    %v296 = vld [vmem:[#allocation5 + $0x4] sm:$0xf]
    %v297 = vld [vmem:[#allocation5 + $0x8] sm:$0xf]
    %v298 = vld [vmem:[#allocation5 + $0xc] sm:$0xf]
    %v299 = vld [vmem:[#allocation5 + $0x10] sm:$0xf]
    %v300 = vld [vmem:[#allocation5 + $0x14] sm:$0xf]
    %v301 = vld [vmem:[#allocation5 + $0x18] sm:$0xf]
    %v302 = vld [vmem:[#allocation5 + $0x1c] sm:$0xf]
    %v303 = vld [vmem:[#allocation5 + $0x20] sm:$0xf]
    %v304 = vld [vmem:[#allocation5 + $0x24] sm:$0xf]
    %v305 = vld [vmem:[#allocation5 + $0x28] sm:$0xf]
    %v306 = vld [vmem:[#allocation5 + $0x2c] sm:$0xf]
    %v307 = vld [vmem:[#allocation5 + $0x30] sm:$0xf]
    %v308 = vld [vmem:[#allocation5 + $0x34] sm:$0xf]
    %v309 = vld [vmem:[#allocation5 + $0x38] sm:$0xf]
    %v310 = vld [vmem:[#allocation5 + $0x3c] sm:$0xf]
    %v311 = vunpack.c.l.bf16 %v295
    %v312 = vunpack.c.l.bf16 %v296
    %v313 = vunpack.c.l.bf16 %v297
    %v314 = vunpack.c.l.bf16 %v298
    %v315 = vunpack.c.l.bf16 %v299
    %v316 = vunpack.c.l.bf16 %v300
    %v317 = vunpack.c.l.bf16 %v301
    %v318 = vunpack.c.l.bf16 %v302
    %v319 = vunpack.c.l.bf16 %v303
    %v320 = vunpack.c.l.bf16 %v304
    %v321 = vunpack.c.l.bf16 %v305
    %v322 = vunpack.c.l.bf16 %v306
    %v323 = vunpack.c.l.bf16 %v307
    %v324 = vunpack.c.l.bf16 %v308
    %v325 = vunpack.c.l.bf16 %v309
    %v326 = vunpack.c.l.bf16 %v310
    %v327 = vld [vmem:[#allocation7] sm:$0x3]
    %v328 = vld [vmem:[#allocation2] sm:$0xf]
    %v329 = vld [vmem:[#allocation2 + $0x4] sm:$0xf]
    %v330 = vld [vmem:[#allocation2 + $0x8] sm:$0xf]
    %v331 = vld [vmem:[#allocation2 + $0xc] sm:$0xf]
    %v332 = vld [vmem:[#allocation2 + $0x10] sm:$0xf]
    %v333 = vld [vmem:[#allocation2 + $0x14] sm:$0xf]
    %v334 = vld [vmem:[#allocation2 + $0x18] sm:$0xf]
    %v335 = vld [vmem:[#allocation2 + $0x1c] sm:$0xf]
    %v336 = vld [vmem:[#allocation2 + $0x20] sm:$0xf]
    %v337 = vld [vmem:[#allocation2 + $0x24] sm:$0xf]
    %v338 = vld [vmem:[#allocation2 + $0x28] sm:$0xf]
    %v339 = vld [vmem:[#allocation2 + $0x2c] sm:$0xf]
    %v340 = vld [vmem:[#allocation2 + $0x30] sm:$0xf]
    %v341 = vld [vmem:[#allocation2 + $0x34] sm:$0xf]
    %v342 = vld [vmem:[#allocation2 + $0x38] sm:$0xf]
    %v343 = vld [vmem:[#allocation2 + $0x3c] sm:$0xf]
    %v344 = vld [vmem:[#allocation8] sm:$0xff]
    %v345 = vld [vmem:[#allocation8 + $0x8] sm:$0xff]
    %v346 = vld [vmem:[#allocation8 + $0x10] sm:$0xff]
    %v347 = vld [vmem:[#allocation8 + $0x18] sm:$0xff]
    %v364 = vunpack.c.l.b16 %v328
    %v365 = vunpack.c.l.b16 %v329
    %v366 = vunpack.c.l.b16 %v330
    %v367 = vunpack.c.l.b16 %v331
    %v368 = vunpack.c.l.b16 %v332
    %v369 = vunpack.c.l.b16 %v333
    %v370 = vunpack.c.l.b16 %v334
    %v371 = vunpack.c.l.b16 %v335
    %v372 = vunpack.c.l.b16 %v336
    %v373 = vunpack.c.l.b16 %v337
    %v374 = vunpack.c.l.b16 %v338
    %v375 = vunpack.c.l.b16 %v339
    %v376 = vunpack.c.l.b16 %v340
    %v377 = vunpack.c.l.b16 %v341
    %v378 = vunpack.c.l.b16 %v342
    %v379 = vunpack.c.l.b16 %v343
    %v380 = vpack.c.b16 %v365, %v364
    %v381 = vpack.c.b16 %v367, %v366
    %v382 = vpack.c.b16 %v369, %v368
    %v383 = vpack.c.b16 %v371, %v370
    %v384 = vpack.c.b16 %v373, %v372
    %v385 = vpack.c.b16 %v375, %v374
    %v386 = vpack.c.b16 %v377, %v376
    %v387 = vpack.c.b16 %v379, %v378
    %v392 = vunpack.c.l.b16 %v344
    %v393 = vunpack.c.h.b16 %v344
    %v394 = vunpack.c.l.b16 %v345
    %v395 = vunpack.c.h.b16 %v345
    %v396 = vunpack.c.l.b16 %v346
    %v397 = vunpack.c.h.b16 %v346
    %v398 = vunpack.c.l.b16 %v347
    %v399 = vunpack.c.h.b16 %v347
    %v400 = vpack.c.b16 %v396, %v392
    %v401 = vpack.c.b16 %v397, %v393
    %v402 = vpack.c.b16 %v398, %v394
    %v403 = vpack.c.b16 %v399, %v395
    %vm408 = vcmask 130048
    %v410 = vsel %vm408, %v380, 0
    %v413 = vsel %vm408, %v381, 0
    %v416 = vsel %vm408, %v382, 0
    %v419 = vsel %vm408, %v383, 0
    %v422 = vsel %vm408, %v384, 0
    %v425 = vsel %vm408, %v385, 0
    %v428 = vsel %vm408, %v386, 0
    %v431 = vsel %vm408, %v387, 0
    %433 = vmatprep.subr.bf16.mxu0 %v401
    %434 = vmatpush1.bf16.msra.mxu0 %v400
    %435 = vmatprep.subr.bf16.mxu0 0
    %436 = vmatpush1.bf16.msra.mxu0 0
    %437 = vmatprep.subr.bf16.mxu0 0
    %438 = vmatpush1.bf16.msra.mxu0 0
    %439 = vmatprep.subr.bf16.mxu0 0
    %440 = vmatpush1.bf16.msra.mxu0 0
    %441 = vmatprep.subr.bf16.mxu0 0
    %442 = vmatpush1.bf16.msra.mxu0 0
    %443 = vmatprep.subr.bf16.mxu0 0
    %444 = vmatpush1.bf16.msra.mxu0 0
    %445 = vmatprep.subr.bf16.mxu0 0
    %446 = vmatpush1.bf16.msra.mxu0 0
    %447 = vmatprep.subr.bf16.mxu0 0
    %448 = vmatpush1.bf16.msra.mxu0 0
    %449 = vmatprep.subr.bf16.mxu0 0
    %450 = vmatpush1.bf16.msra.mxu0 0
    %451 = vmatprep.subr.bf16.mxu0 0
    %452 = vmatpush1.bf16.msra.mxu0 0
    %453 = vmatprep.subr.bf16.mxu0 0
    %454 = vmatpush1.bf16.msra.mxu0 0
    %455 = vmatprep.subr.bf16.mxu0 0
    %456 = vmatpush1.bf16.msra.mxu0 0
    %457 = vmatprep.subr.bf16.mxu0 0
    %458 = vmatpush1.bf16.msra.mxu0 0
    %459 = vmatprep.subr.bf16.mxu0 0
    %460 = vmatpush1.bf16.msra.mxu0 0
    %461 = vmatprep.subr.bf16.mxu0 0
    %462 = vmatpush1.bf16.msra.mxu0 0
    %463 = vmatprep.subr.bf16.mxu0 0
    %464 = vmatpush1.bf16.msra.mxu0 0
    %465 = vmatprep.mubr.bf16.mxu0 0
    %466 = vmatmul.mubr.bf16.gmra.mrb[0].mxu0 %v410
    %v467 = vpop.f32.mrb[0].mxu0
    %v468 = vadd.f32 0.0, %v467
    %v469 = vpop.f32.mrb[0].mxu0
    %v470 = vadd.f32 0.0, %v469
    %v471 = vpop.f32.mrb[0].mxu0
    %v472 = vadd.f32 0.0, %v471
    %v473 = vpop.f32.mrb[0].mxu0
    %v474 = vadd.f32 0.0, %v473
    %475 = vmatprep.mubr.bf16.mxu0 0
    %476 = vmatmul.mubr.bf16.gmra.mrb[0].mxu0 %v413
    %v477 = vpop.f32.mrb[0].mxu0
    %v478 = vadd.f32 0.0, %v477
    %v479 = vpop.f32.mrb[0].mxu0
    %v480 = vadd.f32 0.0, %v479
    %v481 = vpop.f32.mrb[0].mxu0
    %v482 = vadd.f32 0.0, %v481
    %v483 = vpop.f32.mrb[0].mxu0
    %v484 = vadd.f32 0.0, %v483
    %485 = vmatprep.mubr.bf16.mxu0 0
    %486 = vmatmul.mubr.bf16.gmra.mrb[0].mxu0 %v416
    %v487 = vpop.f32.mrb[0].mxu0
    %v488 = vadd.f32 0.0, %v487
    %v489 = vpop.f32.mrb[0].mxu0
    %v490 = vadd.f32 0.0, %v489
    %v491 = vpop.f32.mrb[0].mxu0
    %v492 = vadd.f32 0.0, %v491
    %v493 = vpop.f32.mrb[0].mxu0
    %v494 = vadd.f32 0.0, %v493
    %495 = vmatprep.mubr.bf16.mxu0 0
    %496 = vmatmul.mubr.bf16.gmra.mrb[0].mxu0 %v419
    %v497 = vpop.f32.mrb[0].mxu0
    %v498 = vadd.f32 0.0, %v497
    %v499 = vpop.f32.mrb[0].mxu0
    %v500 = vadd.f32 0.0, %v499
    %v501 = vpop.f32.mrb[0].mxu0
    %v502 = vadd.f32 0.0, %v501
    %v503 = vpop.f32.mrb[0].mxu0
    %v504 = vadd.f32 0.0, %v503
    %505 = vmatprep.mubr.bf16.mxu0 0
    %506 = vmatmul.mubr.bf16.gmra.mrb[0].mxu0 %v422
    %v507 = vpop.f32.mrb[0].mxu0
    %v508 = vadd.f32 0.0, %v507
    %v509 = vpop.f32.mrb[0].mxu0
    %v510 = vadd.f32 0.0, %v509
    %v511 = vpop.f32.mrb[0].mxu0
    %v512 = vadd.f32 0.0, %v511
    %v513 = vpop.f32.mrb[0].mxu0
    %v514 = vadd.f32 0.0, %v513
    %515 = vmatprep.mubr.bf16.mxu0 0
    %516 = vmatmul.mubr.bf16.gmra.mrb[0].mxu0 %v425
    %v517 = vpop.f32.mrb[0].mxu0
    %v518 = vadd.f32 0.0, %v517
    %v519 = vpop.f32.mrb[0].mxu0
    %v520 = vadd.f32 0.0, %v519
    %v521 = vpop.f32.mrb[0].mxu0
    %v522 = vadd.f32 0.0, %v521
    %v523 = vpop.f32.mrb[0].mxu0
    %v524 = vadd.f32 0.0, %v523
    %525 = vmatprep.mubr.bf16.mxu0 0
    %526 = vmatmul.mubr.bf16.gmra.mrb[0].mxu0 %v428
    %v527 = vpop.f32.mrb[0].mxu0
    %v528 = vadd.f32 0.0, %v527
    %v529 = vpop.f32.mrb[0].mxu0
    %v530 = vadd.f32 0.0, %v529
    %v531 = vpop.f32.mrb[0].mxu0
    %v532 = vadd.f32 0.0, %v531
    %v533 = vpop.f32.mrb[0].mxu0
    %v534 = vadd.f32 0.0, %v533
    %535 = vmatprep.mubr.bf16.mxu0 0
    %536 = vmatmul.mubr.bf16.gmra.mrb[0].mxu0 %v431
    %v537 = vpop.f32.mrb[0].mxu0
    %v538 = vadd.f32 0.0, %v537
    %v539 = vpop.f32.mrb[0].mxu0
    %v540 = vadd.f32 0.0, %v539
    %v541 = vpop.f32.mrb[0].mxu0
    %v542 = vadd.f32 0.0, %v541
    %v543 = vpop.f32.mrb[0].mxu0
    %v544 = vadd.f32 0.0, %v543
    %545 = vdwg.mxu0
    %546 = vmatprep.subr.bf16.mxu0 %v403
    %547 = vmatpush1.bf16.msra.mxu0 %v402
    %548 = vmatprep.subr.bf16.mxu0 0
    %549 = vmatpush1.bf16.msra.mxu0 0
    %550 = vmatprep.subr.bf16.mxu0 0
    %551 = vmatpush1.bf16.msra.mxu0 0
    %552 = vmatprep.subr.bf16.mxu0 0
    %553 = vmatpush1.bf16.msra.mxu0 0
    %554 = vmatprep.subr.bf16.mxu0 0
    %555 = vmatpush1.bf16.msra.mxu0 0
    %556 = vmatprep.subr.bf16.mxu0 0
    %557 = vmatpush1.bf16.msra.mxu0 0
    %558 = vmatprep.subr.bf16.mxu0 0
    %559 = vmatpush1.bf16.msra.mxu0 0
    %560 = vmatprep.subr.bf16.mxu0 0
    %561 = vmatpush1.bf16.msra.mxu0 0
    %562 = vmatprep.subr.bf16.mxu0 0
    %563 = vmatpush1.bf16.msra.mxu0 0
    %564 = vmatprep.subr.bf16.mxu0 0
    %565 = vmatpush1.bf16.msra.mxu0 0
    %566 = vmatprep.subr.bf16.mxu0 0
    %567 = vmatpush1.bf16.msra.mxu0 0
    %568 = vmatprep.subr.bf16.mxu0 0
    %569 = vmatpush1.bf16.msra.mxu0 0
    %570 = vmatprep.subr.bf16.mxu0 0
    %571 = vmatpush1.bf16.msra.mxu0 0
    %572 = vmatprep.subr.bf16.mxu0 0
    %573 = vmatpush1.bf16.msra.mxu0 0
    %574 = vmatprep.subr.bf16.mxu0 0
    %575 = vmatpush1.bf16.msra.mxu0 0
    %576 = vmatprep.subr.bf16.mxu0 0
    %577 = vmatpush1.bf16.msra.mxu0 0
    %578 = vmatprep.mubr.bf16.mxu0 0
    %579 = vmatmul.mubr.bf16.gmra.mrb[0].mxu0 %v410
    %v580 = vpop.f32.mrb[0].mxu0
    %v581 = vadd.f32 0.0, %v580
    %v582 = vpop.f32.mrb[0].mxu0
    %v583 = vadd.f32 0.0, %v582
    %v584 = vpop.f32.mrb[0].mxu0
    %v585 = vadd.f32 0.0, %v584
    %v586 = vpop.f32.mrb[0].mxu0
    %v587 = vadd.f32 0.0, %v586
    %588 = vmatprep.mubr.bf16.mxu0 0
    %589 = vmatmul.mubr.bf16.gmra.mrb[0].mxu0 %v413
    %v590 = vpop.f32.mrb[0].mxu0
    %v591 = vadd.f32 0.0, %v590
    %v592 = vpop.f32.mrb[0].mxu0
    %v593 = vadd.f32 0.0, %v592
    %v594 = vpop.f32.mrb[0].mxu0
    %v595 = vadd.f32 0.0, %v594
    %v596 = vpop.f32.mrb[0].mxu0
    %v597 = vadd.f32 0.0, %v596
    %598 = vmatprep.mubr.bf16.mxu0 0
    %599 = vmatmul.mubr.bf16.gmra.mrb[0].mxu0 %v416
    %v600 = vpop.f32.mrb[0].mxu0
    %v601 = vadd.f32 0.0, %v600
    %v602 = vpop.f32.mrb[0].mxu0
    %v603 = vadd.f32 0.0, %v602
    %v604 = vpop.f32.mrb[0].mxu0
    %v605 = vadd.f32 0.0, %v604
    %v606 = vpop.f32.mrb[0].mxu0
    %v607 = vadd.f32 0.0, %v606
    %608 = vmatprep.mubr.bf16.mxu0 0
    %609 = vmatmul.mubr.bf16.gmra.mrb[0].mxu0 %v419
    %v610 = vpop.f32.mrb[0].mxu0
    %v611 = vadd.f32 0.0, %v610
    %v612 = vpop.f32.mrb[0].mxu0
    %v613 = vadd.f32 0.0, %v612
    %v614 = vpop.f32.mrb[0].mxu0
    %v615 = vadd.f32 0.0, %v614
    %v616 = vpop.f32.mrb[0].mxu0
    %v617 = vadd.f32 0.0, %v616
    %618 = vmatprep.mubr.bf16.mxu0 0
    %619 = vmatmul.mubr.bf16.gmra.mrb[0].mxu0 %v422
    %v620 = vpop.f32.mrb[0].mxu0
    %v621 = vadd.f32 0.0, %v620
    %v622 = vpop.f32.mrb[0].mxu0
    %v623 = vadd.f32 0.0, %v622
    %v624 = vpop.f32.mrb[0].mxu0
    %v625 = vadd.f32 0.0, %v624
    %v626 = vpop.f32.mrb[0].mxu0
    %v627 = vadd.f32 0.0, %v626
    %628 = vmatprep.mubr.bf16.mxu0 0
    %629 = vmatmul.mubr.bf16.gmra.mrb[0].mxu0 %v425
    %v630 = vpop.f32.mrb[0].mxu0
    %v631 = vadd.f32 0.0, %v630
    %v632 = vpop.f32.mrb[0].mxu0
    %v633 = vadd.f32 0.0, %v632
    %v634 = vpop.f32.mrb[0].mxu0
    %v635 = vadd.f32 0.0, %v634
    %v636 = vpop.f32.mrb[0].mxu0
    %v637 = vadd.f32 0.0, %v636
    %638 = vmatprep.mubr.bf16.mxu0 0
    %639 = vmatmul.mubr.bf16.gmra.mrb[0].mxu0 %v428
    %v640 = vpop.f32.mrb[0].mxu0
    %v641 = vadd.f32 0.0, %v640
    %v642 = vpop.f32.mrb[0].mxu0
    %v643 = vadd.f32 0.0, %v642
    %v644 = vpop.f32.mrb[0].mxu0
    %v645 = vadd.f32 0.0, %v644
    %v646 = vpop.f32.mrb[0].mxu0
    %v647 = vadd.f32 0.0, %v646
    %648 = vmatprep.mubr.bf16.mxu0 0
    %649 = vmatmul.mubr.bf16.gmra.mrb[0].mxu0 %v431
    %v650 = vpop.f32.mrb[0].mxu0
    %v651 = vadd.f32 0.0, %v650
    %v652 = vpop.f32.mrb[0].mxu0
    %v653 = vadd.f32 0.0, %v652
    %v654 = vpop.f32.mrb[0].mxu0
    %v655 = vadd.f32 0.0, %v654
    %v656 = vpop.f32.mrb[0].mxu0
    %v657 = vadd.f32 0.0, %v656
    %658 = vdwg.mxu0
    %v659 = vld [vmem:[#allocation11] sm:$0xf]
    %v661 = vlaneseq
    %v662 = vshrl.u32 %v661, 7
    %v663 = vsub.s32 0, %v662
    %v664 = vrot.slane %v659, %v663
    %v665 = vlaneseq
    %v666 = vshrl.u32 %v665, 7
    %v667 = vsub.s32 1, %v666
    %v668 = vrot.slane %v659, %v667
    %v669 = vlaneseq
    %v670 = vshrl.u32 %v669, 7
    %v671 = vsub.s32 2, %v670
    %v672 = vrot.slane %v659, %v671
    %v673 = vlaneseq
    %v674 = vshrl.u32 %v673, 7
    %v675 = vsub.s32 3, %v674
    %v676 = vrot.slane %v659, %v675
    %v681 = vmul.f32 %v468, %v664
    %v682 = vmul.f32 %v470, %v668
    %v683 = vmul.f32 %v581, %v672
    %v684 = vmul.f32 %v583, %v676
    %v685 = vmul.f32 %v472, %v664
    %v686 = vmul.f32 %v474, %v668
    %v687 = vmul.f32 %v585, %v672
    %v688 = vmul.f32 %v587, %v676
    %v689 = vmul.f32 %v478, %v664
    %v690 = vmul.f32 %v480, %v668
    %v691 = vmul.f32 %v591, %v672
    %v692 = vmul.f32 %v593, %v676
    %v693 = vmul.f32 %v482, %v664
    %v694 = vmul.f32 %v484, %v668
    %v695 = vmul.f32 %v595, %v672
    %v696 = vmul.f32 %v597, %v676
    %v697 = vmul.f32 %v488, %v664
    %v698 = vmul.f32 %v490, %v668
    %v699 = vmul.f32 %v601, %v672
    %v700 = vmul.f32 %v603, %v676
    %v701 = vmul.f32 %v492, %v664
    %v702 = vmul.f32 %v494, %v668
    %v703 = vmul.f32 %v605, %v672
    %v704 = vmul.f32 %v607, %v676
    %v705 = vmul.f32 %v498, %v664
    %v706 = vmul.f32 %v500, %v668
    %v707 = vmul.f32 %v611, %v672
    %v708 = vmul.f32 %v613, %v676
    %v709 = vmul.f32 %v502, %v664
    %v710 = vmul.f32 %v504, %v668
    %v711 = vmul.f32 %v615, %v672
    %v712 = vmul.f32 %v617, %v676
    %v713 = vmul.f32 %v508, %v664
    %v714 = vmul.f32 %v510, %v668
    %v715 = vmul.f32 %v621, %v672
    %v716 = vmul.f32 %v623, %v676
    %v717 = vmul.f32 %v512, %v664
    %v718 = vmul.f32 %v514, %v668
    %v719 = vmul.f32 %v625, %v672
    %v720 = vmul.f32 %v627, %v676
    %v721 = vmul.f32 %v518, %v664
    %v722 = vmul.f32 %v520, %v668
    %v723 = vmul.f32 %v631, %v672
    %v724 = vmul.f32 %v633, %v676
    %v725 = vmul.f32 %v522, %v664
    %v726 = vmul.f32 %v524, %v668
    %v727 = vmul.f32 %v635, %v672
    %v728 = vmul.f32 %v637, %v676
    %v729 = vmul.f32 %v528, %v664
    %v730 = vmul.f32 %v530, %v668
    %v731 = vmul.f32 %v641, %v672
    %v732 = vmul.f32 %v643, %v676
    %v733 = vmul.f32 %v532, %v664
    %v734 = vmul.f32 %v534, %v668
    %v735 = vmul.f32 %v645, %v672
    %v736 = vmul.f32 %v647, %v676
    %v737 = vmul.f32 %v538, %v664
    %v738 = vmul.f32 %v540, %v668
    %v739 = vmul.f32 %v651, %v672
    %v740 = vmul.f32 %v653, %v676
    %v741 = vmul.f32 %v542, %v664
    %v742 = vmul.f32 %v544, %v668
    %v743 = vmul.f32 %v655, %v672
    %v744 = vmul.f32 %v657, %v676
    %v745 = vadd.f32 %v681, %v682
    %v746 = vadd.f32 %v745, %v683
    %v747 = vadd.f32 %v746, %v684
    %748 = vadd.xlane.f32.xlu0 %v747
    %v749 = vpop.xlane.xlu0 %748
    %v750 = vadd.f32 %v685, %v686
    %v751 = vadd.f32 %v750, %v687
    %v752 = vadd.f32 %v751, %v688
    %753 = vadd.xlane.f32.xlu0 %v752
    %v754 = vpop.xlane.xlu0 %753
    %v755 = vadd.f32 %v689, %v690
    %v756 = vadd.f32 %v755, %v691
    %v757 = vadd.f32 %v756, %v692
    %758 = vadd.xlane.f32.xlu0 %v757
    %v759 = vpop.xlane.xlu0 %758
    %v760 = vadd.f32 %v693, %v694
    %v761 = vadd.f32 %v760, %v695
    %v762 = vadd.f32 %v761, %v696
    %763 = vadd.xlane.f32.xlu0 %v762
    %v764 = vpop.xlane.xlu0 %763
    %v765 = vadd.f32 %v697, %v698
    %v766 = vadd.f32 %v765, %v699
    %v767 = vadd.f32 %v766, %v700
    %768 = vadd.xlane.f32.xlu0 %v767
    %v769 = vpop.xlane.xlu0 %768
    %v770 = vadd.f32 %v701, %v702
    %v771 = vadd.f32 %v770, %v703
    %v772 = vadd.f32 %v771, %v704
    %773 = vadd.xlane.f32.xlu0 %v772
    %v774 = vpop.xlane.xlu0 %773
    %v775 = vadd.f32 %v705, %v706
    %v776 = vadd.f32 %v775, %v707
    %v777 = vadd.f32 %v776, %v708
    %778 = vadd.xlane.f32.xlu0 %v777
    %v779 = vpop.xlane.xlu0 %778
    %v780 = vadd.f32 %v709, %v710
    %v781 = vadd.f32 %v780, %v711
    %v782 = vadd.f32 %v781, %v712
    %783 = vadd.xlane.f32.xlu0 %v782
    %v784 = vpop.xlane.xlu0 %783
    %v785 = vadd.f32 %v713, %v714
    %v786 = vadd.f32 %v785, %v715
    %v787 = vadd.f32 %v786, %v716
    %788 = vadd.xlane.f32.xlu0 %v787
    %v789 = vpop.xlane.xlu0 %788
    %v790 = vadd.f32 %v717, %v718
    %v791 = vadd.f32 %v790, %v719
    %v792 = vadd.f32 %v791, %v720
    %793 = vadd.xlane.f32.xlu0 %v792
    %v794 = vpop.xlane.xlu0 %793
    %v795 = vadd.f32 %v721, %v722
    %v796 = vadd.f32 %v795, %v723
    %v797 = vadd.f32 %v796, %v724
    %798 = vadd.xlane.f32.xlu0 %v797
    %v799 = vpop.xlane.xlu0 %798
    %v800 = vadd.f32 %v725, %v726
    %v801 = vadd.f32 %v800, %v727
    %v802 = vadd.f32 %v801, %v728
    %803 = vadd.xlane.f32.xlu0 %v802
    %v804 = vpop.xlane.xlu0 %803
    %v805 = vadd.f32 %v729, %v730
    %v806 = vadd.f32 %v805, %v731
    %v807 = vadd.f32 %v806, %v732
    %808 = vadd.xlane.f32.xlu0 %v807
    %v809 = vpop.xlane.xlu0 %808
    %v810 = vadd.f32 %v733, %v734
    %v811 = vadd.f32 %v810, %v735
    %v812 = vadd.f32 %v811, %v736
    %813 = vadd.xlane.f32.xlu0 %v812
    %v814 = vpop.xlane.xlu0 %813
    %v815 = vadd.f32 %v737, %v738
    %v816 = vadd.f32 %v815, %v739
    %v817 = vadd.f32 %v816, %v740
    %818 = vadd.xlane.f32.xlu0 %v817
    %v819 = vpop.xlane.xlu0 %818
    %v820 = vadd.f32 %v741, %v742
    %v821 = vadd.f32 %v820, %v743
    %v822 = vadd.f32 %v821, %v744
    %823 = vadd.xlane.f32.xlu0 %v822
    %v824 = vpop.xlane.xlu0 %823
    %v825 = vld [vmem:[#allocation10] sm:$0xf]
    %v827 = vlaneseq
    %v828 = vshrl.u32 %v827, 7
    %v829 = vsub.s32 0, %v828
    %v830 = vrot.slane %v825, %v829
    %v831 = vlaneseq
    %v832 = vshrl.u32 %v831, 7
    %v833 = vsub.s32 1, %v832
    %v834 = vrot.slane %v825, %v833
    %v835 = vlaneseq
    %v836 = vshrl.u32 %v835, 7
    %v837 = vsub.s32 2, %v836
    %v838 = vrot.slane %v825, %v837
    %v839 = vlaneseq
    %v840 = vshrl.u32 %v839, 7
    %v841 = vsub.s32 3, %v840
    %v842 = vrot.slane %v825, %v841
    %847 = vmatprep.subr.mxu0 %v470
    %848 = vmatpush1.xpose.msra.mxu0 %v468
    %849 = vmatprep.subr.mxu0 %v474
    %850 = vmatpush1.xpose.msra.mxu0 %v472
    %851 = vmatprep.subr.mxu0 %v480
    %852 = vmatpush1.xpose.msra.mxu0 %v478
    %853 = vmatprep.subr.mxu0 %v484
    %854 = vmatpush1.xpose.msra.mxu0 %v482
    %855 = vmatprep.subr.mxu0 %v490
    %856 = vmatpush1.xpose.msra.mxu0 %v488
    %857 = vmatprep.subr.mxu0 %v494
    %858 = vmatpush1.xpose.msra.mxu0 %v492
    %859 = vmatprep.subr.mxu0 %v500
    %860 = vmatpush1.xpose.msra.mxu0 %v498
    %861 = vmatprep.subr.mxu0 %v504
    %862 = vmatpush1.xpose.msra.mxu0 %v502
    %863 = vmatprep.subr.mxu0 %v510
    %864 = vmatpush1.xpose.msra.mxu0 %v508
    %865 = vmatprep.subr.mxu0 %v514
    %866 = vmatpush1.xpose.msra.mxu0 %v512
    %867 = vmatprep.subr.mxu0 %v520
    %868 = vmatpush1.xpose.msra.mxu0 %v518
    %869 = vmatprep.subr.mxu0 %v524
    %870 = vmatpush1.xpose.msra.mxu0 %v522
    %871 = vmatprep.subr.mxu0 %v530
    %872 = vmatpush1.xpose.msra.mxu0 %v528
    %873 = vmatprep.subr.mxu0 %v534
    %874 = vmatpush1.xpose.msra.mxu0 %v532
    %875 = vmatprep.subr.mxu0 %v540
    %876 = vmatpush1.xpose.msra.mxu0 %v538
    %877 = vmatprep.subr.mxu0 %v544
    %878 = vmatpush1.xpose.msra.mxu0 %v542
    %879 = vmatprep.subr.mxu0 0.0
    %880 = vmatpush1.xpose.msra.mxu0 0.0
    %881 = vmatprep.subr.mxu0 0.0
    %882 = vmatpush1.xpose.msra.mxu0 0.0
    %883 = vmatprep.subr.mxu0 0.0
    %884 = vmatpush1.xpose.msra.mxu0 0.0
    %885 = vmatprep.subr.mxu0 0.0
    %886 = vmatpush1.xpose.msra.mxu0 0.0
    %887 = vmatprep.subr.mxu0 0.0
    %888 = vmatpush1.xpose.msra.mxu0 0.0
    %889 = vmatprep.subr.mxu0 0.0
    %890 = vmatpush1.xpose.msra.mxu0 0.0
    %891 = vmatprep.subr.mxu0 0.0
    %892 = vmatpush1.xpose.msra.mxu0 0.0
    %893 = vmatprep.subr.mxu0 0.0
    %894 = vmatpush1.xpose.msra.mxu0 0.0
    %895 = vmatprep.subr.mxu0 0.0
    %896 = vmatpush1.xpose.msra.mxu0 0.0
    %897 = vmatprep.subr.mxu0 0.0
    %898 = vmatpush1.xpose.msra.mxu0 0.0
    %899 = vmatprep.subr.mxu0 0.0
    %900 = vmatpush1.xpose.msra.mxu0 0.0
    %901 = vmatprep.subr.mxu0 0.0
    %902 = vmatpush1.xpose.msra.mxu0 0.0
    %903 = vmatprep.subr.mxu0 0.0
    %904 = vmatpush1.xpose.msra.mxu0 0.0
    %905 = vmatprep.subr.mxu0 0.0
    %906 = vmatpush1.xpose.msra.mxu0 0.0
    %907 = vmatprep.subr.mxu0 0.0
    %908 = vmatpush1.xpose.msra.mxu0 0.0
    %909 = vmatprep.subr.mxu0 0.0
    %910 = vmatpush1.xpose.msra.mxu0 0.0
    %911 = vmatprep.mubr.f32.mxu0 %v834
    %912 = vmatmul.mubr.f32.gmra.mrb[0].mxu0 %v830
    %v913 = vpop.f32.mrb[0].mxu0
    %v914 = vadd.f32 0.0, %v913
    %v915 = vpop.f32.mrb[0].mxu0
    %916 = vdwg.mxu0
    %917 = vmatprep.subr.mxu0 %v583
    %918 = vmatpush1.xpose.msra.mxu0 %v581
    %919 = vmatprep.subr.mxu0 %v587
    %920 = vmatpush1.xpose.msra.mxu0 %v585
    %921 = vmatprep.subr.mxu0 %v593
    %922 = vmatpush1.xpose.msra.mxu0 %v591
    %923 = vmatprep.subr.mxu0 %v597
    %924 = vmatpush1.xpose.msra.mxu0 %v595
    %925 = vmatprep.subr.mxu0 %v603
    %926 = vmatpush1.xpose.msra.mxu0 %v601
    %927 = vmatprep.subr.mxu0 %v607
    %928 = vmatpush1.xpose.msra.mxu0 %v605
    %929 = vmatprep.subr.mxu0 %v613
    %930 = vmatpush1.xpose.msra.mxu0 %v611
    %931 = vmatprep.subr.mxu0 %v617
    %932 = vmatpush1.xpose.msra.mxu0 %v615
    %933 = vmatprep.subr.mxu0 %v623
    %934 = vmatpush1.xpose.msra.mxu0 %v621
    %935 = vmatprep.subr.mxu0 %v627
    %936 = vmatpush1.xpose.msra.mxu0 %v625
    %937 = vmatprep.subr.mxu0 %v633
    %938 = vmatpush1.xpose.msra.mxu0 %v631
    %939 = vmatprep.subr.mxu0 %v637
    %940 = vmatpush1.xpose.msra.mxu0 %v635
    %941 = vmatprep.subr.mxu0 %v643
    %942 = vmatpush1.xpose.msra.mxu0 %v641
    %943 = vmatprep.subr.mxu0 %v647
    %944 = vmatpush1.xpose.msra.mxu0 %v645
    %945 = vmatprep.subr.mxu0 %v653
    %946 = vmatpush1.xpose.msra.mxu0 %v651
    %947 = vmatprep.subr.mxu0 %v657
    %948 = vmatpush1.xpose.msra.mxu0 %v655
    %949 = vmatprep.subr.mxu0 0.0
    %950 = vmatpush1.xpose.msra.mxu0 0.0
    %951 = vmatprep.subr.mxu0 0.0
    %952 = vmatpush1.xpose.msra.mxu0 0.0
    %953 = vmatprep.subr.mxu0 0.0
    %954 = vmatpush1.xpose.msra.mxu0 0.0
    %955 = vmatprep.subr.mxu0 0.0
    %956 = vmatpush1.xpose.msra.mxu0 0.0
    %957 = vmatprep.subr.mxu0 0.0
    %958 = vmatpush1.xpose.msra.mxu0 0.0
    %959 = vmatprep.subr.mxu0 0.0
    %960 = vmatpush1.xpose.msra.mxu0 0.0
    %961 = vmatprep.subr.mxu0 0.0
    %962 = vmatpush1.xpose.msra.mxu0 0.0
    %963 = vmatprep.subr.mxu0 0.0
    %964 = vmatpush1.xpose.msra.mxu0 0.0
    %965 = vmatprep.subr.mxu0 0.0
    %966 = vmatpush1.xpose.msra.mxu0 0.0
    %967 = vmatprep.subr.mxu0 0.0
    %968 = vmatpush1.xpose.msra.mxu0 0.0
    %969 = vmatprep.subr.mxu0 0.0
    %970 = vmatpush1.xpose.msra.mxu0 0.0
    %971 = vmatprep.subr.mxu0 0.0
    %972 = vmatpush1.xpose.msra.mxu0 0.0
    %973 = vmatprep.subr.mxu0 0.0
    %974 = vmatpush1.xpose.msra.mxu0 0.0
    %975 = vmatprep.subr.mxu0 0.0
    %976 = vmatpush1.xpose.msra.mxu0 0.0
    %977 = vmatprep.subr.mxu0 0.0
    %978 = vmatpush1.xpose.msra.mxu0 0.0
    %979 = vmatprep.subr.mxu0 0.0
    %980 = vmatpush1.xpose.msra.mxu0 0.0
    %981 = vmatprep.mubr.f32.mxu0 %v842
    %982 = vmatmul.mubr.f32.gmra.mrb[0].mxu0 %v838
    %v983 = vpop.f32.mrb[0].mxu0
    %v984 = vadd.f32 %v914, %v983
    %v985 = vpop.f32.mrb[0].mxu0
    %986 = vdwg.mxu0
    %v987 = vlaneseq
    %v988 = vshrl.u32 %v987, 7
    %v989 = vsub.s32 0, %v988
    %v990 = vrot.slane %v984, %v989
    %v991 = vadd.f32 %v749, %v990
    %v992 = vadd.f32 %v754, %v990
    %v993 = vadd.f32 %v759, %v990
    %v994 = vadd.f32 %v764, %v990
    %v995 = vadd.f32 %v769, %v990
    %v996 = vadd.f32 %v774, %v990
    %v997 = vadd.f32 %v779, %v990
    %v998 = vadd.f32 %v784, %v990
    %v999 = vadd.f32 %v789, %v990
    %v1000 = vadd.f32 %v794, %v990
    %v1001 = vadd.f32 %v799, %v990
    %v1002 = vadd.f32 %v804, %v990
    %v1003 = vadd.f32 %v809, %v990
    %v1004 = vadd.f32 %v814, %v990
    %v1005 = vadd.f32 %v819, %v990
    %v1006 = vadd.f32 %v824, %v990
    %vm1007 = vcmp.gt.f32.partialorder %v991, 0.0
    %vm1008 = vcmp.gt.f32.partialorder %v992, 0.0
    %vm1009 = vcmp.gt.f32.partialorder %v993, 0.0
    %vm1010 = vcmp.gt.f32.partialorder %v994, 0.0
    %vm1011 = vcmp.gt.f32.partialorder %v995, 0.0
    %vm1012 = vcmp.gt.f32.partialorder %v996, 0.0
    %vm1013 = vcmp.gt.f32.partialorder %v997, 0.0
    %vm1014 = vcmp.gt.f32.partialorder %v998, 0.0
    %vm1015 = vcmp.gt.f32.partialorder %v999, 0.0
    %vm1016 = vcmp.gt.f32.partialorder %v1000, 0.0
    %vm1017 = vcmp.gt.f32.partialorder %v1001, 0.0
    %vm1018 = vcmp.gt.f32.partialorder %v1002, 0.0
    %vm1019 = vcmp.gt.f32.partialorder %v1003, 0.0
    %vm1020 = vcmp.gt.f32.partialorder %v1004, 0.0
    %vm1021 = vcmp.gt.f32.partialorder %v1005, 0.0
    %vm1022 = vcmp.gt.f32.partialorder %v1006, 0.0
    %v1023 = vmul.f32 %v991, 0.2
    %v1024 = vmul.f32 %v992, 0.2
    %v1025 = vmul.f32 %v993, 0.2
    %v1026 = vmul.f32 %v994, 0.2
    %v1027 = vmul.f32 %v995, 0.2
    %v1028 = vmul.f32 %v996, 0.2
    %v1029 = vmul.f32 %v997, 0.2
    %v1030 = vmul.f32 %v998, 0.2
    %v1031 = vmul.f32 %v999, 0.2
    %v1032 = vmul.f32 %v1000, 0.2
    %v1033 = vmul.f32 %v1001, 0.2
    %v1034 = vmul.f32 %v1002, 0.2
    %v1035 = vmul.f32 %v1003, 0.2
    %v1036 = vmul.f32 %v1004, 0.2
    %v1037 = vmul.f32 %v1005, 0.2
    %v1038 = vmul.f32 %v1006, 0.2
    %v1039 = vsel %vm1007, %v991, %v1023
    %v1040 = vsel %vm1008, %v992, %v1024
    %v1041 = vsel %vm1009, %v993, %v1025
    %v1042 = vsel %vm1010, %v994, %v1026
    %v1043 = vsel %vm1011, %v995, %v1027
    %v1044 = vsel %vm1012, %v996, %v1028
    %v1045 = vsel %vm1013, %v997, %v1029
    %v1046 = vsel %vm1014, %v998, %v1030
    %v1047 = vsel %vm1015, %v999, %v1031
    %v1048 = vsel %vm1016, %v1000, %v1032
    %v1049 = vsel %vm1017, %v1001, %v1033
    %v1050 = vsel %vm1018, %v1002, %v1034
    %v1051 = vsel %vm1019, %v1003, %v1035
    %v1052 = vsel %vm1020, %v1004, %v1036
    %v1053 = vsel %vm1021, %v1005, %v1037
    %v1054 = vsel %vm1022, %v1006, %v1038
    %v1055 = vadd.f32 %v1039, %v311
    %v1056 = vadd.f32 %v1040, %v312
    %v1057 = vadd.f32 %v1041, %v313
    %v1058 = vadd.f32 %v1042, %v314
    %v1059 = vadd.f32 %v1043, %v315
    %v1060 = vadd.f32 %v1044, %v316
    %v1061 = vadd.f32 %v1045, %v317
    %v1062 = vadd.f32 %v1046, %v318
    %v1063 = vadd.f32 %v1047, %v319
    %v1064 = vadd.f32 %v1048, %v320
    %v1065 = vadd.f32 %v1049, %v321
    %v1066 = vadd.f32 %v1050, %v322
    %v1067 = vadd.f32 %v1051, %v323
    %v1068 = vadd.f32 %v1052, %v324
    %v1069 = vadd.f32 %v1053, %v325
    %v1070 = vadd.f32 %v1054, %v326
    %1071 = vmax.xlane.f32.xlu0 %v1055
    %v1072 = vpop.xlane.xlu0 %1071
    %1073 = vmax.xlane.f32.xlu0 %v1056
    %v1074 = vpop.xlane.xlu0 %1073
    %1075 = vmax.xlane.f32.xlu0 %v1057
    %v1076 = vpop.xlane.xlu0 %1075
    %1077 = vmax.xlane.f32.xlu0 %v1058
    %v1078 = vpop.xlane.xlu0 %1077
    %1079 = vmax.xlane.f32.xlu0 %v1059
    %v1080 = vpop.xlane.xlu0 %1079
    %1081 = vmax.xlane.f32.xlu0 %v1060
    %v1082 = vpop.xlane.xlu0 %1081
    %1083 = vmax.xlane.f32.xlu0 %v1061
    %v1084 = vpop.xlane.xlu0 %1083
    %1085 = vmax.xlane.f32.xlu0 %v1062
    %v1086 = vpop.xlane.xlu0 %1085
    %1087 = vmax.xlane.f32.xlu0 %v1063
    %v1088 = vpop.xlane.xlu0 %1087
    %1089 = vmax.xlane.f32.xlu0 %v1064
    %v1090 = vpop.xlane.xlu0 %1089
    %1091 = vmax.xlane.f32.xlu0 %v1065
    %v1092 = vpop.xlane.xlu0 %1091
    %1093 = vmax.xlane.f32.xlu0 %v1066
    %v1094 = vpop.xlane.xlu0 %1093
    %1095 = vmax.xlane.f32.xlu0 %v1067
    %v1096 = vpop.xlane.xlu0 %1095
    %1097 = vmax.xlane.f32.xlu0 %v1068
    %v1098 = vpop.xlane.xlu0 %1097
    %1099 = vmax.xlane.f32.xlu0 %v1069
    %v1100 = vpop.xlane.xlu0 %1099
    %1101 = vmax.xlane.f32.xlu0 %v1070
    %v1102 = vpop.xlane.xlu0 %1101
    %v1103 = vsub.f32 %v1055, %v1072
    %v1104 = vsub.f32 %v1056, %v1074
    %v1105 = vsub.f32 %v1057, %v1076
    %v1106 = vsub.f32 %v1058, %v1078
    %v1107 = vsub.f32 %v1059, %v1080
    %v1108 = vsub.f32 %v1060, %v1082
    %v1109 = vsub.f32 %v1061, %v1084
    %v1110 = vsub.f32 %v1062, %v1086
    %v1111 = vsub.f32 %v1063, %v1088
    %v1112 = vsub.f32 %v1064, %v1090
    %v1113 = vsub.f32 %v1065, %v1092
    %v1114 = vsub.f32 %v1066, %v1094
    %v1115 = vsub.f32 %v1067, %v1096
    %v1116 = vsub.f32 %v1068, %v1098
    %v1117 = vsub.f32 %v1069, %v1100
    %v1118 = vsub.f32 %v1070, %v1102
    %v1119 = vmul.f32 %v1103, 1.442695
    %v1120 = vpow.pop %v1119
    %v1121 = vmul.f32 %v1104, 1.442695
    %v1122 = vpow.pop %v1121
    %v1123 = vmul.f32 %v1105, 1.442695
    %v1124 = vpow.pop %v1123
    %v1125 = vmul.f32 %v1106, 1.442695
    %v1126 = vpow.pop %v1125
    %v1127 = vmul.f32 %v1107, 1.442695
    %v1128 = vpow.pop %v1127
    %v1129 = vmul.f32 %v1108, 1.442695
    %v1130 = vpow.pop %v1129
    %v1131 = vmul.f32 %v1109, 1.442695
    %v1132 = vpow.pop %v1131
    %v1133 = vmul.f32 %v1110, 1.442695
    %v1134 = vpow.pop %v1133
    %v1135 = vmul.f32 %v1111, 1.442695
    %v1136 = vpow.pop %v1135
    %v1137 = vmul.f32 %v1112, 1.442695
    %v1138 = vpow.pop %v1137
    %v1139 = vmul.f32 %v1113, 1.442695
    %v1140 = vpow.pop %v1139
    %v1141 = vmul.f32 %v1114, 1.442695
    %v1142 = vpow.pop %v1141
    %v1143 = vmul.f32 %v1115, 1.442695
    %v1144 = vpow.pop %v1143
    %v1145 = vmul.f32 %v1116, 1.442695
    %v1146 = vpow.pop %v1145
    %v1147 = vmul.f32 %v1117, 1.442695
    %v1148 = vpow.pop %v1147
    %v1149 = vmul.f32 %v1118, 1.442695
    %v1150 = vpow.pop %v1149
    %1151 = vadd.xlane.f32.xlu0 %v1120
    %v1152 = vpop.xlane.xlu0 %1151
    %1153 = vadd.xlane.f32.xlu0 %v1122
    %v1154 = vpop.xlane.xlu0 %1153
    %1155 = vadd.xlane.f32.xlu0 %v1124
    %v1156 = vpop.xlane.xlu0 %1155
    %1157 = vadd.xlane.f32.xlu0 %v1126
    %v1158 = vpop.xlane.xlu0 %1157
    %1159 = vadd.xlane.f32.xlu0 %v1128
    %v1160 = vpop.xlane.xlu0 %1159
    %1161 = vadd.xlane.f32.xlu0 %v1130
    %v1162 = vpop.xlane.xlu0 %1161
    %1163 = vadd.xlane.f32.xlu0 %v1132
    %v1164 = vpop.xlane.xlu0 %1163
    %1165 = vadd.xlane.f32.xlu0 %v1134
    %v1166 = vpop.xlane.xlu0 %1165
    %1167 = vadd.xlane.f32.xlu0 %v1136
    %v1168 = vpop.xlane.xlu0 %1167
    %1169 = vadd.xlane.f32.xlu0 %v1138
    %v1170 = vpop.xlane.xlu0 %1169
    %1171 = vadd.xlane.f32.xlu0 %v1140
    %v1172 = vpop.xlane.xlu0 %1171
    %1173 = vadd.xlane.f32.xlu0 %v1142
    %v1174 = vpop.xlane.xlu0 %1173
    %1175 = vadd.xlane.f32.xlu0 %v1144
    %v1176 = vpop.xlane.xlu0 %1175
    %1177 = vadd.xlane.f32.xlu0 %v1146
    %v1178 = vpop.xlane.xlu0 %1177
    %1179 = vadd.xlane.f32.xlu0 %v1148
    %v1180 = vpop.xlane.xlu0 %1179
    %1181 = vadd.xlane.f32.xlu0 %v1150
    %v1182 = vpop.xlane.xlu0 %1181
    %v1183 = vrcp.pop %v1152
    %v1184 = vrcp.pop %v1154
    %v1185 = vrcp.pop %v1156
    %v1186 = vrcp.pop %v1158
    %v1187 = vrcp.pop %v1160
    %v1188 = vrcp.pop %v1162
    %v1189 = vrcp.pop %v1164
    %v1190 = vrcp.pop %v1166
    %v1191 = vrcp.pop %v1168
    %v1192 = vrcp.pop %v1170
    %v1193 = vrcp.pop %v1172
    %v1194 = vrcp.pop %v1174
    %v1195 = vrcp.pop %v1176
    %v1196 = vrcp.pop %v1178
    %v1197 = vrcp.pop %v1180
    %v1198 = vrcp.pop %v1182
    %v1199 = vmul.f32 %v1120, %v1183
    %v1200 = vmul.f32 %v1122, %v1184
    %v1201 = vmul.f32 %v1124, %v1185
    %v1202 = vmul.f32 %v1126, %v1186
    %v1203 = vmul.f32 %v1128, %v1187
    %v1204 = vmul.f32 %v1130, %v1188
    %v1205 = vmul.f32 %v1132, %v1189
    %v1206 = vmul.f32 %v1134, %v1190
    %v1207 = vmul.f32 %v1136, %v1191
    %v1208 = vmul.f32 %v1138, %v1192
    %v1209 = vmul.f32 %v1140, %v1193
    %v1210 = vmul.f32 %v1142, %v1194
    %v1211 = vmul.f32 %v1144, %v1195
    %v1212 = vmul.f32 %v1146, %v1196
    %v1213 = vmul.f32 %v1148, %v1197
    %v1214 = vmul.f32 %v1150, %v1198
    %v1215 = vpack.c.bf16 %v1200, %v1199
    %v1216 = vpack.c.bf16 %v1202, %v1201
    %v1217 = vpack.c.bf16 %v1204, %v1203
    %v1218 = vpack.c.bf16 %v1206, %v1205
    %v1219 = vpack.c.bf16 %v1208, %v1207
    %v1220 = vpack.c.bf16 %v1210, %v1209
    %v1221 = vpack.c.bf16 %v1212, %v1211
    %v1222 = vpack.c.bf16 %v1214, %v1213
    %v1223 = vpack.c.bf16 %v472, %v468
    %v1224 = vpack.c.bf16 %v474, %v470
    %v1225 = vpack.c.bf16 %v585, %v581
    %v1226 = vpack.c.bf16 %v587, %v583
    %v1227 = vpack.c.bf16 %v482, %v478
    %v1228 = vpack.c.bf16 %v484, %v480
    %v1229 = vpack.c.bf16 %v595, %v591
    %v1230 = vpack.c.bf16 %v597, %v593
    %v1231 = vpack.c.bf16 %v492, %v488
    %v1232 = vpack.c.bf16 %v494, %v490
    %v1233 = vpack.c.bf16 %v605, %v601
    %v1234 = vpack.c.bf16 %v607, %v603
    %v1235 = vpack.c.bf16 %v502, %v498
    %v1236 = vpack.c.bf16 %v504, %v500
    %v1237 = vpack.c.bf16 %v615, %v611
    %v1238 = vpack.c.bf16 %v617, %v613
    %v1239 = vpack.c.bf16 %v512, %v508
    %v1240 = vpack.c.bf16 %v514, %v510
    %v1241 = vpack.c.bf16 %v625, %v621
    %v1242 = vpack.c.bf16 %v627, %v623
    %v1243 = vpack.c.bf16 %v522, %v518
    %v1244 = vpack.c.bf16 %v524, %v520
    %v1245 = vpack.c.bf16 %v635, %v631
    %v1246 = vpack.c.bf16 %v637, %v633
    %v1247 = vpack.c.bf16 %v532, %v528
    %v1248 = vpack.c.bf16 %v534, %v530
    %v1249 = vpack.c.bf16 %v645, %v641
    %v1250 = vpack.c.bf16 %v647, %v643
    %v1251 = vpack.c.bf16 %v542, %v538
    %v1252 = vpack.c.bf16 %v544, %v540
    %v1253 = vpack.c.bf16 %v655, %v651
    %v1254 = vpack.c.bf16 %v657, %v653
    %v1255 = vld [vmem:[#allocation13] sm:$0xf]
    %v1257 = vlaneseq
    %v1258 = vshrl.u32 %v1257, 7
    %v1259 = vsub.s32 0, %v1258
    %v1260 = vrot.slane %v1255, %v1259
    %v1261 = vlaneseq
    %v1262 = vshrl.u32 %v1261, 7
    %v1263 = vsub.s32 1, %v1262
    %v1264 = vrot.slane %v1255, %v1263
    %v1265 = vlaneseq
    %v1266 = vshrl.u32 %v1265, 7
    %v1267 = vsub.s32 2, %v1266
    %v1268 = vrot.slane %v1255, %v1267
    %v1269 = vlaneseq
    %v1270 = vshrl.u32 %v1269, 7
    %v1271 = vsub.s32 3, %v1270
    %v1272 = vrot.slane %v1255, %v1271
    %1277 = vmatprep.subr.bf16.mxu0 %v1224
    %1278 = vmatpush1.bf16.msra.mxu0 %v1223
    %1279 = vmatprep.subr.bf16.mxu0 %v1228
    %1280 = vmatpush1.bf16.msra.mxu0 %v1227
    %1281 = vmatprep.subr.bf16.mxu0 %v1232
    %1282 = vmatpush1.bf16.msra.mxu0 %v1231
    %1283 = vmatprep.subr.bf16.mxu0 %v1236
    %1284 = vmatpush1.bf16.msra.mxu0 %v1235
    %1285 = vmatprep.subr.bf16.mxu0 %v1240
    %1286 = vmatpush1.bf16.msra.mxu0 %v1239
    %1287 = vmatprep.subr.bf16.mxu0 %v1244
    %1288 = vmatpush1.bf16.msra.mxu0 %v1243
    %1289 = vmatprep.subr.bf16.mxu0 %v1248
    %1290 = vmatpush1.bf16.msra.mxu0 %v1247
    %1291 = vmatprep.subr.bf16.mxu0 %v1252
    %1292 = vmatpush1.bf16.msra.mxu0 %v1251
    %1293 = vmatprep.subr.bf16.mxu0 0
    %1294 = vmatpush1.bf16.msra.mxu0 0
    %1295 = vmatprep.subr.bf16.mxu0 0
    %1296 = vmatpush1.bf16.msra.mxu0 0
    %1297 = vmatprep.subr.bf16.mxu0 0
    %1298 = vmatpush1.bf16.msra.mxu0 0
    %1299 = vmatprep.subr.bf16.mxu0 0
    %1300 = vmatpush1.bf16.msra.mxu0 0
    %1301 = vmatprep.subr.bf16.mxu0 0
    %1302 = vmatpush1.bf16.msra.mxu0 0
    %1303 = vmatprep.subr.bf16.mxu0 0
    %1304 = vmatpush1.bf16.msra.mxu0 0
    %1305 = vmatprep.subr.bf16.mxu0 0
    %1306 = vmatpush1.bf16.msra.mxu0 0
    %1307 = vmatprep.subr.bf16.mxu0 0
    %1308 = vmatpush1.bf16.msra.mxu0 0
    %1309 = vmatprep.mubr.bf16.mxu0 0
    %1310 = vmatmul.mubr.bf16.gmra.mrb[0].mxu0 %v1215
    %v1311 = vpop.f32.mrb[0].mxu0
    %v1312 = vadd.f32 %v1260, %v1311
    %v1313 = vpop.f32.mrb[0].mxu0
    %v1314 = vadd.f32 %v1264, %v1313
    %v1315 = vpop.f32.mrb[0].mxu0
    %v1316 = vadd.f32 %v1260, %v1315
    %v1317 = vpop.f32.mrb[0].mxu0
    %v1318 = vadd.f32 %v1264, %v1317
    %1319 = vmatprep.mubr.bf16.mxu0 0
    %1320 = vmatmul.mubr.bf16.gmra.mrb[0].mxu0 %v1216
    %v1321 = vpop.f32.mrb[0].mxu0
    %v1322 = vadd.f32 %v1260, %v1321
    %v1323 = vpop.f32.mrb[0].mxu0
    %v1324 = vadd.f32 %v1264, %v1323
    %v1325 = vpop.f32.mrb[0].mxu0
    %v1326 = vadd.f32 %v1260, %v1325
    %v1327 = vpop.f32.mrb[0].mxu0
    %v1328 = vadd.f32 %v1264, %v1327
    %1329 = vmatprep.mubr.bf16.mxu0 0
    %1330 = vmatmul.mubr.bf16.gmra.mrb[0].mxu0 %v1217
    %v1331 = vpop.f32.mrb[0].mxu0
    %v1332 = vadd.f32 %v1260, %v1331
    %v1333 = vpop.f32.mrb[0].mxu0
    %v1334 = vadd.f32 %v1264, %v1333
    %v1335 = vpop.f32.mrb[0].mxu0
    %v1336 = vadd.f32 %v1260, %v1335
    %v1337 = vpop.f32.mrb[0].mxu0
    %v1338 = vadd.f32 %v1264, %v1337
    %1339 = vmatprep.mubr.bf16.mxu0 0
    %1340 = vmatmul.mubr.bf16.gmra.mrb[0].mxu0 %v1218
    %v1341 = vpop.f32.mrb[0].mxu0
    %v1342 = vadd.f32 %v1260, %v1341
    %v1343 = vpop.f32.mrb[0].mxu0
    %v1344 = vadd.f32 %v1264, %v1343
    %v1345 = vpop.f32.mrb[0].mxu0
    %v1346 = vadd.f32 %v1260, %v1345
    %v1347 = vpop.f32.mrb[0].mxu0
    %v1348 = vadd.f32 %v1264, %v1347
    %1349 = vmatprep.mubr.bf16.mxu0 0
    %1350 = vmatmul.mubr.bf16.gmra.mrb[0].mxu0 %v1219
    %v1351 = vpop.f32.mrb[0].mxu0
    %v1352 = vadd.f32 %v1260, %v1351
    %v1353 = vpop.f32.mrb[0].mxu0
    %v1354 = vadd.f32 %v1264, %v1353
    %v1355 = vpop.f32.mrb[0].mxu0
    %v1356 = vadd.f32 %v1260, %v1355
    %v1357 = vpop.f32.mrb[0].mxu0
    %v1358 = vadd.f32 %v1264, %v1357
    %1359 = vmatprep.mubr.bf16.mxu0 0
    %1360 = vmatmul.mubr.bf16.gmra.mrb[0].mxu0 %v1220
    %v1361 = vpop.f32.mrb[0].mxu0
    %v1362 = vadd.f32 %v1260, %v1361
    %v1363 = vpop.f32.mrb[0].mxu0
    %v1364 = vadd.f32 %v1264, %v1363
    %v1365 = vpop.f32.mrb[0].mxu0
    %v1366 = vadd.f32 %v1260, %v1365
    %v1367 = vpop.f32.mrb[0].mxu0
    %v1368 = vadd.f32 %v1264, %v1367
    %1369 = vmatprep.mubr.bf16.mxu0 0
    %1370 = vmatmul.mubr.bf16.gmra.mrb[0].mxu0 %v1221
    %v1371 = vpop.f32.mrb[0].mxu0
    %v1372 = vadd.f32 %v1260, %v1371
    %v1373 = vpop.f32.mrb[0].mxu0
    %v1374 = vadd.f32 %v1264, %v1373
    %v1375 = vpop.f32.mrb[0].mxu0
    %v1376 = vadd.f32 %v1260, %v1375
    %v1377 = vpop.f32.mrb[0].mxu0
    %v1378 = vadd.f32 %v1264, %v1377
    %1379 = vmatprep.mubr.bf16.mxu0 0
    %1380 = vmatmul.mubr.bf16.gmra.mrb[0].mxu0 %v1222
    %v1381 = vpop.f32.mrb[0].mxu0
    %v1382 = vadd.f32 %v1260, %v1381
    %v1383 = vpop.f32.mrb[0].mxu0
    %v1384 = vadd.f32 %v1264, %v1383
    %v1385 = vpop.f32.mrb[0].mxu0
    %v1386 = vadd.f32 %v1260, %v1385
    %v1387 = vpop.f32.mrb[0].mxu0
    %v1388 = vadd.f32 %v1264, %v1387
    %1389 = vdwg.mxu0
    %1390 = vmatprep.subr.bf16.mxu0 %v1226
    %1391 = vmatpush1.bf16.msra.mxu0 %v1225
    %1392 = vmatprep.subr.bf16.mxu0 %v1230
    %1393 = vmatpush1.bf16.msra.mxu0 %v1229
    %1394 = vmatprep.subr.bf16.mxu0 %v1234
    %1395 = vmatpush1.bf16.msra.mxu0 %v1233
    %1396 = vmatprep.subr.bf16.mxu0 %v1238
    %1397 = vmatpush1.bf16.msra.mxu0 %v1237
    %1398 = vmatprep.subr.bf16.mxu0 %v1242
    %1399 = vmatpush1.bf16.msra.mxu0 %v1241
    %1400 = vmatprep.subr.bf16.mxu0 %v1246
    %1401 = vmatpush1.bf16.msra.mxu0 %v1245
    %1402 = vmatprep.subr.bf16.mxu0 %v1250
    %1403 = vmatpush1.bf16.msra.mxu0 %v1249
    %1404 = vmatprep.subr.bf16.mxu0 %v1254
    %1405 = vmatpush1.bf16.msra.mxu0 %v1253
    %1406 = vmatprep.subr.bf16.mxu0 0
    %1407 = vmatpush1.bf16.msra.mxu0 0
    %1408 = vmatprep.subr.bf16.mxu0 0
    %1409 = vmatpush1.bf16.msra.mxu0 0
    %1410 = vmatprep.subr.bf16.mxu0 0
    %1411 = vmatpush1.bf16.msra.mxu0 0
    %1412 = vmatprep.subr.bf16.mxu0 0
    %1413 = vmatpush1.bf16.msra.mxu0 0
    %1414 = vmatprep.subr.bf16.mxu0 0
    %1415 = vmatpush1.bf16.msra.mxu0 0
    %1416 = vmatprep.subr.bf16.mxu0 0
    %1417 = vmatpush1.bf16.msra.mxu0 0
    %1418 = vmatprep.subr.bf16.mxu0 0
    %1419 = vmatpush1.bf16.msra.mxu0 0
    %1420 = vmatprep.subr.bf16.mxu0 0
    %1421 = vmatpush1.bf16.msra.mxu0 0
    %1422 = vmatprep.mubr.bf16.mxu0 0
    %1423 = vmatmul.mubr.bf16.gmra.mrb[0].mxu0 %v1215
    %v1424 = vpop.f32.mrb[0].mxu0
    %v1425 = vadd.f32 %v1268, %v1424
    %v1426 = vpop.f32.mrb[0].mxu0
    %v1427 = vadd.f32 %v1272, %v1426
    %v1428 = vpop.f32.mrb[0].mxu0
    %v1429 = vadd.f32 %v1268, %v1428
    %v1430 = vpop.f32.mrb[0].mxu0
    %v1431 = vadd.f32 %v1272, %v1430
    %1432 = vmatprep.mubr.bf16.mxu0 0
    %1433 = vmatmul.mubr.bf16.gmra.mrb[0].mxu0 %v1216
    %v1434 = vpop.f32.mrb[0].mxu0
    %v1435 = vadd.f32 %v1268, %v1434
    %v1436 = vpop.f32.mrb[0].mxu0
    %v1437 = vadd.f32 %v1272, %v1436
    %v1438 = vpop.f32.mrb[0].mxu0
    %v1439 = vadd.f32 %v1268, %v1438
    %v1440 = vpop.f32.mrb[0].mxu0
    %v1441 = vadd.f32 %v1272, %v1440
    %1442 = vmatprep.mubr.bf16.mxu0 0
    %1443 = vmatmul.mubr.bf16.gmra.mrb[0].mxu0 %v1217
    %v1444 = vpop.f32.mrb[0].mxu0
    %v1445 = vadd.f32 %v1268, %v1444
    %v1446 = vpop.f32.mrb[0].mxu0
    %v1447 = vadd.f32 %v1272, %v1446
    %v1448 = vpop.f32.mrb[0].mxu0
    %v1449 = vadd.f32 %v1268, %v1448
    %v1450 = vpop.f32.mrb[0].mxu0
    %v1451 = vadd.f32 %v1272, %v1450
    %1452 = vmatprep.mubr.bf16.mxu0 0
    %1453 = vmatmul.mubr.bf16.gmra.mrb[0].mxu0 %v1218
    %v1454 = vpop.f32.mrb[0].mxu0
    %v1455 = vadd.f32 %v1268, %v1454
    %v1456 = vpop.f32.mrb[0].mxu0
    %v1457 = vadd.f32 %v1272, %v1456
    %v1458 = vpop.f32.mrb[0].mxu0
    %v1459 = vadd.f32 %v1268, %v1458
    %v1460 = vpop.f32.mrb[0].mxu0
    %v1461 = vadd.f32 %v1272, %v1460
    %1462 = vmatprep.mubr.bf16.mxu0 0
    %1463 = vmatmul.mubr.bf16.gmra.mrb[0].mxu0 %v1219
    %v1464 = vpop.f32.mrb[0].mxu0
    %v1465 = vadd.f32 %v1268, %v1464
    %v1466 = vpop.f32.mrb[0].mxu0
    %v1467 = vadd.f32 %v1272, %v1466
    %v1468 = vpop.f32.mrb[0].mxu0
    %v1469 = vadd.f32 %v1268, %v1468
    %v1470 = vpop.f32.mrb[0].mxu0
    %v1471 = vadd.f32 %v1272, %v1470
    %1472 = vmatprep.mubr.bf16.mxu0 0
    %1473 = vmatmul.mubr.bf16.gmra.mrb[0].mxu0 %v1220
    %v1474 = vpop.f32.mrb[0].mxu0
    %v1475 = vadd.f32 %v1268, %v1474
    %v1476 = vpop.f32.mrb[0].mxu0
    %v1477 = vadd.f32 %v1272, %v1476
    %v1478 = vpop.f32.mrb[0].mxu0
    %v1479 = vadd.f32 %v1268, %v1478
    %v1480 = vpop.f32.mrb[0].mxu0
    %v1481 = vadd.f32 %v1272, %v1480
    %1482 = vmatprep.mubr.bf16.mxu0 0
    %1483 = vmatmul.mubr.bf16.gmra.mrb[0].mxu0 %v1221
    %v1484 = vpop.f32.mrb[0].mxu0
    %v1485 = vadd.f32 %v1268, %v1484
    %v1486 = vpop.f32.mrb[0].mxu0
    %v1487 = vadd.f32 %v1272, %v1486
    %v1488 = vpop.f32.mrb[0].mxu0
    %v1489 = vadd.f32 %v1268, %v1488
    %v1490 = vpop.f32.mrb[0].mxu0
    %v1491 = vadd.f32 %v1272, %v1490
    %1492 = vmatprep.mubr.bf16.mxu0 0
    %1493 = vmatmul.mubr.bf16.gmra.mrb[0].mxu0 %v1222
    %v1494 = vpop.f32.mrb[0].mxu0
    %v1495 = vadd.f32 %v1268, %v1494
    %v1496 = vpop.f32.mrb[0].mxu0
    %v1497 = vadd.f32 %v1272, %v1496
    %v1498 = vpop.f32.mrb[0].mxu0
    %v1499 = vadd.f32 %v1268, %v1498
    %v1500 = vpop.f32.mrb[0].mxu0
    %v1501 = vadd.f32 %v1272, %v1500
    %1502 = vdwg.mxu0
    %v1503 = vld [vmem:[#allocation14] sm:$0xf]
    %v1505 = vlaneseq
    %v1506 = vshrl.u32 %v1505, 7
    %v1507 = vsub.s32 0, %v1506
    %v1508 = vrot.slane %v1503, %v1507
    %v1509 = vlaneseq
    %v1510 = vshrl.u32 %v1509, 7
    %v1511 = vsub.s32 1, %v1510
    %v1512 = vrot.slane %v1503, %v1511
    %v1513 = vlaneseq
    %v1514 = vshrl.u32 %v1513, 7
    %v1515 = vsub.s32 2, %v1514
    %v1516 = vrot.slane %v1503, %v1515
    %v1517 = vlaneseq
    %v1518 = vshrl.u32 %v1517, 7
    %v1519 = vsub.s32 3, %v1518
    %v1520 = vrot.slane %v1503, %v1519
    %v1525 = vmul.f32 %v1312, %v1508
    %v1526 = vmul.f32 %v1314, %v1512
    %v1527 = vmul.f32 %v1425, %v1516
    %v1528 = vmul.f32 %v1427, %v1520
    %v1529 = vmul.f32 %v1316, %v1508
    %v1530 = vmul.f32 %v1318, %v1512
    %v1531 = vmul.f32 %v1429, %v1516
    %v1532 = vmul.f32 %v1431, %v1520
    %v1533 = vmul.f32 %v1322, %v1508
    %v1534 = vmul.f32 %v1324, %v1512
    %v1535 = vmul.f32 %v1435, %v1516
    %v1536 = vmul.f32 %v1437, %v1520
    %v1537 = vmul.f32 %v1326, %v1508
    %v1538 = vmul.f32 %v1328, %v1512
    %v1539 = vmul.f32 %v1439, %v1516
    %v1540 = vmul.f32 %v1441, %v1520
    %v1541 = vmul.f32 %v1332, %v1508
    %v1542 = vmul.f32 %v1334, %v1512
    %v1543 = vmul.f32 %v1445, %v1516
    %v1544 = vmul.f32 %v1447, %v1520
    %v1545 = vmul.f32 %v1336, %v1508
    %v1546 = vmul.f32 %v1338, %v1512
    %v1547 = vmul.f32 %v1449, %v1516
    %v1548 = vmul.f32 %v1451, %v1520
    %v1549 = vmul.f32 %v1342, %v1508
    %v1550 = vmul.f32 %v1344, %v1512
    %v1551 = vmul.f32 %v1455, %v1516
    %v1552 = vmul.f32 %v1457, %v1520
    %v1553 = vmul.f32 %v1346, %v1508
    %v1554 = vmul.f32 %v1348, %v1512
    %v1555 = vmul.f32 %v1459, %v1516
    %v1556 = vmul.f32 %v1461, %v1520
    %v1557 = vmul.f32 %v1352, %v1508
    %v1558 = vmul.f32 %v1354, %v1512
    %v1559 = vmul.f32 %v1465, %v1516
    %v1560 = vmul.f32 %v1467, %v1520
    %v1561 = vmul.f32 %v1356, %v1508
    %v1562 = vmul.f32 %v1358, %v1512
    %v1563 = vmul.f32 %v1469, %v1516
    %v1564 = vmul.f32 %v1471, %v1520
    %v1565 = vmul.f32 %v1362, %v1508
    %v1566 = vmul.f32 %v1364, %v1512
    %v1567 = vmul.f32 %v1475, %v1516
    %v1568 = vmul.f32 %v1477, %v1520
    %v1569 = vmul.f32 %v1366, %v1508
    %v1570 = vmul.f32 %v1368, %v1512
    %v1571 = vmul.f32 %v1479, %v1516
    %v1572 = vmul.f32 %v1481, %v1520
    %v1573 = vmul.f32 %v1372, %v1508
    %v1574 = vmul.f32 %v1374, %v1512
    %v1575 = vmul.f32 %v1485, %v1516
    %v1576 = vmul.f32 %v1487, %v1520
    %v1577 = vmul.f32 %v1376, %v1508
    %v1578 = vmul.f32 %v1378, %v1512
    %v1579 = vmul.f32 %v1489, %v1516
    %v1580 = vmul.f32 %v1491, %v1520
    %v1581 = vmul.f32 %v1382, %v1508
    %v1582 = vmul.f32 %v1384, %v1512
    %v1583 = vmul.f32 %v1495, %v1516
    %v1584 = vmul.f32 %v1497, %v1520
    %v1585 = vmul.f32 %v1386, %v1508
    %v1586 = vmul.f32 %v1388, %v1512
    %v1587 = vmul.f32 %v1499, %v1516
    %v1588 = vmul.f32 %v1501, %v1520
    %v1589 = vld [vmem:[#allocation16] sm:$0xf]
    %v1591 = vlaneseq
    %v1592 = vshrl.u32 %v1591, 7
    %v1593 = vsub.s32 0, %v1592
    %v1594 = vrot.slane %v1589, %v1593
    %v1595 = vlaneseq
    %v1596 = vshrl.u32 %v1595, 7
    %v1597 = vsub.s32 1, %v1596
    %v1598 = vrot.slane %v1589, %v1597
    %v1599 = vlaneseq
    %v1600 = vshrl.u32 %v1599, 7
    %v1601 = vsub.s32 2, %v1600
    %v1602 = vrot.slane %v1589, %v1601
    %v1603 = vlaneseq
    %v1604 = vshrl.u32 %v1603, 7
    %v1605 = vsub.s32 3, %v1604
    %v1606 = vrot.slane %v1589, %v1605
    %v1611 = vadd.f32 %v1525, %v1594
    %v1612 = vadd.f32 %v1526, %v1598
    %v1613 = vadd.f32 %v1527, %v1602
    %v1614 = vadd.f32 %v1528, %v1606
    %v1615 = vadd.f32 %v1529, %v1594
    %v1616 = vadd.f32 %v1530, %v1598
    %v1617 = vadd.f32 %v1531, %v1602
    %v1618 = vadd.f32 %v1532, %v1606
    %v1619 = vadd.f32 %v1533, %v1594
    %v1620 = vadd.f32 %v1534, %v1598
    %v1621 = vadd.f32 %v1535, %v1602
    %v1622 = vadd.f32 %v1536, %v1606
    %v1623 = vadd.f32 %v1537, %v1594
    %v1624 = vadd.f32 %v1538, %v1598
    %v1625 = vadd.f32 %v1539, %v1602
    %v1626 = vadd.f32 %v1540, %v1606
    %v1627 = vadd.f32 %v1541, %v1594
    %v1628 = vadd.f32 %v1542, %v1598
    %v1629 = vadd.f32 %v1543, %v1602
    %v1630 = vadd.f32 %v1544, %v1606
    %v1631 = vadd.f32 %v1545, %v1594
    %v1632 = vadd.f32 %v1546, %v1598
    %v1633 = vadd.f32 %v1547, %v1602
    %v1634 = vadd.f32 %v1548, %v1606
    %v1635 = vadd.f32 %v1549, %v1594
    %v1636 = vadd.f32 %v1550, %v1598
    %v1637 = vadd.f32 %v1551, %v1602
    %v1638 = vadd.f32 %v1552, %v1606
    %v1639 = vadd.f32 %v1553, %v1594
    %v1640 = vadd.f32 %v1554, %v1598
    %v1641 = vadd.f32 %v1555, %v1602
    %v1642 = vadd.f32 %v1556, %v1606
    %v1643 = vadd.f32 %v1557, %v1594
    %v1644 = vadd.f32 %v1558, %v1598
    %v1645 = vadd.f32 %v1559, %v1602
    %v1646 = vadd.f32 %v1560, %v1606
    %v1647 = vadd.f32 %v1561, %v1594
    %v1648 = vadd.f32 %v1562, %v1598
    %v1649 = vadd.f32 %v1563, %v1602
    %v1650 = vadd.f32 %v1564, %v1606
    %v1651 = vadd.f32 %v1565, %v1594
    %v1652 = vadd.f32 %v1566, %v1598
    %v1653 = vadd.f32 %v1567, %v1602
    %v1654 = vadd.f32 %v1568, %v1606
    %v1655 = vadd.f32 %v1569, %v1594
    %v1656 = vadd.f32 %v1570, %v1598
    %v1657 = vadd.f32 %v1571, %v1602
    %v1658 = vadd.f32 %v1572, %v1606
    %v1659 = vadd.f32 %v1573, %v1594
    %v1660 = vadd.f32 %v1574, %v1598
    %v1661 = vadd.f32 %v1575, %v1602
    %v1662 = vadd.f32 %v1576, %v1606
    %v1663 = vadd.f32 %v1577, %v1594
    %v1664 = vadd.f32 %v1578, %v1598
    %v1665 = vadd.f32 %v1579, %v1602
    %v1666 = vadd.f32 %v1580, %v1606
    %v1667 = vadd.f32 %v1581, %v1594
    %v1668 = vadd.f32 %v1582, %v1598
    %v1669 = vadd.f32 %v1583, %v1602
    %v1670 = vadd.f32 %v1584, %v1606
    %v1671 = vadd.f32 %v1585, %v1594
    %v1672 = vadd.f32 %v1586, %v1598
    %v1673 = vadd.f32 %v1587, %v1602
    %v1674 = vadd.f32 %v1588, %v1606
    %v1675 = vmax.f32 %v1611, 0.0
    %v1676 = vmax.f32 %v1612, 0.0
    %v1677 = vmax.f32 %v1613, 0.0
    %v1678 = vmax.f32 %v1614, 0.0
    %v1679 = vmax.f32 %v1615, 0.0
    %v1680 = vmax.f32 %v1616, 0.0
    %v1681 = vmax.f32 %v1617, 0.0
    %v1682 = vmax.f32 %v1618, 0.0
    %v1683 = vmax.f32 %v1619, 0.0
    %v1684 = vmax.f32 %v1620, 0.0
    %v1685 = vmax.f32 %v1621, 0.0
    %v1686 = vmax.f32 %v1622, 0.0
    %v1687 = vmax.f32 %v1623, 0.0
    %v1688 = vmax.f32 %v1624, 0.0
    %v1689 = vmax.f32 %v1625, 0.0
    %v1690 = vmax.f32 %v1626, 0.0
    %v1691 = vmax.f32 %v1627, 0.0
    %v1692 = vmax.f32 %v1628, 0.0
    %v1693 = vmax.f32 %v1629, 0.0
    %v1694 = vmax.f32 %v1630, 0.0
    %v1695 = vmax.f32 %v1631, 0.0
    %v1696 = vmax.f32 %v1632, 0.0
    %v1697 = vmax.f32 %v1633, 0.0
    %v1698 = vmax.f32 %v1634, 0.0
    %v1699 = vmax.f32 %v1635, 0.0
    %v1700 = vmax.f32 %v1636, 0.0
    %v1701 = vmax.f32 %v1637, 0.0
    %v1702 = vmax.f32 %v1638, 0.0
    %v1703 = vmax.f32 %v1639, 0.0
    %v1704 = vmax.f32 %v1640, 0.0
    %v1705 = vmax.f32 %v1641, 0.0
    %v1706 = vmax.f32 %v1642, 0.0
    %v1707 = vmax.f32 %v1643, 0.0
    %v1708 = vmax.f32 %v1644, 0.0
    %v1709 = vmax.f32 %v1645, 0.0
    %v1710 = vmax.f32 %v1646, 0.0
    %v1711 = vmax.f32 %v1647, 0.0
    %v1712 = vmax.f32 %v1648, 0.0
    %v1713 = vmax.f32 %v1649, 0.0
    %v1714 = vmax.f32 %v1650, 0.0
    %v1715 = vmax.f32 %v1651, 0.0
    %v1716 = vmax.f32 %v1652, 0.0
    %v1717 = vmax.f32 %v1653, 0.0
    %v1718 = vmax.f32 %v1654, 0.0
    %v1719 = vmax.f32 %v1655, 0.0
    %v1720 = vmax.f32 %v1656, 0.0
    %v1721 = vmax.f32 %v1657, 0.0
    %v1722 = vmax.f32 %v1658, 0.0
    %v1723 = vmax.f32 %v1659, 0.0
    %v1724 = vmax.f32 %v1660, 0.0
    %v1725 = vmax.f32 %v1661, 0.0
    %v1726 = vmax.f32 %v1662, 0.0
    %v1727 = vmax.f32 %v1663, 0.0
    %v1728 = vmax.f32 %v1664, 0.0
    %v1729 = vmax.f32 %v1665, 0.0
    %v1730 = vmax.f32 %v1666, 0.0
    %v1731 = vmax.f32 %v1667, 0.0
    %v1732 = vmax.f32 %v1668, 0.0
    %v1733 = vmax.f32 %v1669, 0.0
    %v1734 = vmax.f32 %v1670, 0.0
    %v1735 = vmax.f32 %v1671, 0.0
    %v1736 = vmax.f32 %v1672, 0.0
    %v1737 = vmax.f32 %v1673, 0.0
    %v1738 = vmax.f32 %v1674, 0.0
    %v1739 = vpack.c.bf16 %v1679, %v1675
    %v1740 = vpack.c.bf16 %v1680, %v1676
    %v1741 = vpack.c.bf16 %v1681, %v1677
    %v1742 = vpack.c.bf16 %v1682, %v1678
    %v1743 = vpack.c.bf16 %v1687, %v1683
    %v1744 = vpack.c.bf16 %v1688, %v1684
    %v1745 = vpack.c.bf16 %v1689, %v1685
    %v1746 = vpack.c.bf16 %v1690, %v1686
    %v1747 = vpack.c.bf16 %v1695, %v1691
    %v1748 = vpack.c.bf16 %v1696, %v1692
    %v1749 = vpack.c.bf16 %v1697, %v1693
    %v1750 = vpack.c.bf16 %v1698, %v1694
    %v1751 = vpack.c.bf16 %v1703, %v1699
    %v1752 = vpack.c.bf16 %v1704, %v1700
    %v1753 = vpack.c.bf16 %v1705, %v1701
    %v1754 = vpack.c.bf16 %v1706, %v1702
    %v1755 = vpack.c.bf16 %v1711, %v1707
    %v1756 = vpack.c.bf16 %v1712, %v1708
    %v1757 = vpack.c.bf16 %v1713, %v1709
    %v1758 = vpack.c.bf16 %v1714, %v1710
    %v1759 = vpack.c.bf16 %v1719, %v1715
    %v1760 = vpack.c.bf16 %v1720, %v1716
    %v1761 = vpack.c.bf16 %v1721, %v1717
    %v1762 = vpack.c.bf16 %v1722, %v1718
    %v1763 = vpack.c.bf16 %v1727, %v1723
    %v1764 = vpack.c.bf16 %v1728, %v1724
    %v1765 = vpack.c.bf16 %v1729, %v1725
    %v1766 = vpack.c.bf16 %v1730, %v1726
    %v1767 = vpack.c.bf16 %v1735, %v1731
    %v1768 = vpack.c.bf16 %v1736, %v1732
    %v1769 = vpack.c.bf16 %v1737, %v1733
    %v1770 = vpack.c.bf16 %v1738, %v1734
    %v1771 = vld [vmem:[#allocation17] sm:$0xff]
    %v1772 = vld [vmem:[#allocation17 + $0x8] sm:$0xff]
    %v1773 = vld [vmem:[#allocation17 + $0x10] sm:$0xff]
    %v1774 = vld [vmem:[#allocation17 + $0x18] sm:$0xff]
    %v1775 = vld [vmem:[#allocation17 + $0x20] sm:$0xff]
    %v1776 = vld [vmem:[#allocation17 + $0x28] sm:$0xff]
    %v1777 = vld [vmem:[#allocation17 + $0x30] sm:$0xff]
    %v1778 = vld [vmem:[#allocation17 + $0x38] sm:$0xff]
    %v1779 = vld [vmem:[#allocation17 + $0x40] sm:$0xff]
    %v1780 = vld [vmem:[#allocation17 + $0x48] sm:$0xff]
    %v1781 = vld [vmem:[#allocation17 + $0x50] sm:$0xff]
    %v1782 = vld [vmem:[#allocation17 + $0x58] sm:$0xff]
    %v1783 = vld [vmem:[#allocation17 + $0x60] sm:$0xff]
    %v1784 = vld [vmem:[#allocation17 + $0x68] sm:$0xff]
    %v1785 = vld [vmem:[#allocation17 + $0x70] sm:$0xff]
    %v1786 = vld [vmem:[#allocation17 + $0x78] sm:$0xff]
    %v1787 = vld [vmem:[#allocation17 + $0x80] sm:$0xff]
    %v1788 = vld [vmem:[#allocation17 + $0x88] sm:$0xff]
    %v1789 = vld [vmem:[#allocation17 + $0x90] sm:$0xff]
    %v1790 = vld [vmem:[#allocation17 + $0x98] sm:$0xff]
    %v1791 = vld [vmem:[#allocation17 + $0xa0] sm:$0xff]
    %v1792 = vld [vmem:[#allocation17 + $0xa8] sm:$0xff]
    %v1793 = vld [vmem:[#allocation17 + $0xb0] sm:$0xff]
    %v1794 = vld [vmem:[#allocation17 + $0xb8] sm:$0xff]
    %v1795 = vld [vmem:[#allocation17 + $0xc0] sm:$0xff]
    %v1796 = vld [vmem:[#allocation17 + $0xc8] sm:$0xff]
    %v1797 = vld [vmem:[#allocation17 + $0xd0] sm:$0xff]
    %v1798 = vld [vmem:[#allocation17 + $0xd8] sm:$0xff]
    %v1799 = vld [vmem:[#allocation17 + $0xe0] sm:$0xff]
    %v1800 = vld [vmem:[#allocation17 + $0xe8] sm:$0xff]
    %v1801 = vld [vmem:[#allocation17 + $0xf0] sm:$0xff]
    %v1802 = vld [vmem:[#allocation17 + $0xf8] sm:$0xff]
    %v1803 = vld [vmem:[#allocation17 + $0x100] sm:$0xff]
    %v1804 = vld [vmem:[#allocation17 + $0x108] sm:$0xff]
    %v1805 = vld [vmem:[#allocation17 + $0x110] sm:$0xff]
    %v1806 = vld [vmem:[#allocation17 + $0x118] sm:$0xff]
    %v1807 = vld [vmem:[#allocation17 + $0x120] sm:$0xff]
    %v1808 = vld [vmem:[#allocation17 + $0x128] sm:$0xff]
    %v1809 = vld [vmem:[#allocation17 + $0x130] sm:$0xff]
    %v1810 = vld [vmem:[#allocation17 + $0x138] sm:$0xff]
    %v1811 = vld [vmem:[#allocation17 + $0x140] sm:$0xff]
    %v1812 = vld [vmem:[#allocation17 + $0x148] sm:$0xff]
    %v1813 = vld [vmem:[#allocation17 + $0x150] sm:$0xff]
    %v1814 = vld [vmem:[#allocation17 + $0x158] sm:$0xff]
    %v1815 = vld [vmem:[#allocation17 + $0x160] sm:$0xff]
    %v1816 = vld [vmem:[#allocation17 + $0x168] sm:$0xff]
    %v1817 = vld [vmem:[#allocation17 + $0x170] sm:$0xff]
    %v1818 = vld [vmem:[#allocation17 + $0x178] sm:$0xff]
    %v1819 = vld [vmem:[#allocation17 + $0x180] sm:$0xff]
    %v1820 = vld [vmem:[#allocation17 + $0x188] sm:$0xff]
    %v1821 = vld [vmem:[#allocation17 + $0x190] sm:$0xff]
    %v1822 = vld [vmem:[#allocation17 + $0x198] sm:$0xff]
    %v1823 = vld [vmem:[#allocation17 + $0x1a0] sm:$0xff]
    %v1824 = vld [vmem:[#allocation17 + $0x1a8] sm:$0xff]
    %v1825 = vld [vmem:[#allocation17 + $0x1b0] sm:$0xff]
    %v1826 = vld [vmem:[#allocation17 + $0x1b8] sm:$0xff]
    %v1827 = vld [vmem:[#allocation17 + $0x1c0] sm:$0xff]
    %v1828 = vld [vmem:[#allocation17 + $0x1c8] sm:$0xff]
    %v1829 = vld [vmem:[#allocation17 + $0x1d0] sm:$0xff]
    %v1830 = vld [vmem:[#allocation17 + $0x1d8] sm:$0xff]
    %v1831 = vld [vmem:[#allocation17 + $0x1e0] sm:$0xff]
    %v1832 = vld [vmem:[#allocation17 + $0x1e8] sm:$0xff]
    %v1833 = vld [vmem:[#allocation17 + $0x1f0] sm:$0xff]
    %v1834 = vld [vmem:[#allocation17 + $0x1f8] sm:$0xff]
    %v1835 = vld [vmem:[#allocation17 + $0x200] sm:$0xff]
    %v1836 = vld [vmem:[#allocation17 + $0x208] sm:$0xff]
    %v1837 = vld [vmem:[#allocation17 + $0x210] sm:$0xff]
    %v1838 = vld [vmem:[#allocation17 + $0x218] sm:$0xff]
    %v1839 = vld [vmem:[#allocation17 + $0x220] sm:$0xff]
    %v1840 = vld [vmem:[#allocation17 + $0x228] sm:$0xff]
    %v1841 = vld [vmem:[#allocation17 + $0x230] sm:$0xff]
    %v1842 = vld [vmem:[#allocation17 + $0x238] sm:$0xff]
    %v1843 = vld [vmem:[#allocation17 + $0x240] sm:$0xff]
    %v1844 = vld [vmem:[#allocation17 + $0x248] sm:$0xff]
    %v1845 = vld [vmem:[#allocation17 + $0x250] sm:$0xff]
    %v1846 = vld [vmem:[#allocation17 + $0x258] sm:$0xff]
    %v1847 = vld [vmem:[#allocation17 + $0x260] sm:$0xff]
    %v1848 = vld [vmem:[#allocation17 + $0x268] sm:$0xff]
    %v1849 = vld [vmem:[#allocation17 + $0x270] sm:$0xff]
    %v1850 = vld [vmem:[#allocation17 + $0x278] sm:$0xff]
    %v1851 = vld [vmem:[#allocation17 + $0x280] sm:$0xff]
    %v1852 = vld [vmem:[#allocation17 + $0x288] sm:$0xff]
    %v1853 = vld [vmem:[#allocation17 + $0x290] sm:$0xff]
    %v1854 = vld [vmem:[#allocation17 + $0x298] sm:$0xff]
    %v1855 = vld [vmem:[#allocation17 + $0x2a0] sm:$0xff]
    %v1856 = vld [vmem:[#allocation17 + $0x2a8] sm:$0xff]
    %v1857 = vld [vmem:[#allocation17 + $0x2b0] sm:$0xff]
    %v1858 = vld [vmem:[#allocation17 + $0x2b8] sm:$0xff]
    %v1859 = vld [vmem:[#allocation17 + $0x2c0] sm:$0xff]
    %v1860 = vld [vmem:[#allocation17 + $0x2c8] sm:$0xff]
    %v1861 = vld [vmem:[#allocation17 + $0x2d0] sm:$0xff]
    %v1862 = vld [vmem:[#allocation17 + $0x2d8] sm:$0xff]
    %v1863 = vld [vmem:[#allocation17 + $0x2e0] sm:$0xff]
    %v1864 = vld [vmem:[#allocation17 + $0x2e8] sm:$0xff]
    %v1865 = vld [vmem:[#allocation17 + $0x2f0] sm:$0xff]
    %v1866 = vld [vmem:[#allocation17 + $0x2f8] sm:$0xff]
    %v1867 = vld [vmem:[#allocation17 + $0x300] sm:$0xff]
    %v1868 = vld [vmem:[#allocation17 + $0x308] sm:$0xff]
    %v1869 = vld [vmem:[#allocation17 + $0x310] sm:$0xff]
    %v1870 = vld [vmem:[#allocation17 + $0x318] sm:$0xff]
    %v1871 = vld [vmem:[#allocation17 + $0x320] sm:$0xff]
    %v1872 = vld [vmem:[#allocation17 + $0x328] sm:$0xff]
    %v1873 = vld [vmem:[#allocation17 + $0x330] sm:$0xff]
    %v1874 = vld [vmem:[#allocation17 + $0x338] sm:$0xff]
    %v1875 = vld [vmem:[#allocation17 + $0x340] sm:$0xff]
    %v1876 = vld [vmem:[#allocation17 + $0x348] sm:$0xff]
    %v1877 = vld [vmem:[#allocation17 + $0x350] sm:$0xff]
    %v1878 = vld [vmem:[#allocation17 + $0x358] sm:$0xff]
    %v1879 = vld [vmem:[#allocation17 + $0x360] sm:$0xff]
    %v1880 = vld [vmem:[#allocation17 + $0x368] sm:$0xff]
    %v1881 = vld [vmem:[#allocation17 + $0x370] sm:$0xff]
    %v1882 = vld [vmem:[#allocation17 + $0x378] sm:$0xff]
    %v1883 = vld [vmem:[#allocation17 + $0x380] sm:$0xff]
    %v1884 = vld [vmem:[#allocation17 + $0x388] sm:$0xff]
    %v1885 = vld [vmem:[#allocation17 + $0x390] sm:$0xff]
    %v1886 = vld [vmem:[#allocation17 + $0x398] sm:$0xff]
    %v1887 = vld [vmem:[#allocation17 + $0x3a0] sm:$0xff]
    %v1888 = vld [vmem:[#allocation17 + $0x3a8] sm:$0xff]
    %v1889 = vld [vmem:[#allocation17 + $0x3b0] sm:$0xff]
    %v1890 = vld [vmem:[#allocation17 + $0x3b8] sm:$0xff]
    %v1891 = vld [vmem:[#allocation17 + $0x3c0] sm:$0xff]
    %v1892 = vld [vmem:[#allocation17 + $0x3c8] sm:$0xff]
    %v1893 = vld [vmem:[#allocation17 + $0x3d0] sm:$0xff]
    %v1894 = vld [vmem:[#allocation17 + $0x3d8] sm:$0xff]
    %v1895 = vld [vmem:[#allocation17 + $0x3e0] sm:$0xff]
    %v1896 = vld [vmem:[#allocation17 + $0x3e8] sm:$0xff]
    %v1897 = vld [vmem:[#allocation17 + $0x3f0] sm:$0xff]
    %v1898 = vld [vmem:[#allocation17 + $0x3f8] sm:$0xff]
    %v2027 = vunpack.c.l.b16 %v1771
    %v2028 = vunpack.c.h.b16 %v1771
    %v2029 = vunpack.c.l.b16 %v1772
    %v2030 = vunpack.c.h.b16 %v1772
    %v2031 = vunpack.c.l.b16 %v1773
    %v2032 = vunpack.c.h.b16 %v1773
    %v2033 = vunpack.c.l.b16 %v1774
    %v2034 = vunpack.c.h.b16 %v1774
    %v2035 = vunpack.c.l.b16 %v1775
    %v2036 = vunpack.c.h.b16 %v1775
    %v2037 = vunpack.c.l.b16 %v1776
    %v2038 = vunpack.c.h.b16 %v1776
    %v2039 = vunpack.c.l.b16 %v1777
    %v2040 = vunpack.c.h.b16 %v1777
    %v2041 = vunpack.c.l.b16 %v1778
    %v2042 = vunpack.c.h.b16 %v1778
    %v2043 = vunpack.c.l.b16 %v1779
    %v2044 = vunpack.c.h.b16 %v1779
    %v2045 = vunpack.c.l.b16 %v1780
    %v2046 = vunpack.c.h.b16 %v1780
    %v2047 = vunpack.c.l.b16 %v1781
    %v2048 = vunpack.c.h.b16 %v1781
    %v2049 = vunpack.c.l.b16 %v1782
    %v2050 = vunpack.c.h.b16 %v1782
    %v2051 = vunpack.c.l.b16 %v1783
    %v2052 = vunpack.c.h.b16 %v1783
    %v2053 = vunpack.c.l.b16 %v1784
    %v2054 = vunpack.c.h.b16 %v1784
    %v2055 = vunpack.c.l.b16 %v1785
    %v2056 = vunpack.c.h.b16 %v1785
    %v2057 = vunpack.c.l.b16 %v1786
    %v2058 = vunpack.c.h.b16 %v1786
    %v2059 = vunpack.c.l.b16 %v1787
    %v2060 = vunpack.c.h.b16 %v1787
    %v2061 = vunpack.c.l.b16 %v1788
    %v2062 = vunpack.c.h.b16 %v1788
    %v2063 = vunpack.c.l.b16 %v1789
    %v2064 = vunpack.c.h.b16 %v1789
    %v2065 = vunpack.c.l.b16 %v1790
    %v2066 = vunpack.c.h.b16 %v1790
    %v2067 = vunpack.c.l.b16 %v1791
    %v2068 = vunpack.c.h.b16 %v1791
    %v2069 = vunpack.c.l.b16 %v1792
    %v2070 = vunpack.c.h.b16 %v1792
    %v2071 = vunpack.c.l.b16 %v1793
    %v2072 = vunpack.c.h.b16 %v1793
    %v2073 = vunpack.c.l.b16 %v1794
    %v2074 = vunpack.c.h.b16 %v1794
    %v2075 = vunpack.c.l.b16 %v1795
    %v2076 = vunpack.c.h.b16 %v1795
    %v2077 = vunpack.c.l.b16 %v1796
    %v2078 = vunpack.c.h.b16 %v1796
    %v2079 = vunpack.c.l.b16 %v1797
    %v2080 = vunpack.c.h.b16 %v1797
    %v2081 = vunpack.c.l.b16 %v1798
    %v2082 = vunpack.c.h.b16 %v1798
    %v2083 = vunpack.c.l.b16 %v1799
    %v2084 = vunpack.c.h.b16 %v1799
    %v2085 = vunpack.c.l.b16 %v1800
    %v2086 = vunpack.c.h.b16 %v1800
    %v2087 = vunpack.c.l.b16 %v1801
    %v2088 = vunpack.c.h.b16 %v1801
    %v2089 = vunpack.c.l.b16 %v1802
    %v2090 = vunpack.c.h.b16 %v1802
    %v2091 = vunpack.c.l.b16 %v1803
    %v2092 = vunpack.c.h.b16 %v1803
    %v2093 = vunpack.c.l.b16 %v1804
    %v2094 = vunpack.c.h.b16 %v1804
    %v2095 = vunpack.c.l.b16 %v1805
    %v2096 = vunpack.c.h.b16 %v1805
    %v2097 = vunpack.c.l.b16 %v1806
    %v2098 = vunpack.c.h.b16 %v1806
    %v2099 = vunpack.c.l.b16 %v1807
    %v2100 = vunpack.c.h.b16 %v1807
    %v2101 = vunpack.c.l.b16 %v1808
    %v2102 = vunpack.c.h.b16 %v1808
    %v2103 = vunpack.c.l.b16 %v1809
    %v2104 = vunpack.c.h.b16 %v1809
    %v2105 = vunpack.c.l.b16 %v1810
    %v2106 = vunpack.c.h.b16 %v1810
    %v2107 = vunpack.c.l.b16 %v1811
    %v2108 = vunpack.c.h.b16 %v1811
    %v2109 = vunpack.c.l.b16 %v1812
    %v2110 = vunpack.c.h.b16 %v1812
    %v2111 = vunpack.c.l.b16 %v1813
    %v2112 = vunpack.c.h.b16 %v1813
    %v2113 = vunpack.c.l.b16 %v1814
    %v2114 = vunpack.c.h.b16 %v1814
    %v2115 = vunpack.c.l.b16 %v1815
    %v2116 = vunpack.c.h.b16 %v1815
    %v2117 = vunpack.c.l.b16 %v1816
    %v2118 = vunpack.c.h.b16 %v1816
    %v2119 = vunpack.c.l.b16 %v1817
    %v2120 = vunpack.c.h.b16 %v1817
    %v2121 = vunpack.c.l.b16 %v1818
    %v2122 = vunpack.c.h.b16 %v1818
    %v2123 = vunpack.c.l.b16 %v1819
    %v2124 = vunpack.c.h.b16 %v1819
    %v2125 = vunpack.c.l.b16 %v1820
    %v2126 = vunpack.c.h.b16 %v1820
    %v2127 = vunpack.c.l.b16 %v1821
    %v2128 = vunpack.c.h.b16 %v1821
    %v2129 = vunpack.c.l.b16 %v1822
    %v2130 = vunpack.c.h.b16 %v1822
    %v2131 = vunpack.c.l.b16 %v1823
    %v2132 = vunpack.c.h.b16 %v1823
    %v2133 = vunpack.c.l.b16 %v1824
    %v2134 = vunpack.c.h.b16 %v1824
    %v2135 = vunpack.c.l.b16 %v1825
    %v2136 = vunpack.c.h.b16 %v1825
    %v2137 = vunpack.c.l.b16 %v1826
    %v2138 = vunpack.c.h.b16 %v1826
    %v2139 = vunpack.c.l.b16 %v1827
    %v2140 = vunpack.c.h.b16 %v1827
    %v2141 = vunpack.c.l.b16 %v1828
    %v2142 = vunpack.c.h.b16 %v1828
    %v2143 = vunpack.c.l.b16 %v1829
    %v2144 = vunpack.c.h.b16 %v1829
    %v2145 = vunpack.c.l.b16 %v1830
    %v2146 = vunpack.c.h.b16 %v1830
    %v2147 = vunpack.c.l.b16 %v1831
    %v2148 = vunpack.c.h.b16 %v1831
    %v2149 = vunpack.c.l.b16 %v1832
    %v2150 = vunpack.c.h.b16 %v1832
    %v2151 = vunpack.c.l.b16 %v1833
    %v2152 = vunpack.c.h.b16 %v1833
    %v2153 = vunpack.c.l.b16 %v1834
    %v2154 = vunpack.c.h.b16 %v1834
    %v2155 = vunpack.c.l.b16 %v1835
    %v2156 = vunpack.c.h.b16 %v1835
    %v2157 = vunpack.c.l.b16 %v1836
    %v2158 = vunpack.c.h.b16 %v1836
    %v2159 = vunpack.c.l.b16 %v1837
    %v2160 = vunpack.c.h.b16 %v1837
    %v2161 = vunpack.c.l.b16 %v1838
    %v2162 = vunpack.c.h.b16 %v1838
    %v2163 = vunpack.c.l.b16 %v1839
    %v2164 = vunpack.c.h.b16 %v1839
    %v2165 = vunpack.c.l.b16 %v1840
    %v2166 = vunpack.c.h.b16 %v1840
    %v2167 = vunpack.c.l.b16 %v1841
    %v2168 = vunpack.c.h.b16 %v1841
    %v2169 = vunpack.c.l.b16 %v1842
    %v2170 = vunpack.c.h.b16 %v1842
    %v2171 = vunpack.c.l.b16 %v1843
    %v2172 = vunpack.c.h.b16 %v1843
    %v2173 = vunpack.c.l.b16 %v1844
    %v2174 = vunpack.c.h.b16 %v1844
    %v2175 = vunpack.c.l.b16 %v1845
    %v2176 = vunpack.c.h.b16 %v1845
    %v2177 = vunpack.c.l.b16 %v1846
    %v2178 = vunpack.c.h.b16 %v1846
    %v2179 = vunpack.c.l.b16 %v1847
    %v2180 = vunpack.c.h.b16 %v1847
    %v2181 = vunpack.c.l.b16 %v1848
    %v2182 = vunpack.c.h.b16 %v1848
    %v2183 = vunpack.c.l.b16 %v1849
    %v2184 = vunpack.c.h.b16 %v1849
    %v2185 = vunpack.c.l.b16 %v1850
    %v2186 = vunpack.c.h.b16 %v1850
    %v2187 = vunpack.c.l.b16 %v1851
    %v2188 = vunpack.c.h.b16 %v1851
    %v2189 = vunpack.c.l.b16 %v1852
    %v2190 = vunpack.c.h.b16 %v1852
    %v2191 = vunpack.c.l.b16 %v1853
    %v2192 = vunpack.c.h.b16 %v1853
    %v2193 = vunpack.c.l.b16 %v1854
    %v2194 = vunpack.c.h.b16 %v1854
    %v2195 = vunpack.c.l.b16 %v1855
    %v2196 = vunpack.c.h.b16 %v1855
    %v2197 = vunpack.c.l.b16 %v1856
    %v2198 = vunpack.c.h.b16 %v1856
    %v2199 = vunpack.c.l.b16 %v1857
    %v2200 = vunpack.c.h.b16 %v1857
    %v2201 = vunpack.c.l.b16 %v1858
    %v2202 = vunpack.c.h.b16 %v1858
    %v2203 = vunpack.c.l.b16 %v1859
    %v2204 = vunpack.c.h.b16 %v1859
    %v2205 = vunpack.c.l.b16 %v1860
    %v2206 = vunpack.c.h.b16 %v1860
    %v2207 = vunpack.c.l.b16 %v1861
    %v2208 = vunpack.c.h.b16 %v1861
    %v2209 = vunpack.c.l.b16 %v1862
    %v2210 = vunpack.c.h.b16 %v1862
    %v2211 = vunpack.c.l.b16 %v1863
    %v2212 = vunpack.c.h.b16 %v1863
    %v2213 = vunpack.c.l.b16 %v1864
    %v2214 = vunpack.c.h.b16 %v1864
    %v2215 = vunpack.c.l.b16 %v1865
    %v2216 = vunpack.c.h.b16 %v1865
    %v2217 = vunpack.c.l.b16 %v1866
    %v2218 = vunpack.c.h.b16 %v1866
    %v2219 = vunpack.c.l.b16 %v1867
    %v2220 = vunpack.c.h.b16 %v1867
    %v2221 = vunpack.c.l.b16 %v1868
    %v2222 = vunpack.c.h.b16 %v1868
    %v2223 = vunpack.c.l.b16 %v1869
    %v2224 = vunpack.c.h.b16 %v1869
    %v2225 = vunpack.c.l.b16 %v1870
    %v2226 = vunpack.c.h.b16 %v1870
    %v2227 = vunpack.c.l.b16 %v1871
    %v2228 = vunpack.c.h.b16 %v1871
    %v2229 = vunpack.c.l.b16 %v1872
    %v2230 = vunpack.c.h.b16 %v1872
    %v2231 = vunpack.c.l.b16 %v1873
    %v2232 = vunpack.c.h.b16 %v1873
    %v2233 = vunpack.c.l.b16 %v1874
    %v2234 = vunpack.c.h.b16 %v1874
    %v2235 = vunpack.c.l.b16 %v1875
    %v2236 = vunpack.c.h.b16 %v1875
    %v2237 = vunpack.c.l.b16 %v1876
    %v2238 = vunpack.c.h.b16 %v1876
    %v2239 = vunpack.c.l.b16 %v1877
    %v2240 = vunpack.c.h.b16 %v1877
    %v2241 = vunpack.c.l.b16 %v1878
    %v2242 = vunpack.c.h.b16 %v1878
    %v2243 = vunpack.c.l.b16 %v1879
    %v2244 = vunpack.c.h.b16 %v1879
    %v2245 = vunpack.c.l.b16 %v1880
    %v2246 = vunpack.c.h.b16 %v1880
    %v2247 = vunpack.c.l.b16 %v1881
    %v2248 = vunpack.c.h.b16 %v1881
    %v2249 = vunpack.c.l.b16 %v1882
    %v2250 = vunpack.c.h.b16 %v1882
    %v2251 = vunpack.c.l.b16 %v1883
    %v2252 = vunpack.c.h.b16 %v1883
    %v2253 = vunpack.c.l.b16 %v1884
    %v2254 = vunpack.c.h.b16 %v1884
    %v2255 = vunpack.c.l.b16 %v1885
    %v2256 = vunpack.c.h.b16 %v1885
    %v2257 = vunpack.c.l.b16 %v1886
    %v2258 = vunpack.c.h.b16 %v1886
    %v2259 = vunpack.c.l.b16 %v1887
    %v2260 = vunpack.c.h.b16 %v1887
    %v2261 = vunpack.c.l.b16 %v1888
    %v2262 = vunpack.c.h.b16 %v1888
    %v2263 = vunpack.c.l.b16 %v1889
    %v2264 = vunpack.c.h.b16 %v1889
    %v2265 = vunpack.c.l.b16 %v1890
    %v2266 = vunpack.c.h.b16 %v1890
    %v2267 = vunpack.c.l.b16 %v1891
    %v2268 = vunpack.c.h.b16 %v1891
    %v2269 = vunpack.c.l.b16 %v1892
    %v2270 = vunpack.c.h.b16 %v1892
    %v2271 = vunpack.c.l.b16 %v1893
    %v2272 = vunpack.c.h.b16 %v1893
    %v2273 = vunpack.c.l.b16 %v1894
    %v2274 = vunpack.c.h.b16 %v1894
    %v2275 = vunpack.c.l.b16 %v1895
    %v2276 = vunpack.c.h.b16 %v1895
    %v2277 = vunpack.c.l.b16 %v1896
    %v2278 = vunpack.c.h.b16 %v1896
    %v2279 = vunpack.c.l.b16 %v1897
    %v2280 = vunpack.c.h.b16 %v1897
    %v2281 = vunpack.c.l.b16 %v1898
    %v2282 = vunpack.c.h.b16 %v1898
    %v2283 = vpack.c.b16 %v2031, %v2027
    %v2284 = vpack.c.b16 %v2032, %v2028
    %v2285 = vpack.c.b16 %v2033, %v2029
    %v2286 = vpack.c.b16 %v2034, %v2030
    %v2287 = vpack.c.b16 %v2039, %v2035
    %v2288 = vpack.c.b16 %v2040, %v2036
    %v2289 = vpack.c.b16 %v2041, %v2037
    %v2290 = vpack.c.b16 %v2042, %v2038
    %v2291 = vpack.c.b16 %v2047, %v2043
    %v2292 = vpack.c.b16 %v2048, %v2044
    %v2293 = vpack.c.b16 %v2049, %v2045
    %v2294 = vpack.c.b16 %v2050, %v2046
    %v2295 = vpack.c.b16 %v2055, %v2051
    %v2296 = vpack.c.b16 %v2056, %v2052
    %v2297 = vpack.c.b16 %v2057, %v2053
    %v2298 = vpack.c.b16 %v2058, %v2054
    %v2299 = vpack.c.b16 %v2063, %v2059
    %v2300 = vpack.c.b16 %v2064, %v2060
    %v2301 = vpack.c.b16 %v2065, %v2061
    %v2302 = vpack.c.b16 %v2066, %v2062
    %v2303 = vpack.c.b16 %v2071, %v2067
    %v2304 = vpack.c.b16 %v2072, %v2068
    %v2305 = vpack.c.b16 %v2073, %v2069
    %v2306 = vpack.c.b16 %v2074, %v2070
    %v2307 = vpack.c.b16 %v2079, %v2075
    %v2308 = vpack.c.b16 %v2080, %v2076
    %v2309 = vpack.c.b16 %v2081, %v2077
    %v2310 = vpack.c.b16 %v2082, %v2078
    %v2311 = vpack.c.b16 %v2087, %v2083
    %v2312 = vpack.c.b16 %v2088, %v2084
    %v2313 = vpack.c.b16 %v2089, %v2085
    %v2314 = vpack.c.b16 %v2090, %v2086
    %v2315 = vpack.c.b16 %v2095, %v2091
    %v2316 = vpack.c.b16 %v2096, %v2092
    %v2317 = vpack.c.b16 %v2097, %v2093
    %v2318 = vpack.c.b16 %v2098, %v2094
    %v2319 = vpack.c.b16 %v2103, %v2099
    %v2320 = vpack.c.b16 %v2104, %v2100
    %v2321 = vpack.c.b16 %v2105, %v2101
    %v2322 = vpack.c.b16 %v2106, %v2102
    %v2323 = vpack.c.b16 %v2111, %v2107
    %v2324 = vpack.c.b16 %v2112, %v2108
    %v2325 = vpack.c.b16 %v2113, %v2109
    %v2326 = vpack.c.b16 %v2114, %v2110
    %v2327 = vpack.c.b16 %v2119, %v2115
    %v2328 = vpack.c.b16 %v2120, %v2116
    %v2329 = vpack.c.b16 %v2121, %v2117
    %v2330 = vpack.c.b16 %v2122, %v2118
    %v2331 = vpack.c.b16 %v2127, %v2123
    %v2332 = vpack.c.b16 %v2128, %v2124
    %v2333 = vpack.c.b16 %v2129, %v2125
    %v2334 = vpack.c.b16 %v2130, %v2126
    %v2335 = vpack.c.b16 %v2135, %v2131
    %v2336 = vpack.c.b16 %v2136, %v2132
    %v2337 = vpack.c.b16 %v2137, %v2133
    %v2338 = vpack.c.b16 %v2138, %v2134
    %v2339 = vpack.c.b16 %v2143, %v2139
    %v2340 = vpack.c.b16 %v2144, %v2140
    %v2341 = vpack.c.b16 %v2145, %v2141
    %v2342 = vpack.c.b16 %v2146, %v2142
    %v2343 = vpack.c.b16 %v2151, %v2147
    %v2344 = vpack.c.b16 %v2152, %v2148
    %v2345 = vpack.c.b16 %v2153, %v2149
    %v2346 = vpack.c.b16 %v2154, %v2150
    %v2347 = vpack.c.b16 %v2159, %v2155
    %v2348 = vpack.c.b16 %v2160, %v2156
    %v2349 = vpack.c.b16 %v2161, %v2157
    %v2350 = vpack.c.b16 %v2162, %v2158
    %v2351 = vpack.c.b16 %v2167, %v2163
    %v2352 = vpack.c.b16 %v2168, %v2164
    %v2353 = vpack.c.b16 %v2169, %v2165
    %v2354 = vpack.c.b16 %v2170, %v2166
    %v2355 = vpack.c.b16 %v2175, %v2171
    %v2356 = vpack.c.b16 %v2176, %v2172
    %v2357 = vpack.c.b16 %v2177, %v2173
    %v2358 = vpack.c.b16 %v2178, %v2174
    %v2359 = vpack.c.b16 %v2183, %v2179
    %v2360 = vpack.c.b16 %v2184, %v2180
    %v2361 = vpack.c.b16 %v2185, %v2181
    %v2362 = vpack.c.b16 %v2186, %v2182
    %v2363 = vpack.c.b16 %v2191, %v2187
    %v2364 = vpack.c.b16 %v2192, %v2188
    %v2365 = vpack.c.b16 %v2193, %v2189
    %v2366 = vpack.c.b16 %v2194, %v2190
    %v2367 = vpack.c.b16 %v2199, %v2195
    %v2368 = vpack.c.b16 %v2200, %v2196
    %v2369 = vpack.c.b16 %v2201, %v2197
    %v2370 = vpack.c.b16 %v2202, %v2198
    %v2371 = vpack.c.b16 %v2207, %v2203
    %v2372 = vpack.c.b16 %v2208, %v2204
    %v2373 = vpack.c.b16 %v2209, %v2205
    %v2374 = vpack.c.b16 %v2210, %v2206
    %v2375 = vpack.c.b16 %v2215, %v2211
    %v2376 = vpack.c.b16 %v2216, %v2212
    %v2377 = vpack.c.b16 %v2217, %v2213
    %v2378 = vpack.c.b16 %v2218, %v2214
    %v2379 = vpack.c.b16 %v2223, %v2219
    %v2380 = vpack.c.b16 %v2224, %v2220
    %v2381 = vpack.c.b16 %v2225, %v2221
    %v2382 = vpack.c.b16 %v2226, %v2222
    %v2383 = vpack.c.b16 %v2231, %v2227
    %v2384 = vpack.c.b16 %v2232, %v2228
    %v2385 = vpack.c.b16 %v2233, %v2229
    %v2386 = vpack.c.b16 %v2234, %v2230
    %v2387 = vpack.c.b16 %v2239, %v2235
    %v2388 = vpack.c.b16 %v2240, %v2236
    %v2389 = vpack.c.b16 %v2241, %v2237
    %v2390 = vpack.c.b16 %v2242, %v2238
    %v2391 = vpack.c.b16 %v2247, %v2243
    %v2392 = vpack.c.b16 %v2248, %v2244
    %v2393 = vpack.c.b16 %v2249, %v2245
    %v2394 = vpack.c.b16 %v2250, %v2246
    %v2395 = vpack.c.b16 %v2255, %v2251
    %v2396 = vpack.c.b16 %v2256, %v2252
    %v2397 = vpack.c.b16 %v2257, %v2253
    %v2398 = vpack.c.b16 %v2258, %v2254
    %v2399 = vpack.c.b16 %v2263, %v2259
    %v2400 = vpack.c.b16 %v2264, %v2260
    %v2401 = vpack.c.b16 %v2265, %v2261
    %v2402 = vpack.c.b16 %v2266, %v2262
    %v2403 = vpack.c.b16 %v2271, %v2267
    %v2404 = vpack.c.b16 %v2272, %v2268
    %v2405 = vpack.c.b16 %v2273, %v2269
    %v2406 = vpack.c.b16 %v2274, %v2270
    %v2407 = vpack.c.b16 %v2279, %v2275
    %v2408 = vpack.c.b16 %v2280, %v2276
    %v2409 = vpack.c.b16 %v2281, %v2277
    %v2410 = vpack.c.b16 %v2282, %v2278
    %2539 = vmatprep.subr.bf16.mxu0 %v2284
    %2540 = vmatpush1.bf16.msra.mxu0 %v2283
    %2541 = vmatprep.subr.bf16.mxu0 %v2288
    %2542 = vmatpush1.bf16.msra.mxu0 %v2287
    %2543 = vmatprep.subr.bf16.mxu0 %v2292
    %2544 = vmatpush1.bf16.msra.mxu0 %v2291
    %2545 = vmatprep.subr.bf16.mxu0 %v2296
    %2546 = vmatpush1.bf16.msra.mxu0 %v2295
    %2547 = vmatprep.subr.bf16.mxu0 %v2300
    %2548 = vmatpush1.bf16.msra.mxu0 %v2299
    %2549 = vmatprep.subr.bf16.mxu0 %v2304
    %2550 = vmatpush1.bf16.msra.mxu0 %v2303
    %2551 = vmatprep.subr.bf16.mxu0 %v2308
    %2552 = vmatpush1.bf16.msra.mxu0 %v2307
    %2553 = vmatprep.subr.bf16.mxu0 %v2312
    %2554 = vmatpush1.bf16.msra.mxu0 %v2311
    %2555 = vmatprep.subr.bf16.mxu0 %v2316
    %2556 = vmatpush1.bf16.msra.mxu0 %v2315
    %2557 = vmatprep.subr.bf16.mxu0 %v2320
    %2558 = vmatpush1.bf16.msra.mxu0 %v2319
    %2559 = vmatprep.subr.bf16.mxu0 %v2324
    %2560 = vmatpush1.bf16.msra.mxu0 %v2323
    %2561 = vmatprep.subr.bf16.mxu0 %v2328
    %2562 = vmatpush1.bf16.msra.mxu0 %v2327
    %2563 = vmatprep.subr.bf16.mxu0 %v2332
    %2564 = vmatpush1.bf16.msra.mxu0 %v2331
    %2565 = vmatprep.subr.bf16.mxu0 %v2336
    %2566 = vmatpush1.bf16.msra.mxu0 %v2335
    %2567 = vmatprep.subr.bf16.mxu0 %v2340
    %2568 = vmatpush1.bf16.msra.mxu0 %v2339
    %2569 = vmatprep.subr.bf16.mxu0 %v2344
    %2570 = vmatpush1.bf16.msra.mxu0 %v2343
    %2571 = vmatprep.mubr.bf16.mxu0 %v1740
    %2572 = vmatmul.mubr.bf16.gmra.mrb[0].mxu0 %v1739
    %v2573 = vpop.f32.mrb[0].mxu0
    %v2574 = vadd.f32 0.0, %v2573
    %v2575 = vpop.f32.mrb[0].mxu0
    %v2576 = vadd.f32 0.0, %v2575
    %v2577 = vpop.f32.mrb[0].mxu0
    %v2578 = vadd.f32 0.0, %v2577
    %v2579 = vpop.f32.mrb[0].mxu0
    %v2580 = vadd.f32 0.0, %v2579
    %2581 = vmatprep.mubr.bf16.mxu0 %v1744
    %2582 = vmatmul.mubr.bf16.gmra.mrb[0].mxu0 %v1743
    %v2583 = vpop.f32.mrb[0].mxu0
    %v2584 = vadd.f32 0.0, %v2583
    %v2585 = vpop.f32.mrb[0].mxu0
    %v2586 = vadd.f32 0.0, %v2585
    %v2587 = vpop.f32.mrb[0].mxu0
    %v2588 = vadd.f32 0.0, %v2587
    %v2589 = vpop.f32.mrb[0].mxu0
    %v2590 = vadd.f32 0.0, %v2589
    %2591 = vmatprep.mubr.bf16.mxu0 %v1748
    %2592 = vmatmul.mubr.bf16.gmra.mrb[0].mxu0 %v1747
    %v2593 = vpop.f32.mrb[0].mxu0
    %v2594 = vadd.f32 0.0, %v2593
    %v2595 = vpop.f32.mrb[0].mxu0
    %v2596 = vadd.f32 0.0, %v2595
    %v2597 = vpop.f32.mrb[0].mxu0
    %v2598 = vadd.f32 0.0, %v2597
    %v2599 = vpop.f32.mrb[0].mxu0
    %v2600 = vadd.f32 0.0, %v2599
    %2601 = vmatprep.mubr.bf16.mxu0 %v1752
    %2602 = vmatmul.mubr.bf16.gmra.mrb[0].mxu0 %v1751
    %v2603 = vpop.f32.mrb[0].mxu0
    %v2604 = vadd.f32 0.0, %v2603
    %v2605 = vpop.f32.mrb[0].mxu0
    %v2606 = vadd.f32 0.0, %v2605
    %v2607 = vpop.f32.mrb[0].mxu0
    %v2608 = vadd.f32 0.0, %v2607
    %v2609 = vpop.f32.mrb[0].mxu0
    %v2610 = vadd.f32 0.0, %v2609
    %2611 = vmatprep.mubr.bf16.mxu0 %v1756
    %2612 = vmatmul.mubr.bf16.gmra.mrb[0].mxu0 %v1755
    %v2613 = vpop.f32.mrb[0].mxu0
    %v2614 = vadd.f32 0.0, %v2613
    %v2615 = vpop.f32.mrb[0].mxu0
    %v2616 = vadd.f32 0.0, %v2615
    %v2617 = vpop.f32.mrb[0].mxu0
    %v2618 = vadd.f32 0.0, %v2617
    %v2619 = vpop.f32.mrb[0].mxu0
    %v2620 = vadd.f32 0.0, %v2619
    %2621 = vmatprep.mubr.bf16.mxu0 %v1760
    %2622 = vmatmul.mubr.bf16.gmra.mrb[0].mxu0 %v1759
    %v2623 = vpop.f32.mrb[0].mxu0
    %v2624 = vadd.f32 0.0, %v2623
    %v2625 = vpop.f32.mrb[0].mxu0
    %v2626 = vadd.f32 0.0, %v2625
    %v2627 = vpop.f32.mrb[0].mxu0
    %v2628 = vadd.f32 0.0, %v2627
    %v2629 = vpop.f32.mrb[0].mxu0
    %v2630 = vadd.f32 0.0, %v2629
    %2631 = vmatprep.mubr.bf16.mxu0 %v1764
    %2632 = vmatmul.mubr.bf16.gmra.mrb[0].mxu0 %v1763
    %v2633 = vpop.f32.mrb[0].mxu0
    %v2634 = vadd.f32 0.0, %v2633
    %v2635 = vpop.f32.mrb[0].mxu0
    %v2636 = vadd.f32 0.0, %v2635
    %v2637 = vpop.f32.mrb[0].mxu0
    %v2638 = vadd.f32 0.0, %v2637
    %v2639 = vpop.f32.mrb[0].mxu0
    %v2640 = vadd.f32 0.0, %v2639
    %2641 = vmatprep.mubr.bf16.mxu0 %v1768
    %2642 = vmatmul.mubr.bf16.gmra.mrb[0].mxu0 %v1767
    %v2643 = vpop.f32.mrb[0].mxu0
    %v2644 = vadd.f32 0.0, %v2643
    %v2645 = vpop.f32.mrb[0].mxu0
    %v2646 = vadd.f32 0.0, %v2645
    %v2647 = vpop.f32.mrb[0].mxu0
    %v2648 = vadd.f32 0.0, %v2647
    %v2649 = vpop.f32.mrb[0].mxu0
    %v2650 = vadd.f32 0.0, %v2649
    %2651 = vdwg.mxu0
    %2652 = vmatprep.subr.bf16.mxu0 %v2348
    %2653 = vmatpush1.bf16.msra.mxu0 %v2347
    %2654 = vmatprep.subr.bf16.mxu0 %v2352
    %2655 = vmatpush1.bf16.msra.mxu0 %v2351
    %2656 = vmatprep.subr.bf16.mxu0 %v2356
    %2657 = vmatpush1.bf16.msra.mxu0 %v2355
    %2658 = vmatprep.subr.bf16.mxu0 %v2360
    %2659 = vmatpush1.bf16.msra.mxu0 %v2359
    %2660 = vmatprep.subr.bf16.mxu0 %v2364
    %2661 = vmatpush1.bf16.msra.mxu0 %v2363
    %2662 = vmatprep.subr.bf16.mxu0 %v2368
    %2663 = vmatpush1.bf16.msra.mxu0 %v2367
    %2664 = vmatprep.subr.bf16.mxu0 %v2372
    %2665 = vmatpush1.bf16.msra.mxu0 %v2371
    %2666 = vmatprep.subr.bf16.mxu0 %v2376
    %2667 = vmatpush1.bf16.msra.mxu0 %v2375
    %2668 = vmatprep.subr.bf16.mxu0 %v2380
    %2669 = vmatpush1.bf16.msra.mxu0 %v2379
    %2670 = vmatprep.subr.bf16.mxu0 %v2384
    %2671 = vmatpush1.bf16.msra.mxu0 %v2383
    %2672 = vmatprep.subr.bf16.mxu0 %v2388
    %2673 = vmatpush1.bf16.msra.mxu0 %v2387
    %2674 = vmatprep.subr.bf16.mxu0 %v2392
    %2675 = vmatpush1.bf16.msra.mxu0 %v2391
    %2676 = vmatprep.subr.bf16.mxu0 %v2396
    %2677 = vmatpush1.bf16.msra.mxu0 %v2395
    %2678 = vmatprep.subr.bf16.mxu0 %v2400
    %2679 = vmatpush1.bf16.msra.mxu0 %v2399
    %2680 = vmatprep.subr.bf16.mxu0 %v2404
    %2681 = vmatpush1.bf16.msra.mxu0 %v2403
    %2682 = vmatprep.subr.bf16.mxu0 %v2408
    %2683 = vmatpush1.bf16.msra.mxu0 %v2407
    %2684 = vmatprep.mubr.bf16.mxu0 %v1742
    %2685 = vmatmul.mubr.bf16.gmra.mrb[0].mxu0 %v1741
    %v2686 = vpop.f32.mrb[0].mxu0
    %v2687 = vadd.f32 %v2574, %v2686
    %v2688 = vpop.f32.mrb[0].mxu0
    %v2689 = vadd.f32 %v2576, %v2688
    %v2690 = vpop.f32.mrb[0].mxu0
    %v2691 = vadd.f32 %v2578, %v2690
    %v2692 = vpop.f32.mrb[0].mxu0
    %v2693 = vadd.f32 %v2580, %v2692
    %2694 = vmatprep.mubr.bf16.mxu0 %v1746
    %2695 = vmatmul.mubr.bf16.gmra.mrb[0].mxu0 %v1745
    %v2696 = vpop.f32.mrb[0].mxu0
    %v2697 = vadd.f32 %v2584, %v2696
    %v2698 = vpop.f32.mrb[0].mxu0
    %v2699 = vadd.f32 %v2586, %v2698
    %v2700 = vpop.f32.mrb[0].mxu0
    %v2701 = vadd.f32 %v2588, %v2700
    %v2702 = vpop.f32.mrb[0].mxu0
    %v2703 = vadd.f32 %v2590, %v2702
    %2704 = vmatprep.mubr.bf16.mxu0 %v1750
    %2705 = vmatmul.mubr.bf16.gmra.mrb[0].mxu0 %v1749
    %v2706 = vpop.f32.mrb[0].mxu0
    %v2707 = vadd.f32 %v2594, %v2706
    %v2708 = vpop.f32.mrb[0].mxu0
    %v2709 = vadd.f32 %v2596, %v2708
    %v2710 = vpop.f32.mrb[0].mxu0
    %v2711 = vadd.f32 %v2598, %v2710
    %v2712 = vpop.f32.mrb[0].mxu0
    %v2713 = vadd.f32 %v2600, %v2712
    %2714 = vmatprep.mubr.bf16.mxu0 %v1754
    %2715 = vmatmul.mubr.bf16.gmra.mrb[0].mxu0 %v1753
    %v2716 = vpop.f32.mrb[0].mxu0
    %v2717 = vadd.f32 %v2604, %v2716
    %v2718 = vpop.f32.mrb[0].mxu0
    %v2719 = vadd.f32 %v2606, %v2718
    %v2720 = vpop.f32.mrb[0].mxu0
    %v2721 = vadd.f32 %v2608, %v2720
    %v2722 = vpop.f32.mrb[0].mxu0
    %v2723 = vadd.f32 %v2610, %v2722
    %2724 = vmatprep.mubr.bf16.mxu0 %v1758
    %2725 = vmatmul.mubr.bf16.gmra.mrb[0].mxu0 %v1757
    %v2726 = vpop.f32.mrb[0].mxu0
    %v2727 = vadd.f32 %v2614, %v2726
    %v2728 = vpop.f32.mrb[0].mxu0
    %v2729 = vadd.f32 %v2616, %v2728
    %v2730 = vpop.f32.mrb[0].mxu0
    %v2731 = vadd.f32 %v2618, %v2730
    %v2732 = vpop.f32.mrb[0].mxu0
    %v2733 = vadd.f32 %v2620, %v2732
    %2734 = vmatprep.mubr.bf16.mxu0 %v1762
    %2735 = vmatmul.mubr.bf16.gmra.mrb[0].mxu0 %v1761
    %v2736 = vpop.f32.mrb[0].mxu0
    %v2737 = vadd.f32 %v2624, %v2736
    %v2738 = vpop.f32.mrb[0].mxu0
    %v2739 = vadd.f32 %v2626, %v2738
    %v2740 = vpop.f32.mrb[0].mxu0
    %v2741 = vadd.f32 %v2628, %v2740
    %v2742 = vpop.f32.mrb[0].mxu0
    %v2743 = vadd.f32 %v2630, %v2742
    %2744 = vmatprep.mubr.bf16.mxu0 %v1766
    %2745 = vmatmul.mubr.bf16.gmra.mrb[0].mxu0 %v1765
    %v2746 = vpop.f32.mrb[0].mxu0
    %v2747 = vadd.f32 %v2634, %v2746
    %v2748 = vpop.f32.mrb[0].mxu0
    %v2749 = vadd.f32 %v2636, %v2748
    %v2750 = vpop.f32.mrb[0].mxu0
    %v2751 = vadd.f32 %v2638, %v2750
    %v2752 = vpop.f32.mrb[0].mxu0
    %v2753 = vadd.f32 %v2640, %v2752
    %2754 = vmatprep.mubr.bf16.mxu0 %v1770
    %2755 = vmatmul.mubr.bf16.gmra.mrb[0].mxu0 %v1769
    %v2756 = vpop.f32.mrb[0].mxu0
    %v2757 = vadd.f32 %v2644, %v2756
    %v2758 = vpop.f32.mrb[0].mxu0
    %v2759 = vadd.f32 %v2646, %v2758
    %v2760 = vpop.f32.mrb[0].mxu0
    %v2761 = vadd.f32 %v2648, %v2760
    %v2762 = vpop.f32.mrb[0].mxu0
    %v2763 = vadd.f32 %v2650, %v2762
    %2764 = vdwg.mxu0
    %2765 = vmatprep.subr.bf16.mxu0 %v2286
    %2766 = vmatpush1.bf16.msra.mxu0 %v2285
    %2767 = vmatprep.subr.bf16.mxu0 %v2290
    %2768 = vmatpush1.bf16.msra.mxu0 %v2289
    %2769 = vmatprep.subr.bf16.mxu0 %v2294
    %2770 = vmatpush1.bf16.msra.mxu0 %v2293
    %2771 = vmatprep.subr.bf16.mxu0 %v2298
    %2772 = vmatpush1.bf16.msra.mxu0 %v2297
    %2773 = vmatprep.subr.bf16.mxu0 %v2302
    %2774 = vmatpush1.bf16.msra.mxu0 %v2301
    %2775 = vmatprep.subr.bf16.mxu0 %v2306
    %2776 = vmatpush1.bf16.msra.mxu0 %v2305
    %2777 = vmatprep.subr.bf16.mxu0 %v2310
    %2778 = vmatpush1.bf16.msra.mxu0 %v2309
    %2779 = vmatprep.subr.bf16.mxu0 %v2314
    %2780 = vmatpush1.bf16.msra.mxu0 %v2313
    %2781 = vmatprep.subr.bf16.mxu0 %v2318
    %2782 = vmatpush1.bf16.msra.mxu0 %v2317
    %2783 = vmatprep.subr.bf16.mxu0 %v2322
    %2784 = vmatpush1.bf16.msra.mxu0 %v2321
    %2785 = vmatprep.subr.bf16.mxu0 %v2326
    %2786 = vmatpush1.bf16.msra.mxu0 %v2325
    %2787 = vmatprep.subr.bf16.mxu0 %v2330
    %2788 = vmatpush1.bf16.msra.mxu0 %v2329
    %2789 = vmatprep.subr.bf16.mxu0 %v2334
    %2790 = vmatpush1.bf16.msra.mxu0 %v2333
    %2791 = vmatprep.subr.bf16.mxu0 %v2338
    %2792 = vmatpush1.bf16.msra.mxu0 %v2337
    %2793 = vmatprep.subr.bf16.mxu0 %v2342
    %2794 = vmatpush1.bf16.msra.mxu0 %v2341
    %2795 = vmatprep.subr.bf16.mxu0 %v2346
    %2796 = vmatpush1.bf16.msra.mxu0 %v2345
    %2797 = vmatprep.mubr.bf16.mxu0 %v1740
    %2798 = vmatmul.mubr.bf16.gmra.mrb[0].mxu0 %v1739
    %v2799 = vpop.f32.mrb[0].mxu0
    %v2800 = vadd.f32 0.0, %v2799
    %v2801 = vpop.f32.mrb[0].mxu0
    %v2802 = vadd.f32 0.0, %v2801
    %v2803 = vpop.f32.mrb[0].mxu0
    %v2804 = vadd.f32 0.0, %v2803
    %v2805 = vpop.f32.mrb[0].mxu0
    %v2806 = vadd.f32 0.0, %v2805
    %2807 = vmatprep.mubr.bf16.mxu0 %v1744
    %2808 = vmatmul.mubr.bf16.gmra.mrb[0].mxu0 %v1743
    %v2809 = vpop.f32.mrb[0].mxu0
    %v2810 = vadd.f32 0.0, %v2809
    %v2811 = vpop.f32.mrb[0].mxu0
    %v2812 = vadd.f32 0.0, %v2811
    %v2813 = vpop.f32.mrb[0].mxu0
    %v2814 = vadd.f32 0.0, %v2813
    %v2815 = vpop.f32.mrb[0].mxu0
    %v2816 = vadd.f32 0.0, %v2815
    %2817 = vmatprep.mubr.bf16.mxu0 %v1748
    %2818 = vmatmul.mubr.bf16.gmra.mrb[0].mxu0 %v1747
    %v2819 = vpop.f32.mrb[0].mxu0
    %v2820 = vadd.f32 0.0, %v2819
    %v2821 = vpop.f32.mrb[0].mxu0
    %v2822 = vadd.f32 0.0, %v2821
    %v2823 = vpop.f32.mrb[0].mxu0
    %v2824 = vadd.f32 0.0, %v2823
    %v2825 = vpop.f32.mrb[0].mxu0
    %v2826 = vadd.f32 0.0, %v2825
    %2827 = vmatprep.mubr.bf16.mxu0 %v1752
    %2828 = vmatmul.mubr.bf16.gmra.mrb[0].mxu0 %v1751
    %v2829 = vpop.f32.mrb[0].mxu0
    %v2830 = vadd.f32 0.0, %v2829
    %v2831 = vpop.f32.mrb[0].mxu0
    %v2832 = vadd.f32 0.0, %v2831
    %v2833 = vpop.f32.mrb[0].mxu0
    %v2834 = vadd.f32 0.0, %v2833
    %v2835 = vpop.f32.mrb[0].mxu0
    %v2836 = vadd.f32 0.0, %v2835
    %2837 = vmatprep.mubr.bf16.mxu0 %v1756
    %2838 = vmatmul.mubr.bf16.gmra.mrb[0].mxu0 %v1755
    %v2839 = vpop.f32.mrb[0].mxu0
    %v2840 = vadd.f32 0.0, %v2839
    %v2841 = vpop.f32.mrb[0].mxu0
    %v2842 = vadd.f32 0.0, %v2841
    %v2843 = vpop.f32.mrb[0].mxu0
    %v2844 = vadd.f32 0.0, %v2843
    %v2845 = vpop.f32.mrb[0].mxu0
    %v2846 = vadd.f32 0.0, %v2845
    %2847 = vmatprep.mubr.bf16.mxu0 %v1760
    %2848 = vmatmul.mubr.bf16.gmra.mrb[0].mxu0 %v1759
    %v2849 = vpop.f32.mrb[0].mxu0
    %v2850 = vadd.f32 0.0, %v2849
    %v2851 = vpop.f32.mrb[0].mxu0
    %v2852 = vadd.f32 0.0, %v2851
    %v2853 = vpop.f32.mrb[0].mxu0
    %v2854 = vadd.f32 0.0, %v2853
    %v2855 = vpop.f32.mrb[0].mxu0
    %v2856 = vadd.f32 0.0, %v2855
    %2857 = vmatprep.mubr.bf16.mxu0 %v1764
    %2858 = vmatmul.mubr.bf16.gmra.mrb[0].mxu0 %v1763
    %v2859 = vpop.f32.mrb[0].mxu0
    %v2860 = vadd.f32 0.0, %v2859
    %v2861 = vpop.f32.mrb[0].mxu0
    %v2862 = vadd.f32 0.0, %v2861
    %v2863 = vpop.f32.mrb[0].mxu0
    %v2864 = vadd.f32 0.0, %v2863
    %v2865 = vpop.f32.mrb[0].mxu0
    %v2866 = vadd.f32 0.0, %v2865
    %2867 = vmatprep.mubr.bf16.mxu0 %v1768
    %2868 = vmatmul.mubr.bf16.gmra.mrb[0].mxu0 %v1767
    %v2869 = vpop.f32.mrb[0].mxu0
    %v2870 = vadd.f32 0.0, %v2869
    %v2871 = vpop.f32.mrb[0].mxu0
    %v2872 = vadd.f32 0.0, %v2871
    %v2873 = vpop.f32.mrb[0].mxu0
    %v2874 = vadd.f32 0.0, %v2873
    %v2875 = vpop.f32.mrb[0].mxu0
    %v2876 = vadd.f32 0.0, %v2875
    %2877 = vdwg.mxu0
    %2878 = vmatprep.subr.bf16.mxu0 %v2350
    %2879 = vmatpush1.bf16.msra.mxu0 %v2349
    %2880 = vmatprep.subr.bf16.mxu0 %v2354
    %2881 = vmatpush1.bf16.msra.mxu0 %v2353
    %2882 = vmatprep.subr.bf16.mxu0 %v2358
    %2883 = vmatpush1.bf16.msra.mxu0 %v2357
    %2884 = vmatprep.subr.bf16.mxu0 %v2362
    %2885 = vmatpush1.bf16.msra.mxu0 %v2361
    %2886 = vmatprep.subr.bf16.mxu0 %v2366
    %2887 = vmatpush1.bf16.msra.mxu0 %v2365
    %2888 = vmatprep.subr.bf16.mxu0 %v2370
    %2889 = vmatpush1.bf16.msra.mxu0 %v2369
    %2890 = vmatprep.subr.bf16.mxu0 %v2374
    %2891 = vmatpush1.bf16.msra.mxu0 %v2373
    %2892 = vmatprep.subr.bf16.mxu0 %v2378
    %2893 = vmatpush1.bf16.msra.mxu0 %v2377
    %2894 = vmatprep.subr.bf16.mxu0 %v2382
    %2895 = vmatpush1.bf16.msra.mxu0 %v2381
    %2896 = vmatprep.subr.bf16.mxu0 %v2386
    %2897 = vmatpush1.bf16.msra.mxu0 %v2385
    %2898 = vmatprep.subr.bf16.mxu0 %v2390
    %2899 = vmatpush1.bf16.msra.mxu0 %v2389
    %2900 = vmatprep.subr.bf16.mxu0 %v2394
    %2901 = vmatpush1.bf16.msra.mxu0 %v2393
    %2902 = vmatprep.subr.bf16.mxu0 %v2398
    %2903 = vmatpush1.bf16.msra.mxu0 %v2397
    %2904 = vmatprep.subr.bf16.mxu0 %v2402
    %2905 = vmatpush1.bf16.msra.mxu0 %v2401
    %2906 = vmatprep.subr.bf16.mxu0 %v2406
    %2907 = vmatpush1.bf16.msra.mxu0 %v2405
    %2908 = vmatprep.subr.bf16.mxu0 %v2410
    %2909 = vmatpush1.bf16.msra.mxu0 %v2409
    %2910 = vmatprep.mubr.bf16.mxu0 %v1742
    %2911 = vmatmul.mubr.bf16.gmra.mrb[0].mxu0 %v1741
    %v2912 = vpop.f32.mrb[0].mxu0
    %v2913 = vadd.f32 %v2800, %v2912
    %v2914 = vpop.f32.mrb[0].mxu0
    %v2915 = vadd.f32 %v2802, %v2914
    %v2916 = vpop.f32.mrb[0].mxu0
    %v2917 = vadd.f32 %v2804, %v2916
    %v2918 = vpop.f32.mrb[0].mxu0
    %v2919 = vadd.f32 %v2806, %v2918
    %2920 = vmatprep.mubr.bf16.mxu0 %v1746
    %2921 = vmatmul.mubr.bf16.gmra.mrb[0].mxu0 %v1745
    %v2922 = vpop.f32.mrb[0].mxu0
    %v2923 = vadd.f32 %v2810, %v2922
    %v2924 = vpop.f32.mrb[0].mxu0
    %v2925 = vadd.f32 %v2812, %v2924
    %v2926 = vpop.f32.mrb[0].mxu0
    %v2927 = vadd.f32 %v2814, %v2926
    %v2928 = vpop.f32.mrb[0].mxu0
    %v2929 = vadd.f32 %v2816, %v2928
    %2930 = vmatprep.mubr.bf16.mxu0 %v1750
    %2931 = vmatmul.mubr.bf16.gmra.mrb[0].mxu0 %v1749
    %v2932 = vpop.f32.mrb[0].mxu0
    %v2933 = vadd.f32 %v2820, %v2932
    %v2934 = vpop.f32.mrb[0].mxu0
    %v2935 = vadd.f32 %v2822, %v2934
    %v2936 = vpop.f32.mrb[0].mxu0
    %v2937 = vadd.f32 %v2824, %v2936
    %v2938 = vpop.f32.mrb[0].mxu0
    %v2939 = vadd.f32 %v2826, %v2938
    %2940 = vmatprep.mubr.bf16.mxu0 %v1754
    %2941 = vmatmul.mubr.bf16.gmra.mrb[0].mxu0 %v1753
    %v2942 = vpop.f32.mrb[0].mxu0
    %v2943 = vadd.f32 %v2830, %v2942
    %v2944 = vpop.f32.mrb[0].mxu0
    %v2945 = vadd.f32 %v2832, %v2944
    %v2946 = vpop.f32.mrb[0].mxu0
    %v2947 = vadd.f32 %v2834, %v2946
    %v2948 = vpop.f32.mrb[0].mxu0
    %v2949 = vadd.f32 %v2836, %v2948
    %2950 = vmatprep.mubr.bf16.mxu0 %v1758
    %2951 = vmatmul.mubr.bf16.gmra.mrb[0].mxu0 %v1757
    %v2952 = vpop.f32.mrb[0].mxu0
    %v2953 = vadd.f32 %v2840, %v2952
    %v2954 = vpop.f32.mrb[0].mxu0
    %v2955 = vadd.f32 %v2842, %v2954
    %v2956 = vpop.f32.mrb[0].mxu0
    %v2957 = vadd.f32 %v2844, %v2956
    %v2958 = vpop.f32.mrb[0].mxu0
    %v2959 = vadd.f32 %v2846, %v2958
    %2960 = vmatprep.mubr.bf16.mxu0 %v1762
    %2961 = vmatmul.mubr.bf16.gmra.mrb[0].mxu0 %v1761
    %v2962 = vpop.f32.mrb[0].mxu0
    %v2963 = vadd.f32 %v2850, %v2962
    %v2964 = vpop.f32.mrb[0].mxu0
    %v2965 = vadd.f32 %v2852, %v2964
    %v2966 = vpop.f32.mrb[0].mxu0
    %v2967 = vadd.f32 %v2854, %v2966
    %v2968 = vpop.f32.mrb[0].mxu0
    %v2969 = vadd.f32 %v2856, %v2968
    %2970 = vmatprep.mubr.bf16.mxu0 %v1766
    %2971 = vmatmul.mubr.bf16.gmra.mrb[0].mxu0 %v1765
    %v2972 = vpop.f32.mrb[0].mxu0
    %v2973 = vadd.f32 %v2860, %v2972
    %v2974 = vpop.f32.mrb[0].mxu0
    %v2975 = vadd.f32 %v2862, %v2974
    %v2976 = vpop.f32.mrb[0].mxu0
    %v2977 = vadd.f32 %v2864, %v2976
    %v2978 = vpop.f32.mrb[0].mxu0
    %v2979 = vadd.f32 %v2866, %v2978
    %2980 = vmatprep.mubr.bf16.mxu0 %v1770
    %2981 = vmatmul.mubr.bf16.gmra.mrb[0].mxu0 %v1769
    %v2982 = vpop.f32.mrb[0].mxu0
    %v2983 = vadd.f32 %v2870, %v2982
    %v2984 = vpop.f32.mrb[0].mxu0
    %v2985 = vadd.f32 %v2872, %v2984
    %v2986 = vpop.f32.mrb[0].mxu0
    %v2987 = vadd.f32 %v2874, %v2986
    %v2988 = vpop.f32.mrb[0].mxu0
    %v2989 = vadd.f32 %v2876, %v2988
    %2990 = vdwg.mxu0
    %v2991 = vld [vmem:[#allocation20] sm:$0xf]
    %v2993 = vlaneseq
    %v2994 = vshrl.u32 %v2993, 7
    %v2995 = vsub.s32 0, %v2994
    %v2996 = vrot.slane %v2991, %v2995
    %v2997 = vlaneseq
    %v2998 = vshrl.u32 %v2997, 7
    %v2999 = vsub.s32 1, %v2998
    %v3000 = vrot.slane %v2991, %v2999
    %v3001 = vlaneseq
    %v3002 = vshrl.u32 %v3001, 7
    %v3003 = vsub.s32 2, %v3002
    %v3004 = vrot.slane %v2991, %v3003
    %v3005 = vlaneseq
    %v3006 = vshrl.u32 %v3005, 7
    %v3007 = vsub.s32 3, %v3006
    %v3008 = vrot.slane %v2991, %v3007
    %v3013 = vmul.f32 %v2687, %v2996
    %v3014 = vmul.f32 %v2689, %v3000
    %v3015 = vmul.f32 %v2913, %v3004
    %v3016 = vmul.f32 %v2915, %v3008
    %v3017 = vmul.f32 %v2691, %v2996
    %v3018 = vmul.f32 %v2693, %v3000
    %v3019 = vmul.f32 %v2917, %v3004
    %v3020 = vmul.f32 %v2919, %v3008
    %v3021 = vmul.f32 %v2697, %v2996
    %v3022 = vmul.f32 %v2699, %v3000
    %v3023 = vmul.f32 %v2923, %v3004
    %v3024 = vmul.f32 %v2925, %v3008
    %v3025 = vmul.f32 %v2701, %v2996
    %v3026 = vmul.f32 %v2703, %v3000
    %v3027 = vmul.f32 %v2927, %v3004
    %v3028 = vmul.f32 %v2929, %v3008
    %v3029 = vmul.f32 %v2707, %v2996
    %v3030 = vmul.f32 %v2709, %v3000
    %v3031 = vmul.f32 %v2933, %v3004
    %v3032 = vmul.f32 %v2935, %v3008
    %v3033 = vmul.f32 %v2711, %v2996
    %v3034 = vmul.f32 %v2713, %v3000
    %v3035 = vmul.f32 %v2937, %v3004
    %v3036 = vmul.f32 %v2939, %v3008
    %v3037 = vmul.f32 %v2717, %v2996
    %v3038 = vmul.f32 %v2719, %v3000
    %v3039 = vmul.f32 %v2943, %v3004
    %v3040 = vmul.f32 %v2945, %v3008
    %v3041 = vmul.f32 %v2721, %v2996
    %v3042 = vmul.f32 %v2723, %v3000
    %v3043 = vmul.f32 %v2947, %v3004
    %v3044 = vmul.f32 %v2949, %v3008
    %v3045 = vmul.f32 %v2727, %v2996
    %v3046 = vmul.f32 %v2729, %v3000
    %v3047 = vmul.f32 %v2953, %v3004
    %v3048 = vmul.f32 %v2955, %v3008
    %v3049 = vmul.f32 %v2731, %v2996
    %v3050 = vmul.f32 %v2733, %v3000
    %v3051 = vmul.f32 %v2957, %v3004
    %v3052 = vmul.f32 %v2959, %v3008
    %v3053 = vmul.f32 %v2737, %v2996
    %v3054 = vmul.f32 %v2739, %v3000
    %v3055 = vmul.f32 %v2963, %v3004
    %v3056 = vmul.f32 %v2965, %v3008
    %v3057 = vmul.f32 %v2741, %v2996
    %v3058 = vmul.f32 %v2743, %v3000
    %v3059 = vmul.f32 %v2967, %v3004
    %v3060 = vmul.f32 %v2969, %v3008
    %v3061 = vmul.f32 %v2747, %v2996
    %v3062 = vmul.f32 %v2749, %v3000
    %v3063 = vmul.f32 %v2973, %v3004
    %v3064 = vmul.f32 %v2975, %v3008
    %v3065 = vmul.f32 %v2751, %v2996
    %v3066 = vmul.f32 %v2753, %v3000
    %v3067 = vmul.f32 %v2977, %v3004
    %v3068 = vmul.f32 %v2979, %v3008
    %v3069 = vmul.f32 %v2757, %v2996
    %v3070 = vmul.f32 %v2759, %v3000
    %v3071 = vmul.f32 %v2983, %v3004
    %v3072 = vmul.f32 %v2985, %v3008
    %v3073 = vmul.f32 %v2761, %v2996
    %v3074 = vmul.f32 %v2763, %v3000
    %v3075 = vmul.f32 %v2987, %v3004
    %v3076 = vmul.f32 %v2989, %v3008
    %v3077 = vadd.f32 %v3013, %v3014
    %v3078 = vadd.f32 %v3077, %v3015
    %v3079 = vadd.f32 %v3078, %v3016
    %3080 = vadd.xlane.f32.xlu0 %v3079
    %v3081 = vpop.xlane.xlu0 %3080
    %v3082 = vadd.f32 %v3017, %v3018
    %v3083 = vadd.f32 %v3082, %v3019
    %v3084 = vadd.f32 %v3083, %v3020
    %3085 = vadd.xlane.f32.xlu0 %v3084
    %v3086 = vpop.xlane.xlu0 %3085
    %v3087 = vadd.f32 %v3021, %v3022
    %v3088 = vadd.f32 %v3087, %v3023
    %v3089 = vadd.f32 %v3088, %v3024
    %3090 = vadd.xlane.f32.xlu0 %v3089
    %v3091 = vpop.xlane.xlu0 %3090
    %v3092 = vadd.f32 %v3025, %v3026
    %v3093 = vadd.f32 %v3092, %v3027
    %v3094 = vadd.f32 %v3093, %v3028
    %3095 = vadd.xlane.f32.xlu0 %v3094
    %v3096 = vpop.xlane.xlu0 %3095
    %v3097 = vadd.f32 %v3029, %v3030
    %v3098 = vadd.f32 %v3097, %v3031
    %v3099 = vadd.f32 %v3098, %v3032
    %3100 = vadd.xlane.f32.xlu0 %v3099
    %v3101 = vpop.xlane.xlu0 %3100
    %v3102 = vadd.f32 %v3033, %v3034
    %v3103 = vadd.f32 %v3102, %v3035
    %v3104 = vadd.f32 %v3103, %v3036
    %3105 = vadd.xlane.f32.xlu0 %v3104
    %v3106 = vpop.xlane.xlu0 %3105
    %v3107 = vadd.f32 %v3037, %v3038
    %v3108 = vadd.f32 %v3107, %v3039
    %v3109 = vadd.f32 %v3108, %v3040
    %3110 = vadd.xlane.f32.xlu0 %v3109
    %v3111 = vpop.xlane.xlu0 %3110
    %v3112 = vadd.f32 %v3041, %v3042
    %v3113 = vadd.f32 %v3112, %v3043
    %v3114 = vadd.f32 %v3113, %v3044
    %3115 = vadd.xlane.f32.xlu0 %v3114
    %v3116 = vpop.xlane.xlu0 %3115
    %v3117 = vadd.f32 %v3045, %v3046
    %v3118 = vadd.f32 %v3117, %v3047
    %v3119 = vadd.f32 %v3118, %v3048
    %3120 = vadd.xlane.f32.xlu0 %v3119
    %v3121 = vpop.xlane.xlu0 %3120
    %v3122 = vadd.f32 %v3049, %v3050
    %v3123 = vadd.f32 %v3122, %v3051
    %v3124 = vadd.f32 %v3123, %v3052
    %3125 = vadd.xlane.f32.xlu0 %v3124
    %v3126 = vpop.xlane.xlu0 %3125
    %v3127 = vadd.f32 %v3053, %v3054
    %v3128 = vadd.f32 %v3127, %v3055
    %v3129 = vadd.f32 %v3128, %v3056
    %3130 = vadd.xlane.f32.xlu0 %v3129
    %v3131 = vpop.xlane.xlu0 %3130
    %v3132 = vadd.f32 %v3057, %v3058
    %v3133 = vadd.f32 %v3132, %v3059
    %v3134 = vadd.f32 %v3133, %v3060
    %3135 = vadd.xlane.f32.xlu0 %v3134
    %v3136 = vpop.xlane.xlu0 %3135
    %v3137 = vadd.f32 %v3061, %v3062
    %v3138 = vadd.f32 %v3137, %v3063
    %v3139 = vadd.f32 %v3138, %v3064
    %3140 = vadd.xlane.f32.xlu0 %v3139
    %v3141 = vpop.xlane.xlu0 %3140
    %v3142 = vadd.f32 %v3065, %v3066
    %v3143 = vadd.f32 %v3142, %v3067
    %v3144 = vadd.f32 %v3143, %v3068
    %3145 = vadd.xlane.f32.xlu0 %v3144
    %v3146 = vpop.xlane.xlu0 %3145
    %v3147 = vadd.f32 %v3069, %v3070
    %v3148 = vadd.f32 %v3147, %v3071
    %v3149 = vadd.f32 %v3148, %v3072
    %3150 = vadd.xlane.f32.xlu0 %v3149
    %v3151 = vpop.xlane.xlu0 %3150
    %v3152 = vadd.f32 %v3073, %v3074
    %v3153 = vadd.f32 %v3152, %v3075
    %v3154 = vadd.f32 %v3153, %v3076
    %3155 = vadd.xlane.f32.xlu0 %v3154
    %v3156 = vpop.xlane.xlu0 %3155
    %v3157 = vld [vmem:[#allocation19] sm:$0xf]
    %v3159 = vlaneseq
    %v3160 = vshrl.u32 %v3159, 7
    %v3161 = vsub.s32 0, %v3160
    %v3162 = vrot.slane %v3157, %v3161
    %v3163 = vlaneseq
    %v3164 = vshrl.u32 %v3163, 7
    %v3165 = vsub.s32 1, %v3164
    %v3166 = vrot.slane %v3157, %v3165
    %v3167 = vlaneseq
    %v3168 = vshrl.u32 %v3167, 7
    %v3169 = vsub.s32 2, %v3168
    %v3170 = vrot.slane %v3157, %v3169
    %v3171 = vlaneseq
    %v3172 = vshrl.u32 %v3171, 7
    %v3173 = vsub.s32 3, %v3172
    %v3174 = vrot.slane %v3157, %v3173
    %3179 = vmatprep.subr.mxu0 %v2689
    %3180 = vmatpush1.xpose.msra.mxu0 %v2687
    %3181 = vmatprep.subr.mxu0 %v2693
    %3182 = vmatpush1.xpose.msra.mxu0 %v2691
    %3183 = vmatprep.subr.mxu0 %v2699
    %3184 = vmatpush1.xpose.msra.mxu0 %v2697
    %3185 = vmatprep.subr.mxu0 %v2703
    %3186 = vmatpush1.xpose.msra.mxu0 %v2701
    %3187 = vmatprep.subr.mxu0 %v2709
    %3188 = vmatpush1.xpose.msra.mxu0 %v2707
    %3189 = vmatprep.subr.mxu0 %v2713
    %3190 = vmatpush1.xpose.msra.mxu0 %v2711
    %3191 = vmatprep.subr.mxu0 %v2719
    %3192 = vmatpush1.xpose.msra.mxu0 %v2717
    %3193 = vmatprep.subr.mxu0 %v2723
    %3194 = vmatpush1.xpose.msra.mxu0 %v2721
    %3195 = vmatprep.subr.mxu0 %v2729
    %3196 = vmatpush1.xpose.msra.mxu0 %v2727
    %3197 = vmatprep.subr.mxu0 %v2733
    %3198 = vmatpush1.xpose.msra.mxu0 %v2731
    %3199 = vmatprep.subr.mxu0 %v2739
    %3200 = vmatpush1.xpose.msra.mxu0 %v2737
    %3201 = vmatprep.subr.mxu0 %v2743
    %3202 = vmatpush1.xpose.msra.mxu0 %v2741
    %3203 = vmatprep.subr.mxu0 %v2749
    %3204 = vmatpush1.xpose.msra.mxu0 %v2747
    %3205 = vmatprep.subr.mxu0 %v2753
    %3206 = vmatpush1.xpose.msra.mxu0 %v2751
    %3207 = vmatprep.subr.mxu0 %v2759
    %3208 = vmatpush1.xpose.msra.mxu0 %v2757
    %3209 = vmatprep.subr.mxu0 %v2763
    %3210 = vmatpush1.xpose.msra.mxu0 %v2761
    %3211 = vmatprep.subr.mxu0 0.0
    %3212 = vmatpush1.xpose.msra.mxu0 0.0
    %3213 = vmatprep.subr.mxu0 0.0
    %3214 = vmatpush1.xpose.msra.mxu0 0.0
    %3215 = vmatprep.subr.mxu0 0.0
    %3216 = vmatpush1.xpose.msra.mxu0 0.0
    %3217 = vmatprep.subr.mxu0 0.0
    %3218 = vmatpush1.xpose.msra.mxu0 0.0
    %3219 = vmatprep.subr.mxu0 0.0
    %3220 = vmatpush1.xpose.msra.mxu0 0.0
    %3221 = vmatprep.subr.mxu0 0.0
    %3222 = vmatpush1.xpose.msra.mxu0 0.0
    %3223 = vmatprep.subr.mxu0 0.0
    %3224 = vmatpush1.xpose.msra.mxu0 0.0
    %3225 = vmatprep.subr.mxu0 0.0
    %3226 = vmatpush1.xpose.msra.mxu0 0.0
    %3227 = vmatprep.subr.mxu0 0.0
    %3228 = vmatpush1.xpose.msra.mxu0 0.0
    %3229 = vmatprep.subr.mxu0 0.0
    %3230 = vmatpush1.xpose.msra.mxu0 0.0
    %3231 = vmatprep.subr.mxu0 0.0
    %3232 = vmatpush1.xpose.msra.mxu0 0.0
    %3233 = vmatprep.subr.mxu0 0.0
    %3234 = vmatpush1.xpose.msra.mxu0 0.0
    %3235 = vmatprep.subr.mxu0 0.0
    %3236 = vmatpush1.xpose.msra.mxu0 0.0
    %3237 = vmatprep.subr.mxu0 0.0
    %3238 = vmatpush1.xpose.msra.mxu0 0.0
    %3239 = vmatprep.subr.mxu0 0.0
    %3240 = vmatpush1.xpose.msra.mxu0 0.0
    %3241 = vmatprep.subr.mxu0 0.0
    %3242 = vmatpush1.xpose.msra.mxu0 0.0
    %3243 = vmatprep.mubr.f32.mxu0 %v3166
    %3244 = vmatmul.mubr.f32.gmra.mrb[0].mxu0 %v3162
    %v3245 = vpop.f32.mrb[0].mxu0
    %v3246 = vadd.f32 0.0, %v3245
    %v3247 = vpop.f32.mrb[0].mxu0
    %3248 = vdwg.mxu0
    %3249 = vmatprep.subr.mxu0 %v2915
    %3250 = vmatpush1.xpose.msra.mxu0 %v2913
    %3251 = vmatprep.subr.mxu0 %v2919
    %3252 = vmatpush1.xpose.msra.mxu0 %v2917
    %3253 = vmatprep.subr.mxu0 %v2925
    %3254 = vmatpush1.xpose.msra.mxu0 %v2923
    %3255 = vmatprep.subr.mxu0 %v2929
    %3256 = vmatpush1.xpose.msra.mxu0 %v2927
    %3257 = vmatprep.subr.mxu0 %v2935
    %3258 = vmatpush1.xpose.msra.mxu0 %v2933
    %3259 = vmatprep.subr.mxu0 %v2939
    %3260 = vmatpush1.xpose.msra.mxu0 %v2937
    %3261 = vmatprep.subr.mxu0 %v2945
    %3262 = vmatpush1.xpose.msra.mxu0 %v2943
    %3263 = vmatprep.subr.mxu0 %v2949
    %3264 = vmatpush1.xpose.msra.mxu0 %v2947
    %3265 = vmatprep.subr.mxu0 %v2955
    %3266 = vmatpush1.xpose.msra.mxu0 %v2953
    %3267 = vmatprep.subr.mxu0 %v2959
    %3268 = vmatpush1.xpose.msra.mxu0 %v2957
    %3269 = vmatprep.subr.mxu0 %v2965
    %3270 = vmatpush1.xpose.msra.mxu0 %v2963
    %3271 = vmatprep.subr.mxu0 %v2969
    %3272 = vmatpush1.xpose.msra.mxu0 %v2967
    %3273 = vmatprep.subr.mxu0 %v2975
    %3274 = vmatpush1.xpose.msra.mxu0 %v2973
    %3275 = vmatprep.subr.mxu0 %v2979
    %3276 = vmatpush1.xpose.msra.mxu0 %v2977
    %3277 = vmatprep.subr.mxu0 %v2985
    %3278 = vmatpush1.xpose.msra.mxu0 %v2983
    %3279 = vmatprep.subr.mxu0 %v2989
    %3280 = vmatpush1.xpose.msra.mxu0 %v2987
    %3281 = vmatprep.subr.mxu0 0.0
    %3282 = vmatpush1.xpose.msra.mxu0 0.0
    %3283 = vmatprep.subr.mxu0 0.0
    %3284 = vmatpush1.xpose.msra.mxu0 0.0
    %3285 = vmatprep.subr.mxu0 0.0
    %3286 = vmatpush1.xpose.msra.mxu0 0.0
    %3287 = vmatprep.subr.mxu0 0.0
    %3288 = vmatpush1.xpose.msra.mxu0 0.0
    %3289 = vmatprep.subr.mxu0 0.0
    %3290 = vmatpush1.xpose.msra.mxu0 0.0
    %3291 = vmatprep.subr.mxu0 0.0
    %3292 = vmatpush1.xpose.msra.mxu0 0.0
    %3293 = vmatprep.subr.mxu0 0.0
    %3294 = vmatpush1.xpose.msra.mxu0 0.0
    %3295 = vmatprep.subr.mxu0 0.0
    %3296 = vmatpush1.xpose.msra.mxu0 0.0
    %3297 = vmatprep.subr.mxu0 0.0
    %3298 = vmatpush1.xpose.msra.mxu0 0.0
    %3299 = vmatprep.subr.mxu0 0.0
    %3300 = vmatpush1.xpose.msra.mxu0 0.0
    %3301 = vmatprep.subr.mxu0 0.0
    %3302 = vmatpush1.xpose.msra.mxu0 0.0
    %3303 = vmatprep.subr.mxu0 0.0
    %3304 = vmatpush1.xpose.msra.mxu0 0.0
    %3305 = vmatprep.subr.mxu0 0.0
    %3306 = vmatpush1.xpose.msra.mxu0 0.0
    %3307 = vmatprep.subr.mxu0 0.0
    %3308 = vmatpush1.xpose.msra.mxu0 0.0
    %3309 = vmatprep.subr.mxu0 0.0
    %3310 = vmatpush1.xpose.msra.mxu0 0.0
    %3311 = vmatprep.subr.mxu0 0.0
    %3312 = vmatpush1.xpose.msra.mxu0 0.0
    %3313 = vmatprep.mubr.f32.mxu0 %v3174
    %3314 = vmatmul.mubr.f32.gmra.mrb[0].mxu0 %v3170
    %v3315 = vpop.f32.mrb[0].mxu0
    %v3316 = vadd.f32 %v3246, %v3315
    %v3317 = vpop.f32.mrb[0].mxu0
    %3318 = vdwg.mxu0
    %v3319 = vlaneseq
    %v3320 = vshrl.u32 %v3319, 7
    %v3321 = vsub.s32 0, %v3320
    %v3322 = vrot.slane %v3316, %v3321
    %v3323 = vadd.f32 %v3081, %v3322
    %v3324 = vadd.f32 %v3086, %v3322
    %v3325 = vadd.f32 %v3091, %v3322
    %v3326 = vadd.f32 %v3096, %v3322
    %v3327 = vadd.f32 %v3101, %v3322
    %v3328 = vadd.f32 %v3106, %v3322
    %v3329 = vadd.f32 %v3111, %v3322
    %v3330 = vadd.f32 %v3116, %v3322
    %v3331 = vadd.f32 %v3121, %v3322
    %v3332 = vadd.f32 %v3126, %v3322
    %v3333 = vadd.f32 %v3131, %v3322
    %v3334 = vadd.f32 %v3136, %v3322
    %v3335 = vadd.f32 %v3141, %v3322
    %v3336 = vadd.f32 %v3146, %v3322
    %v3337 = vadd.f32 %v3151, %v3322
    %v3338 = vadd.f32 %v3156, %v3322
    %vm3339 = vcmp.gt.f32.partialorder %v3323, 0.0
    %vm3340 = vcmp.gt.f32.partialorder %v3324, 0.0
    %vm3341 = vcmp.gt.f32.partialorder %v3325, 0.0
    %vm3342 = vcmp.gt.f32.partialorder %v3326, 0.0
    %vm3343 = vcmp.gt.f32.partialorder %v3327, 0.0
    %vm3344 = vcmp.gt.f32.partialorder %v3328, 0.0
    %vm3345 = vcmp.gt.f32.partialorder %v3329, 0.0
    %vm3346 = vcmp.gt.f32.partialorder %v3330, 0.0
    %vm3347 = vcmp.gt.f32.partialorder %v3331, 0.0
    %vm3348 = vcmp.gt.f32.partialorder %v3332, 0.0
    %vm3349 = vcmp.gt.f32.partialorder %v3333, 0.0
    %vm3350 = vcmp.gt.f32.partialorder %v3334, 0.0
    %vm3351 = vcmp.gt.f32.partialorder %v3335, 0.0
    %vm3352 = vcmp.gt.f32.partialorder %v3336, 0.0
    %vm3353 = vcmp.gt.f32.partialorder %v3337, 0.0
    %vm3354 = vcmp.gt.f32.partialorder %v3338, 0.0
    %v3355 = vmul.f32 %v3323, 0.2
    %v3356 = vmul.f32 %v3324, 0.2
    %v3357 = vmul.f32 %v3325, 0.2
    %v3358 = vmul.f32 %v3326, 0.2
    %v3359 = vmul.f32 %v3327, 0.2
    %v3360 = vmul.f32 %v3328, 0.2
    %v3361 = vmul.f32 %v3329, 0.2
    %v3362 = vmul.f32 %v3330, 0.2
    %v3363 = vmul.f32 %v3331, 0.2
    %v3364 = vmul.f32 %v3332, 0.2
    %v3365 = vmul.f32 %v3333, 0.2
    %v3366 = vmul.f32 %v3334, 0.2
    %v3367 = vmul.f32 %v3335, 0.2
    %v3368 = vmul.f32 %v3336, 0.2
    %v3369 = vmul.f32 %v3337, 0.2
    %v3370 = vmul.f32 %v3338, 0.2
    %v3371 = vsel %vm3339, %v3323, %v3355
    %v3372 = vsel %vm3340, %v3324, %v3356
    %v3373 = vsel %vm3341, %v3325, %v3357
    %v3374 = vsel %vm3342, %v3326, %v3358
    %v3375 = vsel %vm3343, %v3327, %v3359
    %v3376 = vsel %vm3344, %v3328, %v3360
    %v3377 = vsel %vm3345, %v3329, %v3361
    %v3378 = vsel %vm3346, %v3330, %v3362
    %v3379 = vsel %vm3347, %v3331, %v3363
    %v3380 = vsel %vm3348, %v3332, %v3364
    %v3381 = vsel %vm3349, %v3333, %v3365
    %v3382 = vsel %vm3350, %v3334, %v3366
    %v3383 = vsel %vm3351, %v3335, %v3367
    %v3384 = vsel %vm3352, %v3336, %v3368
    %v3385 = vsel %vm3353, %v3337, %v3369
    %v3386 = vsel %vm3354, %v3338, %v3370
    %v3387 = vadd.f32 %v3371, %v311
    %v3388 = vadd.f32 %v3372, %v312
    %v3389 = vadd.f32 %v3373, %v313
    %v3390 = vadd.f32 %v3374, %v314
    %v3391 = vadd.f32 %v3375, %v315
    %v3392 = vadd.f32 %v3376, %v316
    %v3393 = vadd.f32 %v3377, %v317
    %v3394 = vadd.f32 %v3378, %v318
    %v3395 = vadd.f32 %v3379, %v319
    %v3396 = vadd.f32 %v3380, %v320
    %v3397 = vadd.f32 %v3381, %v321
    %v3398 = vadd.f32 %v3382, %v322
    %v3399 = vadd.f32 %v3383, %v323
    %v3400 = vadd.f32 %v3384, %v324
    %v3401 = vadd.f32 %v3385, %v325
    %v3402 = vadd.f32 %v3386, %v326
    %3403 = vmax.xlane.f32.xlu0 %v3387
    %v3404 = vpop.xlane.xlu0 %3403
    %3405 = vmax.xlane.f32.xlu0 %v3388
    %v3406 = vpop.xlane.xlu0 %3405
    %3407 = vmax.xlane.f32.xlu0 %v3389
    %v3408 = vpop.xlane.xlu0 %3407
    %3409 = vmax.xlane.f32.xlu0 %v3390
    %v3410 = vpop.xlane.xlu0 %3409
    %3411 = vmax.xlane.f32.xlu0 %v3391
    %v3412 = vpop.xlane.xlu0 %3411
    %3413 = vmax.xlane.f32.xlu0 %v3392
    %v3414 = vpop.xlane.xlu0 %3413
    %3415 = vmax.xlane.f32.xlu0 %v3393
    %v3416 = vpop.xlane.xlu0 %3415
    %3417 = vmax.xlane.f32.xlu0 %v3394
    %v3418 = vpop.xlane.xlu0 %3417
    %3419 = vmax.xlane.f32.xlu0 %v3395
    %v3420 = vpop.xlane.xlu0 %3419
    %3421 = vmax.xlane.f32.xlu0 %v3396
    %v3422 = vpop.xlane.xlu0 %3421
    %3423 = vmax.xlane.f32.xlu0 %v3397
    %v3424 = vpop.xlane.xlu0 %3423
    %3425 = vmax.xlane.f32.xlu0 %v3398
    %v3426 = vpop.xlane.xlu0 %3425
    %3427 = vmax.xlane.f32.xlu0 %v3399
    %v3428 = vpop.xlane.xlu0 %3427
    %3429 = vmax.xlane.f32.xlu0 %v3400
    %v3430 = vpop.xlane.xlu0 %3429
    %3431 = vmax.xlane.f32.xlu0 %v3401
    %v3432 = vpop.xlane.xlu0 %3431
    %3433 = vmax.xlane.f32.xlu0 %v3402
    %v3434 = vpop.xlane.xlu0 %3433
    %v3435 = vsub.f32 %v3387, %v3404
    %v3436 = vsub.f32 %v3388, %v3406
    %v3437 = vsub.f32 %v3389, %v3408
    %v3438 = vsub.f32 %v3390, %v3410
    %v3439 = vsub.f32 %v3391, %v3412
    %v3440 = vsub.f32 %v3392, %v3414
    %v3441 = vsub.f32 %v3393, %v3416
    %v3442 = vsub.f32 %v3394, %v3418
    %v3443 = vsub.f32 %v3395, %v3420
    %v3444 = vsub.f32 %v3396, %v3422
    %v3445 = vsub.f32 %v3397, %v3424
    %v3446 = vsub.f32 %v3398, %v3426
    %v3447 = vsub.f32 %v3399, %v3428
    %v3448 = vsub.f32 %v3400, %v3430
    %v3449 = vsub.f32 %v3401, %v3432
    %v3450 = vsub.f32 %v3402, %v3434
    %v3451 = vmul.f32 %v3435, 1.442695
    %v3452 = vpow.pop %v3451
    %v3453 = vmul.f32 %v3436, 1.442695
    %v3454 = vpow.pop %v3453
    %v3455 = vmul.f32 %v3437, 1.442695
    %v3456 = vpow.pop %v3455
    %v3457 = vmul.f32 %v3438, 1.442695
    %v3458 = vpow.pop %v3457
    %v3459 = vmul.f32 %v3439, 1.442695
    %v3460 = vpow.pop %v3459
    %v3461 = vmul.f32 %v3440, 1.442695
    %v3462 = vpow.pop %v3461
    %v3463 = vmul.f32 %v3441, 1.442695
    %v3464 = vpow.pop %v3463
    %v3465 = vmul.f32 %v3442, 1.442695
    %v3466 = vpow.pop %v3465
    %v3467 = vmul.f32 %v3443, 1.442695
    %v3468 = vpow.pop %v3467
    %v3469 = vmul.f32 %v3444, 1.442695
    %v3470 = vpow.pop %v3469
    %v3471 = vmul.f32 %v3445, 1.442695
    %v3472 = vpow.pop %v3471
    %v3473 = vmul.f32 %v3446, 1.442695
    %v3474 = vpow.pop %v3473
    %v3475 = vmul.f32 %v3447, 1.442695
    %v3476 = vpow.pop %v3475
    %v3477 = vmul.f32 %v3448, 1.442695
    %v3478 = vpow.pop %v3477
    %v3479 = vmul.f32 %v3449, 1.442695
    %v3480 = vpow.pop %v3479
    %v3481 = vmul.f32 %v3450, 1.442695
    %v3482 = vpow.pop %v3481
    %3483 = vadd.xlane.f32.xlu0 %v3452
    %v3484 = vpop.xlane.xlu0 %3483
    %3485 = vadd.xlane.f32.xlu0 %v3454
    %v3486 = vpop.xlane.xlu0 %3485
    %3487 = vadd.xlane.f32.xlu0 %v3456
    %v3488 = vpop.xlane.xlu0 %3487
    %3489 = vadd.xlane.f32.xlu0 %v3458
    %v3490 = vpop.xlane.xlu0 %3489
    %3491 = vadd.xlane.f32.xlu0 %v3460
    %v3492 = vpop.xlane.xlu0 %3491
    %3493 = vadd.xlane.f32.xlu0 %v3462
    %v3494 = vpop.xlane.xlu0 %3493
    %3495 = vadd.xlane.f32.xlu0 %v3464
    %v3496 = vpop.xlane.xlu0 %3495
    %3497 = vadd.xlane.f32.xlu0 %v3466
    %v3498 = vpop.xlane.xlu0 %3497
    %3499 = vadd.xlane.f32.xlu0 %v3468
    %v3500 = vpop.xlane.xlu0 %3499
    %3501 = vadd.xlane.f32.xlu0 %v3470
    %v3502 = vpop.xlane.xlu0 %3501
    %3503 = vadd.xlane.f32.xlu0 %v3472
    %v3504 = vpop.xlane.xlu0 %3503
    %3505 = vadd.xlane.f32.xlu0 %v3474
    %v3506 = vpop.xlane.xlu0 %3505
    %3507 = vadd.xlane.f32.xlu0 %v3476
    %v3508 = vpop.xlane.xlu0 %3507
    %3509 = vadd.xlane.f32.xlu0 %v3478
    %v3510 = vpop.xlane.xlu0 %3509
    %3511 = vadd.xlane.f32.xlu0 %v3480
    %v3512 = vpop.xlane.xlu0 %3511
    %3513 = vadd.xlane.f32.xlu0 %v3482
    %v3514 = vpop.xlane.xlu0 %3513
    %v3515 = vrcp.pop %v3484
    %v3516 = vrcp.pop %v3486
    %v3517 = vrcp.pop %v3488
    %v3518 = vrcp.pop %v3490
    %v3519 = vrcp.pop %v3492
    %v3520 = vrcp.pop %v3494
    %v3521 = vrcp.pop %v3496
    %v3522 = vrcp.pop %v3498
    %v3523 = vrcp.pop %v3500
    %v3524 = vrcp.pop %v3502
    %v3525 = vrcp.pop %v3504
    %v3526 = vrcp.pop %v3506
    %v3527 = vrcp.pop %v3508
    %v3528 = vrcp.pop %v3510
    %v3529 = vrcp.pop %v3512
    %v3530 = vrcp.pop %v3514
    %v3531 = vmul.f32 %v3452, %v3515
    %v3532 = vmul.f32 %v3454, %v3516
    %v3533 = vmul.f32 %v3456, %v3517
    %v3534 = vmul.f32 %v3458, %v3518
    %v3535 = vmul.f32 %v3460, %v3519
    %v3536 = vmul.f32 %v3462, %v3520
    %v3537 = vmul.f32 %v3464, %v3521
    %v3538 = vmul.f32 %v3466, %v3522
    %v3539 = vmul.f32 %v3468, %v3523
    %v3540 = vmul.f32 %v3470, %v3524
    %v3541 = vmul.f32 %v3472, %v3525
    %v3542 = vmul.f32 %v3474, %v3526
    %v3543 = vmul.f32 %v3476, %v3527
    %v3544 = vmul.f32 %v3478, %v3528
    %v3545 = vmul.f32 %v3480, %v3529
    %v3546 = vmul.f32 %v3482, %v3530
    %v3547 = vpack.c.bf16 %v3532, %v3531
    %v3548 = vpack.c.bf16 %v3534, %v3533
    %v3549 = vpack.c.bf16 %v3536, %v3535
    %v3550 = vpack.c.bf16 %v3538, %v3537
    %v3551 = vpack.c.bf16 %v3540, %v3539
    %v3552 = vpack.c.bf16 %v3542, %v3541
    %v3553 = vpack.c.bf16 %v3544, %v3543
    %v3554 = vpack.c.bf16 %v3546, %v3545
    %v3555 = vpack.c.bf16 %v2691, %v2687
    %v3556 = vpack.c.bf16 %v2693, %v2689
    %v3557 = vpack.c.bf16 %v2917, %v2913
    %v3558 = vpack.c.bf16 %v2919, %v2915
    %v3559 = vpack.c.bf16 %v2701, %v2697
    %v3560 = vpack.c.bf16 %v2703, %v2699
    %v3561 = vpack.c.bf16 %v2927, %v2923
    %v3562 = vpack.c.bf16 %v2929, %v2925
    %v3563 = vpack.c.bf16 %v2711, %v2707
    %v3564 = vpack.c.bf16 %v2713, %v2709
    %v3565 = vpack.c.bf16 %v2937, %v2933
    %v3566 = vpack.c.bf16 %v2939, %v2935
    %v3567 = vpack.c.bf16 %v2721, %v2717
    %v3568 = vpack.c.bf16 %v2723, %v2719
    %v3569 = vpack.c.bf16 %v2947, %v2943
    %v3570 = vpack.c.bf16 %v2949, %v2945
    %v3571 = vpack.c.bf16 %v2731, %v2727
    %v3572 = vpack.c.bf16 %v2733, %v2729
    %v3573 = vpack.c.bf16 %v2957, %v2953
    %v3574 = vpack.c.bf16 %v2959, %v2955
    %v3575 = vpack.c.bf16 %v2741, %v2737
    %v3576 = vpack.c.bf16 %v2743, %v2739
    %v3577 = vpack.c.bf16 %v2967, %v2963
    %v3578 = vpack.c.bf16 %v2969, %v2965
    %v3579 = vpack.c.bf16 %v2751, %v2747
    %v3580 = vpack.c.bf16 %v2753, %v2749
    %v3581 = vpack.c.bf16 %v2977, %v2973
    %v3582 = vpack.c.bf16 %v2979, %v2975
    %v3583 = vpack.c.bf16 %v2761, %v2757
    %v3584 = vpack.c.bf16 %v2763, %v2759
    %v3585 = vpack.c.bf16 %v2987, %v2983
    %v3586 = vpack.c.bf16 %v2989, %v2985
    %v3587 = vld [vmem:[#allocation22] sm:$0xf]
    %v3589 = vlaneseq
    %v3590 = vshrl.u32 %v3589, 7
    %v3591 = vsub.s32 0, %v3590
    %v3592 = vrot.slane %v3587, %v3591
    %v3593 = vlaneseq
    %v3594 = vshrl.u32 %v3593, 7
    %v3595 = vsub.s32 1, %v3594
    %v3596 = vrot.slane %v3587, %v3595
    %v3597 = vlaneseq
    %v3598 = vshrl.u32 %v3597, 7
    %v3599 = vsub.s32 2, %v3598
    %v3600 = vrot.slane %v3587, %v3599
    %v3601 = vlaneseq
    %v3602 = vshrl.u32 %v3601, 7
    %v3603 = vsub.s32 3, %v3602
    %v3604 = vrot.slane %v3587, %v3603
    %3609 = vmatprep.subr.bf16.mxu0 %v3556
    %3610 = vmatpush1.bf16.msra.mxu0 %v3555
    %3611 = vmatprep.subr.bf16.mxu0 %v3560
    %3612 = vmatpush1.bf16.msra.mxu0 %v3559
    %3613 = vmatprep.subr.bf16.mxu0 %v3564
    %3614 = vmatpush1.bf16.msra.mxu0 %v3563
    %3615 = vmatprep.subr.bf16.mxu0 %v3568
    %3616 = vmatpush1.bf16.msra.mxu0 %v3567
    %3617 = vmatprep.subr.bf16.mxu0 %v3572
    %3618 = vmatpush1.bf16.msra.mxu0 %v3571
    %3619 = vmatprep.subr.bf16.mxu0 %v3576
    %3620 = vmatpush1.bf16.msra.mxu0 %v3575
    %3621 = vmatprep.subr.bf16.mxu0 %v3580
    %3622 = vmatpush1.bf16.msra.mxu0 %v3579
    %3623 = vmatprep.subr.bf16.mxu0 %v3584
    %3624 = vmatpush1.bf16.msra.mxu0 %v3583
    %3625 = vmatprep.subr.bf16.mxu0 0
    %3626 = vmatpush1.bf16.msra.mxu0 0
    %3627 = vmatprep.subr.bf16.mxu0 0
    %3628 = vmatpush1.bf16.msra.mxu0 0
    %3629 = vmatprep.subr.bf16.mxu0 0
    %3630 = vmatpush1.bf16.msra.mxu0 0
    %3631 = vmatprep.subr.bf16.mxu0 0
    %3632 = vmatpush1.bf16.msra.mxu0 0
    %3633 = vmatprep.subr.bf16.mxu0 0
    %3634 = vmatpush1.bf16.msra.mxu0 0
    %3635 = vmatprep.subr.bf16.mxu0 0
    %3636 = vmatpush1.bf16.msra.mxu0 0
    %3637 = vmatprep.subr.bf16.mxu0 0
    %3638 = vmatpush1.bf16.msra.mxu0 0
    %3639 = vmatprep.subr.bf16.mxu0 0
    %3640 = vmatpush1.bf16.msra.mxu0 0
    %3641 = vmatprep.mubr.bf16.mxu0 0
    %3642 = vmatmul.mubr.bf16.gmra.mrb[0].mxu0 %v3547
    %v3643 = vpop.f32.mrb[0].mxu0
    %v3644 = vadd.f32 %v3592, %v3643
    %v3645 = vpop.f32.mrb[0].mxu0
    %v3646 = vadd.f32 %v3596, %v3645
    %v3647 = vpop.f32.mrb[0].mxu0
    %v3648 = vadd.f32 %v3592, %v3647
    %v3649 = vpop.f32.mrb[0].mxu0
    %v3650 = vadd.f32 %v3596, %v3649
    %3651 = vmatprep.mubr.bf16.mxu0 0
    %3652 = vmatmul.mubr.bf16.gmra.mrb[0].mxu0 %v3548
    %v3653 = vpop.f32.mrb[0].mxu0
    %v3654 = vadd.f32 %v3592, %v3653
    %v3655 = vpop.f32.mrb[0].mxu0
    %v3656 = vadd.f32 %v3596, %v3655
    %v3657 = vpop.f32.mrb[0].mxu0
    %v3658 = vadd.f32 %v3592, %v3657
    %v3659 = vpop.f32.mrb[0].mxu0
    %v3660 = vadd.f32 %v3596, %v3659
    %3661 = vmatprep.mubr.bf16.mxu0 0
    %3662 = vmatmul.mubr.bf16.gmra.mrb[0].mxu0 %v3549
    %v3663 = vpop.f32.mrb[0].mxu0
    %v3664 = vadd.f32 %v3592, %v3663
    %v3665 = vpop.f32.mrb[0].mxu0
    %v3666 = vadd.f32 %v3596, %v3665
    %v3667 = vpop.f32.mrb[0].mxu0
    %v3668 = vadd.f32 %v3592, %v3667
    %v3669 = vpop.f32.mrb[0].mxu0
    %v3670 = vadd.f32 %v3596, %v3669
    %3671 = vmatprep.mubr.bf16.mxu0 0
    %3672 = vmatmul.mubr.bf16.gmra.mrb[0].mxu0 %v3550
    %v3673 = vpop.f32.mrb[0].mxu0
    %v3674 = vadd.f32 %v3592, %v3673
    %v3675 = vpop.f32.mrb[0].mxu0
    %v3676 = vadd.f32 %v3596, %v3675
    %v3677 = vpop.f32.mrb[0].mxu0
    %v3678 = vadd.f32 %v3592, %v3677
    %v3679 = vpop.f32.mrb[0].mxu0
    %v3680 = vadd.f32 %v3596, %v3679
    %3681 = vmatprep.mubr.bf16.mxu0 0
    %3682 = vmatmul.mubr.bf16.gmra.mrb[0].mxu0 %v3551
    %v3683 = vpop.f32.mrb[0].mxu0
    %v3684 = vadd.f32 %v3592, %v3683
    %v3685 = vpop.f32.mrb[0].mxu0
    %v3686 = vadd.f32 %v3596, %v3685
    %v3687 = vpop.f32.mrb[0].mxu0
    %v3688 = vadd.f32 %v3592, %v3687
    %v3689 = vpop.f32.mrb[0].mxu0
    %v3690 = vadd.f32 %v3596, %v3689
    %3691 = vmatprep.mubr.bf16.mxu0 0
    %3692 = vmatmul.mubr.bf16.gmra.mrb[0].mxu0 %v3552
    %v3693 = vpop.f32.mrb[0].mxu0
    %v3694 = vadd.f32 %v3592, %v3693
    %v3695 = vpop.f32.mrb[0].mxu0
    %v3696 = vadd.f32 %v3596, %v3695
    %v3697 = vpop.f32.mrb[0].mxu0
    %v3698 = vadd.f32 %v3592, %v3697
    %v3699 = vpop.f32.mrb[0].mxu0
    %v3700 = vadd.f32 %v3596, %v3699
    %3701 = vmatprep.mubr.bf16.mxu0 0
    %3702 = vmatmul.mubr.bf16.gmra.mrb[0].mxu0 %v3553
    %v3703 = vpop.f32.mrb[0].mxu0
    %v3704 = vadd.f32 %v3592, %v3703
    %v3705 = vpop.f32.mrb[0].mxu0
    %v3706 = vadd.f32 %v3596, %v3705
    %v3707 = vpop.f32.mrb[0].mxu0
    %v3708 = vadd.f32 %v3592, %v3707
    %v3709 = vpop.f32.mrb[0].mxu0
    %v3710 = vadd.f32 %v3596, %v3709
    %3711 = vmatprep.mubr.bf16.mxu0 0
    %3712 = vmatmul.mubr.bf16.gmra.mrb[0].mxu0 %v3554
    %v3713 = vpop.f32.mrb[0].mxu0
    %v3714 = vadd.f32 %v3592, %v3713
    %v3715 = vpop.f32.mrb[0].mxu0
    %v3716 = vadd.f32 %v3596, %v3715
    %v3717 = vpop.f32.mrb[0].mxu0
    %v3718 = vadd.f32 %v3592, %v3717
    %v3719 = vpop.f32.mrb[0].mxu0
    %v3720 = vadd.f32 %v3596, %v3719
    %3721 = vdwg.mxu0
    %3722 = vmatprep.subr.bf16.mxu0 %v3558
    %3723 = vmatpush1.bf16.msra.mxu0 %v3557
    %3724 = vmatprep.subr.bf16.mxu0 %v3562
    %3725 = vmatpush1.bf16.msra.mxu0 %v3561
    %3726 = vmatprep.subr.bf16.mxu0 %v3566
    %3727 = vmatpush1.bf16.msra.mxu0 %v3565
    %3728 = vmatprep.subr.bf16.mxu0 %v3570
    %3729 = vmatpush1.bf16.msra.mxu0 %v3569
    %3730 = vmatprep.subr.bf16.mxu0 %v3574
    %3731 = vmatpush1.bf16.msra.mxu0 %v3573
    %3732 = vmatprep.subr.bf16.mxu0 %v3578
    %3733 = vmatpush1.bf16.msra.mxu0 %v3577
    %3734 = vmatprep.subr.bf16.mxu0 %v3582
    %3735 = vmatpush1.bf16.msra.mxu0 %v3581
    %3736 = vmatprep.subr.bf16.mxu0 %v3586
    %3737 = vmatpush1.bf16.msra.mxu0 %v3585
    %3738 = vmatprep.subr.bf16.mxu0 0
    %3739 = vmatpush1.bf16.msra.mxu0 0
    %3740 = vmatprep.subr.bf16.mxu0 0
    %3741 = vmatpush1.bf16.msra.mxu0 0
    %3742 = vmatprep.subr.bf16.mxu0 0
    %3743 = vmatpush1.bf16.msra.mxu0 0
    %3744 = vmatprep.subr.bf16.mxu0 0
    %3745 = vmatpush1.bf16.msra.mxu0 0
    %3746 = vmatprep.subr.bf16.mxu0 0
    %3747 = vmatpush1.bf16.msra.mxu0 0
    %3748 = vmatprep.subr.bf16.mxu0 0
    %3749 = vmatpush1.bf16.msra.mxu0 0
    %3750 = vmatprep.subr.bf16.mxu0 0
    %3751 = vmatpush1.bf16.msra.mxu0 0
    %3752 = vmatprep.subr.bf16.mxu0 0
    %3753 = vmatpush1.bf16.msra.mxu0 0
    %3754 = vmatprep.mubr.bf16.mxu0 0
    %3755 = vmatmul.mubr.bf16.gmra.mrb[0].mxu0 %v3547
    %v3756 = vpop.f32.mrb[0].mxu0
    %v3757 = vadd.f32 %v3600, %v3756
    %v3758 = vpop.f32.mrb[0].mxu0
    %v3759 = vadd.f32 %v3604, %v3758
    %v3760 = vpop.f32.mrb[0].mxu0
    %v3761 = vadd.f32 %v3600, %v3760
    %v3762 = vpop.f32.mrb[0].mxu0
    %v3763 = vadd.f32 %v3604, %v3762
    %3764 = vmatprep.mubr.bf16.mxu0 0
    %3765 = vmatmul.mubr.bf16.gmra.mrb[0].mxu0 %v3548
    %v3766 = vpop.f32.mrb[0].mxu0
    %v3767 = vadd.f32 %v3600, %v3766
    %v3768 = vpop.f32.mrb[0].mxu0
    %v3769 = vadd.f32 %v3604, %v3768
    %v3770 = vpop.f32.mrb[0].mxu0
    %v3771 = vadd.f32 %v3600, %v3770
    %v3772 = vpop.f32.mrb[0].mxu0
    %v3773 = vadd.f32 %v3604, %v3772
    %3774 = vmatprep.mubr.bf16.mxu0 0
    %3775 = vmatmul.mubr.bf16.gmra.mrb[0].mxu0 %v3549
    %v3776 = vpop.f32.mrb[0].mxu0
    %v3777 = vadd.f32 %v3600, %v3776
    %v3778 = vpop.f32.mrb[0].mxu0
    %v3779 = vadd.f32 %v3604, %v3778
    %v3780 = vpop.f32.mrb[0].mxu0
    %v3781 = vadd.f32 %v3600, %v3780
    %v3782 = vpop.f32.mrb[0].mxu0
    %v3783 = vadd.f32 %v3604, %v3782
    %3784 = vmatprep.mubr.bf16.mxu0 0
    %3785 = vmatmul.mubr.bf16.gmra.mrb[0].mxu0 %v3550
    %v3786 = vpop.f32.mrb[0].mxu0
    %v3787 = vadd.f32 %v3600, %v3786
    %v3788 = vpop.f32.mrb[0].mxu0
    %v3789 = vadd.f32 %v3604, %v3788
    %v3790 = vpop.f32.mrb[0].mxu0
    %v3791 = vadd.f32 %v3600, %v3790
    %v3792 = vpop.f32.mrb[0].mxu0
    %v3793 = vadd.f32 %v3604, %v3792
    %3794 = vmatprep.mubr.bf16.mxu0 0
    %3795 = vmatmul.mubr.bf16.gmra.mrb[0].mxu0 %v3551
    %v3796 = vpop.f32.mrb[0].mxu0
    %v3797 = vadd.f32 %v3600, %v3796
    %v3798 = vpop.f32.mrb[0].mxu0
    %v3799 = vadd.f32 %v3604, %v3798
    %v3800 = vpop.f32.mrb[0].mxu0
    %v3801 = vadd.f32 %v3600, %v3800
    %v3802 = vpop.f32.mrb[0].mxu0
    %v3803 = vadd.f32 %v3604, %v3802
    %3804 = vmatprep.mubr.bf16.mxu0 0
    %3805 = vmatmul.mubr.bf16.gmra.mrb[0].mxu0 %v3552
    %v3806 = vpop.f32.mrb[0].mxu0
    %v3807 = vadd.f32 %v3600, %v3806
    %v3808 = vpop.f32.mrb[0].mxu0
    %v3809 = vadd.f32 %v3604, %v3808
    %v3810 = vpop.f32.mrb[0].mxu0
    %v3811 = vadd.f32 %v3600, %v3810
    %v3812 = vpop.f32.mrb[0].mxu0
    %v3813 = vadd.f32 %v3604, %v3812
    %3814 = vmatprep.mubr.bf16.mxu0 0
    %3815 = vmatmul.mubr.bf16.gmra.mrb[0].mxu0 %v3553
    %v3816 = vpop.f32.mrb[0].mxu0
    %v3817 = vadd.f32 %v3600, %v3816
    %v3818 = vpop.f32.mrb[0].mxu0
    %v3819 = vadd.f32 %v3604, %v3818
    %v3820 = vpop.f32.mrb[0].mxu0
    %v3821 = vadd.f32 %v3600, %v3820
    %v3822 = vpop.f32.mrb[0].mxu0
    %v3823 = vadd.f32 %v3604, %v3822
    %3824 = vmatprep.mubr.bf16.mxu0 0
    %3825 = vmatmul.mubr.bf16.gmra.mrb[0].mxu0 %v3554
    %v3826 = vpop.f32.mrb[0].mxu0
    %v3827 = vadd.f32 %v3600, %v3826
    %v3828 = vpop.f32.mrb[0].mxu0
    %v3829 = vadd.f32 %v3604, %v3828
    %v3830 = vpop.f32.mrb[0].mxu0
    %v3831 = vadd.f32 %v3600, %v3830
    %v3832 = vpop.f32.mrb[0].mxu0
    %v3833 = vadd.f32 %v3604, %v3832
    %3834 = vdwg.mxu0
    %v3835 = vld [vmem:[#allocation23] sm:$0xf]
    %v3837 = vlaneseq
    %v3838 = vshrl.u32 %v3837, 7
    %v3839 = vsub.s32 0, %v3838
    %v3840 = vrot.slane %v3835, %v3839
    %v3841 = vlaneseq
    %v3842 = vshrl.u32 %v3841, 7
    %v3843 = vsub.s32 1, %v3842
    %v3844 = vrot.slane %v3835, %v3843
    %v3845 = vlaneseq
    %v3846 = vshrl.u32 %v3845, 7
    %v3847 = vsub.s32 2, %v3846
    %v3848 = vrot.slane %v3835, %v3847
    %v3849 = vlaneseq
    %v3850 = vshrl.u32 %v3849, 7
    %v3851 = vsub.s32 3, %v3850
    %v3852 = vrot.slane %v3835, %v3851
    %v3857 = vmul.f32 %v3644, %v3840
    %v3858 = vmul.f32 %v3646, %v3844
    %v3859 = vmul.f32 %v3757, %v3848
    %v3860 = vmul.f32 %v3759, %v3852
    %v3861 = vmul.f32 %v3648, %v3840
    %v3862 = vmul.f32 %v3650, %v3844
    %v3863 = vmul.f32 %v3761, %v3848
    %v3864 = vmul.f32 %v3763, %v3852
    %v3865 = vmul.f32 %v3654, %v3840
    %v3866 = vmul.f32 %v3656, %v3844
    %v3867 = vmul.f32 %v3767, %v3848
    %v3868 = vmul.f32 %v3769, %v3852
    %v3869 = vmul.f32 %v3658, %v3840
    %v3870 = vmul.f32 %v3660, %v3844
    %v3871 = vmul.f32 %v3771, %v3848
    %v3872 = vmul.f32 %v3773, %v3852
    %v3873 = vmul.f32 %v3664, %v3840
    %v3874 = vmul.f32 %v3666, %v3844
    %v3875 = vmul.f32 %v3777, %v3848
    %v3876 = vmul.f32 %v3779, %v3852
    %v3877 = vmul.f32 %v3668, %v3840
    %v3878 = vmul.f32 %v3670, %v3844
    %v3879 = vmul.f32 %v3781, %v3848
    %v3880 = vmul.f32 %v3783, %v3852
    %v3881 = vmul.f32 %v3674, %v3840
    %v3882 = vmul.f32 %v3676, %v3844
    %v3883 = vmul.f32 %v3787, %v3848
    %v3884 = vmul.f32 %v3789, %v3852
    %v3885 = vmul.f32 %v3678, %v3840
    %v3886 = vmul.f32 %v3680, %v3844
    %v3887 = vmul.f32 %v3791, %v3848
    %v3888 = vmul.f32 %v3793, %v3852
    %v3889 = vmul.f32 %v3684, %v3840
    %v3890 = vmul.f32 %v3686, %v3844
    %v3891 = vmul.f32 %v3797, %v3848
    %v3892 = vmul.f32 %v3799, %v3852
    %v3893 = vmul.f32 %v3688, %v3840
    %v3894 = vmul.f32 %v3690, %v3844
    %v3895 = vmul.f32 %v3801, %v3848
    %v3896 = vmul.f32 %v3803, %v3852
    %v3897 = vmul.f32 %v3694, %v3840
    %v3898 = vmul.f32 %v3696, %v3844
    %v3899 = vmul.f32 %v3807, %v3848
    %v3900 = vmul.f32 %v3809, %v3852
    %v3901 = vmul.f32 %v3698, %v3840
    %v3902 = vmul.f32 %v3700, %v3844
    %v3903 = vmul.f32 %v3811, %v3848
    %v3904 = vmul.f32 %v3813, %v3852
    %v3905 = vmul.f32 %v3704, %v3840
    %v3906 = vmul.f32 %v3706, %v3844
    %v3907 = vmul.f32 %v3817, %v3848
    %v3908 = vmul.f32 %v3819, %v3852
    %v3909 = vmul.f32 %v3708, %v3840
    %v3910 = vmul.f32 %v3710, %v3844
    %v3911 = vmul.f32 %v3821, %v3848
    %v3912 = vmul.f32 %v3823, %v3852
    %v3913 = vmul.f32 %v3714, %v3840
    %v3914 = vmul.f32 %v3716, %v3844
    %v3915 = vmul.f32 %v3827, %v3848
    %v3916 = vmul.f32 %v3829, %v3852
    %v3917 = vmul.f32 %v3718, %v3840
    %v3918 = vmul.f32 %v3720, %v3844
    %v3919 = vmul.f32 %v3831, %v3848
    %v3920 = vmul.f32 %v3833, %v3852
    %v3921 = vld [vmem:[#allocation25] sm:$0xf]
    %v3923 = vlaneseq
    %v3924 = vshrl.u32 %v3923, 7
    %v3925 = vsub.s32 0, %v3924
    %v3926 = vrot.slane %v3921, %v3925
    %v3927 = vlaneseq
    %v3928 = vshrl.u32 %v3927, 7
    %v3929 = vsub.s32 1, %v3928
    %v3930 = vrot.slane %v3921, %v3929
    %v3931 = vlaneseq
    %v3932 = vshrl.u32 %v3931, 7
    %v3933 = vsub.s32 2, %v3932
    %v3934 = vrot.slane %v3921, %v3933
    %v3935 = vlaneseq
    %v3936 = vshrl.u32 %v3935, 7
    %v3937 = vsub.s32 3, %v3936
    %v3938 = vrot.slane %v3921, %v3937
    %v3943 = vadd.f32 %v3857, %v3926
    %v3944 = vadd.f32 %v3858, %v3930
    %v3945 = vadd.f32 %v3859, %v3934
    %v3946 = vadd.f32 %v3860, %v3938
    %v3947 = vadd.f32 %v3861, %v3926
    %v3948 = vadd.f32 %v3862, %v3930
    %v3949 = vadd.f32 %v3863, %v3934
    %v3950 = vadd.f32 %v3864, %v3938
    %v3951 = vadd.f32 %v3865, %v3926
    %v3952 = vadd.f32 %v3866, %v3930
    %v3953 = vadd.f32 %v3867, %v3934
    %v3954 = vadd.f32 %v3868, %v3938
    %v3955 = vadd.f32 %v3869, %v3926
    %v3956 = vadd.f32 %v3870, %v3930
    %v3957 = vadd.f32 %v3871, %v3934
    %v3958 = vadd.f32 %v3872, %v3938
    %v3959 = vadd.f32 %v3873, %v3926
    %v3960 = vadd.f32 %v3874, %v3930
    %v3961 = vadd.f32 %v3875, %v3934
    %v3962 = vadd.f32 %v3876, %v3938
    %v3963 = vadd.f32 %v3877, %v3926
    %v3964 = vadd.f32 %v3878, %v3930
    %v3965 = vadd.f32 %v3879, %v3934
    %v3966 = vadd.f32 %v3880, %v3938
    %v3967 = vadd.f32 %v3881, %v3926
    %v3968 = vadd.f32 %v3882, %v3930
    %v3969 = vadd.f32 %v3883, %v3934
    %v3970 = vadd.f32 %v3884, %v3938
    %v3971 = vadd.f32 %v3885, %v3926
    %v3972 = vadd.f32 %v3886, %v3930
    %v3973 = vadd.f32 %v3887, %v3934
    %v3974 = vadd.f32 %v3888, %v3938
    %v3975 = vadd.f32 %v3889, %v3926
    %v3976 = vadd.f32 %v3890, %v3930
    %v3977 = vadd.f32 %v3891, %v3934
    %v3978 = vadd.f32 %v3892, %v3938
    %v3979 = vadd.f32 %v3893, %v3926
    %v3980 = vadd.f32 %v3894, %v3930
    %v3981 = vadd.f32 %v3895, %v3934
    %v3982 = vadd.f32 %v3896, %v3938
    %v3983 = vadd.f32 %v3897, %v3926
    %v3984 = vadd.f32 %v3898, %v3930
    %v3985 = vadd.f32 %v3899, %v3934
    %v3986 = vadd.f32 %v3900, %v3938
    %v3987 = vadd.f32 %v3901, %v3926
    %v3988 = vadd.f32 %v3902, %v3930
    %v3989 = vadd.f32 %v3903, %v3934
    %v3990 = vadd.f32 %v3904, %v3938
    %v3991 = vadd.f32 %v3905, %v3926
    %v3992 = vadd.f32 %v3906, %v3930
    %v3993 = vadd.f32 %v3907, %v3934
    %v3994 = vadd.f32 %v3908, %v3938
    %v3995 = vadd.f32 %v3909, %v3926
    %v3996 = vadd.f32 %v3910, %v3930
    %v3997 = vadd.f32 %v3911, %v3934
    %v3998 = vadd.f32 %v3912, %v3938
    %v3999 = vadd.f32 %v3913, %v3926
    %v4000 = vadd.f32 %v3914, %v3930
    %v4001 = vadd.f32 %v3915, %v3934
    %v4002 = vadd.f32 %v3916, %v3938
    %v4003 = vadd.f32 %v3917, %v3926
    %v4004 = vadd.f32 %v3918, %v3930
    %v4005 = vadd.f32 %v3919, %v3934
    %v4006 = vadd.f32 %v3920, %v3938
    %v4007 = vmax.f32 %v3943, 0.0
    %v4008 = vmax.f32 %v3944, 0.0
    %v4009 = vmax.f32 %v3945, 0.0
    %v4010 = vmax.f32 %v3946, 0.0
    %v4011 = vmax.f32 %v3947, 0.0
    %v4012 = vmax.f32 %v3948, 0.0
    %v4013 = vmax.f32 %v3949, 0.0
    %v4014 = vmax.f32 %v3950, 0.0
    %v4015 = vmax.f32 %v3951, 0.0
    %v4016 = vmax.f32 %v3952, 0.0
    %v4017 = vmax.f32 %v3953, 0.0
    %v4018 = vmax.f32 %v3954, 0.0
    %v4019 = vmax.f32 %v3955, 0.0
    %v4020 = vmax.f32 %v3956, 0.0
    %v4021 = vmax.f32 %v3957, 0.0
    %v4022 = vmax.f32 %v3958, 0.0
    %v4023 = vmax.f32 %v3959, 0.0
    %v4024 = vmax.f32 %v3960, 0.0
    %v4025 = vmax.f32 %v3961, 0.0
    %v4026 = vmax.f32 %v3962, 0.0
    %v4027 = vmax.f32 %v3963, 0.0
    %v4028 = vmax.f32 %v3964, 0.0
    %v4029 = vmax.f32 %v3965, 0.0
    %v4030 = vmax.f32 %v3966, 0.0
    %v4031 = vmax.f32 %v3967, 0.0
    %v4032 = vmax.f32 %v3968, 0.0
    %v4033 = vmax.f32 %v3969, 0.0
    %v4034 = vmax.f32 %v3970, 0.0
    %v4035 = vmax.f32 %v3971, 0.0
    %v4036 = vmax.f32 %v3972, 0.0
    %v4037 = vmax.f32 %v3973, 0.0
    %v4038 = vmax.f32 %v3974, 0.0
    %v4039 = vmax.f32 %v3975, 0.0
    %v4040 = vmax.f32 %v3976, 0.0
    %v4041 = vmax.f32 %v3977, 0.0
    %v4042 = vmax.f32 %v3978, 0.0
    %v4043 = vmax.f32 %v3979, 0.0
    %v4044 = vmax.f32 %v3980, 0.0
    %v4045 = vmax.f32 %v3981, 0.0
    %v4046 = vmax.f32 %v3982, 0.0
    %v4047 = vmax.f32 %v3983, 0.0
    %v4048 = vmax.f32 %v3984, 0.0
    %v4049 = vmax.f32 %v3985, 0.0
    %v4050 = vmax.f32 %v3986, 0.0
    %v4051 = vmax.f32 %v3987, 0.0
    %v4052 = vmax.f32 %v3988, 0.0
    %v4053 = vmax.f32 %v3989, 0.0
    %v4054 = vmax.f32 %v3990, 0.0
    %v4055 = vmax.f32 %v3991, 0.0
    %v4056 = vmax.f32 %v3992, 0.0
    %v4057 = vmax.f32 %v3993, 0.0
    %v4058 = vmax.f32 %v3994, 0.0
    %v4059 = vmax.f32 %v3995, 0.0
    %v4060 = vmax.f32 %v3996, 0.0
    %v4061 = vmax.f32 %v3997, 0.0
    %v4062 = vmax.f32 %v3998, 0.0
    %v4063 = vmax.f32 %v3999, 0.0
    %v4064 = vmax.f32 %v4000, 0.0
    %v4065 = vmax.f32 %v4001, 0.0
    %v4066 = vmax.f32 %v4002, 0.0
    %v4067 = vmax.f32 %v4003, 0.0
    %v4068 = vmax.f32 %v4004, 0.0
    %v4069 = vmax.f32 %v4005, 0.0
    %v4070 = vmax.f32 %v4006, 0.0
    %v4071 = vpack.c.bf16 %v4011, %v4007
    %v4072 = vpack.c.bf16 %v4012, %v4008
    %v4073 = vpack.c.bf16 %v4013, %v4009
    %v4074 = vpack.c.bf16 %v4014, %v4010
    %v4075 = vpack.c.bf16 %v4019, %v4015
    %v4076 = vpack.c.bf16 %v4020, %v4016
    %v4077 = vpack.c.bf16 %v4021, %v4017
    %v4078 = vpack.c.bf16 %v4022, %v4018
    %v4079 = vpack.c.bf16 %v4027, %v4023
    %v4080 = vpack.c.bf16 %v4028, %v4024
    %v4081 = vpack.c.bf16 %v4029, %v4025
    %v4082 = vpack.c.bf16 %v4030, %v4026
    %v4083 = vpack.c.bf16 %v4035, %v4031
    %v4084 = vpack.c.bf16 %v4036, %v4032
    %v4085 = vpack.c.bf16 %v4037, %v4033
    %v4086 = vpack.c.bf16 %v4038, %v4034
    %v4087 = vpack.c.bf16 %v4043, %v4039
    %v4088 = vpack.c.bf16 %v4044, %v4040
    %v4089 = vpack.c.bf16 %v4045, %v4041
    %v4090 = vpack.c.bf16 %v4046, %v4042
    %v4091 = vpack.c.bf16 %v4051, %v4047
    %v4092 = vpack.c.bf16 %v4052, %v4048
    %v4093 = vpack.c.bf16 %v4053, %v4049
    %v4094 = vpack.c.bf16 %v4054, %v4050
    %v4095 = vpack.c.bf16 %v4059, %v4055
    %v4096 = vpack.c.bf16 %v4060, %v4056
    %v4097 = vpack.c.bf16 %v4061, %v4057
    %v4098 = vpack.c.bf16 %v4062, %v4058
    %v4099 = vpack.c.bf16 %v4067, %v4063
    %v4100 = vpack.c.bf16 %v4068, %v4064
    %v4101 = vpack.c.bf16 %v4069, %v4065
    %v4102 = vpack.c.bf16 %v4070, %v4066
    %4103 = vmatprep.subr.bf16.mxu0 %v4072
    %4104 = vmatpush1.bf16.msra.mxu0 %v4071
    %4105 = vmatprep.subr.bf16.mxu0 %v4076
    %4106 = vmatpush1.bf16.msra.mxu0 %v4075
    %4107 = vmatprep.subr.bf16.mxu0 %v4080
    %4108 = vmatpush1.bf16.msra.mxu0 %v4079
    %4109 = vmatprep.subr.bf16.mxu0 %v4084
    %4110 = vmatpush1.bf16.msra.mxu0 %v4083
    %4111 = vmatprep.subr.bf16.mxu0 %v4088
    %4112 = vmatpush1.bf16.msra.mxu0 %v4087
    %4113 = vmatprep.subr.bf16.mxu0 %v4092
    %4114 = vmatpush1.bf16.msra.mxu0 %v4091
    %4115 = vmatprep.subr.bf16.mxu0 %v4096
    %4116 = vmatpush1.bf16.msra.mxu0 %v4095
    %4117 = vmatprep.subr.bf16.mxu0 %v4100
    %4118 = vmatpush1.bf16.msra.mxu0 %v4099
    %4119 = vmatprep.subr.bf16.mxu0 0
    %4120 = vmatpush1.bf16.msra.mxu0 0
    %4121 = vmatprep.subr.bf16.mxu0 0
    %4122 = vmatpush1.bf16.msra.mxu0 0
    %4123 = vmatprep.subr.bf16.mxu0 0
    %4124 = vmatpush1.bf16.msra.mxu0 0
    %4125 = vmatprep.subr.bf16.mxu0 0
    %4126 = vmatpush1.bf16.msra.mxu0 0
    %4127 = vmatprep.subr.bf16.mxu0 0
    %4128 = vmatpush1.bf16.msra.mxu0 0
    %4129 = vmatprep.subr.bf16.mxu0 0
    %4130 = vmatpush1.bf16.msra.mxu0 0
    %4131 = vmatprep.subr.bf16.mxu0 0
    %4132 = vmatpush1.bf16.msra.mxu0 0
    %4133 = vmatprep.subr.bf16.mxu0 0
    %4134 = vmatpush1.bf16.msra.mxu0 0
    %4135 = vmatprep.mubr.bf16.mxu0 0
    %4136 = vmatmul.mubr.bf16.gmra.mrb[0].mxu0 %v327
    %v4137 = vpop.f32.mrb[0].mxu0
    %v4138 = vadd.f32 0.0, %v4137
    %v4139 = vpop.f32.mrb[0].mxu0
    %v4140 = vadd.f32 0.0, %v4139
    %v4141 = vpop.f32.mrb[0].mxu0
    %v4142 = vpop.f32.mrb[0].mxu0
    %4143 = vdwg.mxu0
    %4144 = vmatprep.subr.bf16.mxu0 %v4074
    %4145 = vmatpush1.bf16.msra.mxu0 %v4073
    %4146 = vmatprep.subr.bf16.mxu0 %v4078
    %4147 = vmatpush1.bf16.msra.mxu0 %v4077
    %4148 = vmatprep.subr.bf16.mxu0 %v4082
    %4149 = vmatpush1.bf16.msra.mxu0 %v4081
    %4150 = vmatprep.subr.bf16.mxu0 %v4086
    %4151 = vmatpush1.bf16.msra.mxu0 %v4085
    %4152 = vmatprep.subr.bf16.mxu0 %v4090
    %4153 = vmatpush1.bf16.msra.mxu0 %v4089
    %4154 = vmatprep.subr.bf16.mxu0 %v4094
    %4155 = vmatpush1.bf16.msra.mxu0 %v4093
    %4156 = vmatprep.subr.bf16.mxu0 %v4098
    %4157 = vmatpush1.bf16.msra.mxu0 %v4097
    %4158 = vmatprep.subr.bf16.mxu0 %v4102
    %4159 = vmatpush1.bf16.msra.mxu0 %v4101
    %4160 = vmatprep.subr.bf16.mxu0 0
    %4161 = vmatpush1.bf16.msra.mxu0 0
    %4162 = vmatprep.subr.bf16.mxu0 0
    %4163 = vmatpush1.bf16.msra.mxu0 0
    %4164 = vmatprep.subr.bf16.mxu0 0
    %4165 = vmatpush1.bf16.msra.mxu0 0
    %4166 = vmatprep.subr.bf16.mxu0 0
    %4167 = vmatpush1.bf16.msra.mxu0 0
    %4168 = vmatprep.subr.bf16.mxu0 0
    %4169 = vmatpush1.bf16.msra.mxu0 0
    %4170 = vmatprep.subr.bf16.mxu0 0
    %4171 = vmatpush1.bf16.msra.mxu0 0
    %4172 = vmatprep.subr.bf16.mxu0 0
    %4173 = vmatpush1.bf16.msra.mxu0 0
    %4174 = vmatprep.subr.bf16.mxu0 0
    %4175 = vmatpush1.bf16.msra.mxu0 0
    %4176 = vmatprep.mubr.bf16.mxu0 0
    %4177 = vmatmul.mubr.bf16.gmra.mrb[0].mxu0 %v327
    %v4178 = vpop.f32.mrb[0].mxu0
    %v4179 = vadd.f32 0.0, %v4178
    %v4180 = vpop.f32.mrb[0].mxu0
    %v4181 = vadd.f32 0.0, %v4180
    %v4182 = vpop.f32.mrb[0].mxu0
    %v4183 = vpop.f32.mrb[0].mxu0
    %4184 = vdwg.mxu0
    %4185 = vmatprep.subr.bf16.mxu0 %v1740
    %4186 = vmatpush1.bf16.msra.mxu0 %v1739
    %4187 = vmatprep.subr.bf16.mxu0 %v1744
    %4188 = vmatpush1.bf16.msra.mxu0 %v1743
    %4189 = vmatprep.subr.bf16.mxu0 %v1748
    %4190 = vmatpush1.bf16.msra.mxu0 %v1747
    %4191 = vmatprep.subr.bf16.mxu0 %v1752
    %4192 = vmatpush1.bf16.msra.mxu0 %v1751
    %4193 = vmatprep.subr.bf16.mxu0 %v1756
    %4194 = vmatpush1.bf16.msra.mxu0 %v1755
    %4195 = vmatprep.subr.bf16.mxu0 %v1760
    %4196 = vmatpush1.bf16.msra.mxu0 %v1759
    %4197 = vmatprep.subr.bf16.mxu0 %v1764
    %4198 = vmatpush1.bf16.msra.mxu0 %v1763
    %4199 = vmatprep.subr.bf16.mxu0 %v1768
    %4200 = vmatpush1.bf16.msra.mxu0 %v1767
    %4201 = vmatprep.subr.bf16.mxu0 0
    %4202 = vmatpush1.bf16.msra.mxu0 0
    %4203 = vmatprep.subr.bf16.mxu0 0
    %4204 = vmatpush1.bf16.msra.mxu0 0
    %4205 = vmatprep.subr.bf16.mxu0 0
    %4206 = vmatpush1.bf16.msra.mxu0 0
    %4207 = vmatprep.subr.bf16.mxu0 0
    %4208 = vmatpush1.bf16.msra.mxu0 0
    %4209 = vmatprep.subr.bf16.mxu0 0
    %4210 = vmatpush1.bf16.msra.mxu0 0
    %4211 = vmatprep.subr.bf16.mxu0 0
    %4212 = vmatpush1.bf16.msra.mxu0 0
    %4213 = vmatprep.subr.bf16.mxu0 0
    %4214 = vmatpush1.bf16.msra.mxu0 0
    %4215 = vmatprep.subr.bf16.mxu0 0
    %4216 = vmatpush1.bf16.msra.mxu0 0
    %4217 = vmatprep.mubr.bf16.mxu0 0
    %4218 = vmatmul.mubr.bf16.gmra.mrb[0].mxu0 %v327
    %v4219 = vpop.f32.mrb[0].mxu0
    %v4220 = vadd.f32 %v4138, %v4219
    %v4221 = vpop.f32.mrb[0].mxu0
    %v4222 = vadd.f32 %v4140, %v4221
    %v4223 = vpop.f32.mrb[0].mxu0
    %v4224 = vpop.f32.mrb[0].mxu0
    %4225 = vdwg.mxu0
    %4226 = vmatprep.subr.bf16.mxu0 %v1742
    %4227 = vmatpush1.bf16.msra.mxu0 %v1741
    %4228 = vmatprep.subr.bf16.mxu0 %v1746
    %4229 = vmatpush1.bf16.msra.mxu0 %v1745
    %4230 = vmatprep.subr.bf16.mxu0 %v1750
    %4231 = vmatpush1.bf16.msra.mxu0 %v1749
    %4232 = vmatprep.subr.bf16.mxu0 %v1754
    %4233 = vmatpush1.bf16.msra.mxu0 %v1753
    %4234 = vmatprep.subr.bf16.mxu0 %v1758
    %4235 = vmatpush1.bf16.msra.mxu0 %v1757
    %4236 = vmatprep.subr.bf16.mxu0 %v1762
    %4237 = vmatpush1.bf16.msra.mxu0 %v1761
    %4238 = vmatprep.subr.bf16.mxu0 %v1766
    %4239 = vmatpush1.bf16.msra.mxu0 %v1765
    %4240 = vmatprep.subr.bf16.mxu0 %v1770
    %4241 = vmatpush1.bf16.msra.mxu0 %v1769
    %4242 = vmatprep.subr.bf16.mxu0 0
    %4243 = vmatpush1.bf16.msra.mxu0 0
    %4244 = vmatprep.subr.bf16.mxu0 0
    %4245 = vmatpush1.bf16.msra.mxu0 0
    %4246 = vmatprep.subr.bf16.mxu0 0
    %4247 = vmatpush1.bf16.msra.mxu0 0
    %4248 = vmatprep.subr.bf16.mxu0 0
    %4249 = vmatpush1.bf16.msra.mxu0 0
    %4250 = vmatprep.subr.bf16.mxu0 0
    %4251 = vmatpush1.bf16.msra.mxu0 0
    %4252 = vmatprep.subr.bf16.mxu0 0
    %4253 = vmatpush1.bf16.msra.mxu0 0
    %4254 = vmatprep.subr.bf16.mxu0 0
    %4255 = vmatpush1.bf16.msra.mxu0 0
    %4256 = vmatprep.subr.bf16.mxu0 0
    %4257 = vmatpush1.bf16.msra.mxu0 0
    %4258 = vmatprep.mubr.bf16.mxu0 0
    %4259 = vmatmul.mubr.bf16.gmra.mrb[0].mxu0 %v327
    %v4260 = vpop.f32.mrb[0].mxu0
    %v4261 = vadd.f32 %v4179, %v4260
    %v4262 = vpop.f32.mrb[0].mxu0
    %v4263 = vadd.f32 %v4181, %v4262
    %v4264 = vpop.f32.mrb[0].mxu0
    %v4265 = vpop.f32.mrb[0].mxu0
    %4266 = vdwg.mxu0
    %v4267 = vpack.c.bf16 %v4220, %v4220
    %v4268 = vpack.c.bf16 %v4222, %v4222
    %v4269 = vpack.c.bf16 %v4261, %v4261
    %v4270 = vpack.c.bf16 %v4263, %v4263
    %v4271 = vld [vmem:[#allocation26] sm:$0xff]
    %v4272 = vld [vmem:[#allocation26 + $0x8] sm:$0xff]
    %v4273 = vld [vmem:[#allocation26 + $0x10] sm:$0xff]
    %v4274 = vld [vmem:[#allocation26 + $0x18] sm:$0xff]
    %v4275 = vld [vmem:[#allocation26 + $0x20] sm:$0xff]
    %v4276 = vld [vmem:[#allocation26 + $0x28] sm:$0xff]
    %v4277 = vld [vmem:[#allocation26 + $0x30] sm:$0xff]
    %v4278 = vld [vmem:[#allocation26 + $0x38] sm:$0xff]
    %v4279 = vld [vmem:[#allocation26 + $0x40] sm:$0xff]
    %v4280 = vld [vmem:[#allocation26 + $0x48] sm:$0xff]
    %v4281 = vld [vmem:[#allocation26 + $0x50] sm:$0xff]
    %v4282 = vld [vmem:[#allocation26 + $0x58] sm:$0xff]
    %v4283 = vld [vmem:[#allocation26 + $0x60] sm:$0xff]
    %v4284 = vld [vmem:[#allocation26 + $0x68] sm:$0xff]
    %v4285 = vld [vmem:[#allocation26 + $0x70] sm:$0xff]
    %v4286 = vld [vmem:[#allocation26 + $0x78] sm:$0xff]
    %v4287 = vld [vmem:[#allocation26 + $0x80] sm:$0xff]
    %v4288 = vld [vmem:[#allocation26 + $0x88] sm:$0xff]
    %v4289 = vld [vmem:[#allocation26 + $0x90] sm:$0xff]
    %v4290 = vld [vmem:[#allocation26 + $0x98] sm:$0xff]
    %v4291 = vld [vmem:[#allocation26 + $0xa0] sm:$0xff]
    %v4292 = vld [vmem:[#allocation26 + $0xa8] sm:$0xff]
    %v4293 = vld [vmem:[#allocation26 + $0xb0] sm:$0xff]
    %v4294 = vld [vmem:[#allocation26 + $0xb8] sm:$0xff]
    %v4295 = vld [vmem:[#allocation26 + $0xc0] sm:$0xff]
    %v4296 = vld [vmem:[#allocation26 + $0xc8] sm:$0xff]
    %v4297 = vld [vmem:[#allocation26 + $0xd0] sm:$0xff]
    %v4298 = vld [vmem:[#allocation26 + $0xd8] sm:$0xff]
    %v4299 = vld [vmem:[#allocation26 + $0xe0] sm:$0xff]
    %v4300 = vld [vmem:[#allocation26 + $0xe8] sm:$0xff]
    %v4301 = vld [vmem:[#allocation26 + $0xf0] sm:$0xff]
    %v4302 = vld [vmem:[#allocation26 + $0xf8] sm:$0xff]
    %v4303 = vld [vmem:[#allocation26 + $0x100] sm:$0xff]
    %v4304 = vld [vmem:[#allocation26 + $0x108] sm:$0xff]
    %v4305 = vld [vmem:[#allocation26 + $0x110] sm:$0xff]
    %v4306 = vld [vmem:[#allocation26 + $0x118] sm:$0xff]
    %v4307 = vld [vmem:[#allocation26 + $0x120] sm:$0xff]
    %v4308 = vld [vmem:[#allocation26 + $0x128] sm:$0xff]
    %v4309 = vld [vmem:[#allocation26 + $0x130] sm:$0xff]
    %v4310 = vld [vmem:[#allocation26 + $0x138] sm:$0xff]
    %v4311 = vld [vmem:[#allocation26 + $0x140] sm:$0xff]
    %v4312 = vld [vmem:[#allocation26 + $0x148] sm:$0xff]
    %v4313 = vld [vmem:[#allocation26 + $0x150] sm:$0xff]
    %v4314 = vld [vmem:[#allocation26 + $0x158] sm:$0xff]
    %v4315 = vld [vmem:[#allocation26 + $0x160] sm:$0xff]
    %v4316 = vld [vmem:[#allocation26 + $0x168] sm:$0xff]
    %v4317 = vld [vmem:[#allocation26 + $0x170] sm:$0xff]
    %v4318 = vld [vmem:[#allocation26 + $0x178] sm:$0xff]
    %v4319 = vld [vmem:[#allocation26 + $0x180] sm:$0xff]
    %v4320 = vld [vmem:[#allocation26 + $0x188] sm:$0xff]
    %v4321 = vld [vmem:[#allocation26 + $0x190] sm:$0xff]
    %v4322 = vld [vmem:[#allocation26 + $0x198] sm:$0xff]
    %v4323 = vld [vmem:[#allocation26 + $0x1a0] sm:$0xff]
    %v4324 = vld [vmem:[#allocation26 + $0x1a8] sm:$0xff]
    %v4325 = vld [vmem:[#allocation26 + $0x1b0] sm:$0xff]
    %v4326 = vld [vmem:[#allocation26 + $0x1b8] sm:$0xff]
    %v4327 = vld [vmem:[#allocation26 + $0x1c0] sm:$0xff]
    %v4328 = vld [vmem:[#allocation26 + $0x1c8] sm:$0xff]
    %v4329 = vld [vmem:[#allocation26 + $0x1d0] sm:$0xff]
    %v4330 = vld [vmem:[#allocation26 + $0x1d8] sm:$0xff]
    %v4331 = vld [vmem:[#allocation26 + $0x1e0] sm:$0xff]
    %v4332 = vld [vmem:[#allocation26 + $0x1e8] sm:$0xff]
    %v4333 = vld [vmem:[#allocation26 + $0x1f0] sm:$0xff]
    %v4334 = vld [vmem:[#allocation26 + $0x1f8] sm:$0xff]
    %v4335 = vld [vmem:[#allocation28] sm:$0x3]
    %v4337 = vlaneseq
    %v4338 = vshrl.u32 %v4337, 7
    %v4339 = vsub.s32 0, %v4338
    %v4340 = vrot.slane %v4335, %v4339
    %v4341 = vlaneseq
    %v4342 = vshrl.u32 %v4341, 7
    %v4343 = vsub.s32 1, %v4342
    %v4344 = vrot.slane %v4335, %v4343
    %v4411 = vunpack.c.l.b16 %v4271
    %v4412 = vunpack.c.h.b16 %v4271
    %v4413 = vunpack.c.l.b16 %v4272
    %v4414 = vunpack.c.h.b16 %v4272
    %v4415 = vunpack.c.l.b16 %v4273
    %v4416 = vunpack.c.h.b16 %v4273
    %v4417 = vunpack.c.l.b16 %v4274
    %v4418 = vunpack.c.h.b16 %v4274
    %v4419 = vunpack.c.l.b16 %v4275
    %v4420 = vunpack.c.h.b16 %v4275
    %v4421 = vunpack.c.l.b16 %v4276
    %v4422 = vunpack.c.h.b16 %v4276
    %v4423 = vunpack.c.l.b16 %v4277
    %v4424 = vunpack.c.h.b16 %v4277
    %v4425 = vunpack.c.l.b16 %v4278
    %v4426 = vunpack.c.h.b16 %v4278
    %v4427 = vunpack.c.l.b16 %v4279
    %v4428 = vunpack.c.h.b16 %v4279
    %v4429 = vunpack.c.l.b16 %v4280
    %v4430 = vunpack.c.h.b16 %v4280
    %v4431 = vunpack.c.l.b16 %v4281
    %v4432 = vunpack.c.h.b16 %v4281
    %v4433 = vunpack.c.l.b16 %v4282
    %v4434 = vunpack.c.h.b16 %v4282
    %v4435 = vunpack.c.l.b16 %v4283
    %v4436 = vunpack.c.h.b16 %v4283
    %v4437 = vunpack.c.l.b16 %v4284
    %v4438 = vunpack.c.h.b16 %v4284
    %v4439 = vunpack.c.l.b16 %v4285
    %v4440 = vunpack.c.h.b16 %v4285
    %v4441 = vunpack.c.l.b16 %v4286
    %v4442 = vunpack.c.h.b16 %v4286
    %v4443 = vunpack.c.l.b16 %v4287
    %v4444 = vunpack.c.h.b16 %v4287
    %v4445 = vunpack.c.l.b16 %v4288
    %v4446 = vunpack.c.h.b16 %v4288
    %v4447 = vunpack.c.l.b16 %v4289
    %v4448 = vunpack.c.h.b16 %v4289
    %v4449 = vunpack.c.l.b16 %v4290
    %v4450 = vunpack.c.h.b16 %v4290
    %v4451 = vunpack.c.l.b16 %v4291
    %v4452 = vunpack.c.h.b16 %v4291
    %v4453 = vunpack.c.l.b16 %v4292
    %v4454 = vunpack.c.h.b16 %v4292
    %v4455 = vunpack.c.l.b16 %v4293
    %v4456 = vunpack.c.h.b16 %v4293
    %v4457 = vunpack.c.l.b16 %v4294
    %v4458 = vunpack.c.h.b16 %v4294
    %v4459 = vunpack.c.l.b16 %v4295
    %v4460 = vunpack.c.h.b16 %v4295
    %v4461 = vunpack.c.l.b16 %v4296
    %v4462 = vunpack.c.h.b16 %v4296
    %v4463 = vunpack.c.l.b16 %v4297
    %v4464 = vunpack.c.h.b16 %v4297
    %v4465 = vunpack.c.l.b16 %v4298
    %v4466 = vunpack.c.h.b16 %v4298
    %v4467 = vunpack.c.l.b16 %v4299
    %v4468 = vunpack.c.h.b16 %v4299
    %v4469 = vunpack.c.l.b16 %v4300
    %v4470 = vunpack.c.h.b16 %v4300
    %v4471 = vunpack.c.l.b16 %v4301
    %v4472 = vunpack.c.h.b16 %v4301
    %v4473 = vunpack.c.l.b16 %v4302
    %v4474 = vunpack.c.h.b16 %v4302
    %v4475 = vunpack.c.l.b16 %v4303
    %v4476 = vunpack.c.h.b16 %v4303
    %v4477 = vunpack.c.l.b16 %v4304
    %v4478 = vunpack.c.h.b16 %v4304
    %v4479 = vunpack.c.l.b16 %v4305
    %v4480 = vunpack.c.h.b16 %v4305
    %v4481 = vunpack.c.l.b16 %v4306
    %v4482 = vunpack.c.h.b16 %v4306
    %v4483 = vunpack.c.l.b16 %v4307
    %v4484 = vunpack.c.h.b16 %v4307
    %v4485 = vunpack.c.l.b16 %v4308
    %v4486 = vunpack.c.h.b16 %v4308
    %v4487 = vunpack.c.l.b16 %v4309
    %v4488 = vunpack.c.h.b16 %v4309
    %v4489 = vunpack.c.l.b16 %v4310
    %v4490 = vunpack.c.h.b16 %v4310
    %v4491 = vunpack.c.l.b16 %v4311
    %v4492 = vunpack.c.h.b16 %v4311
    %v4493 = vunpack.c.l.b16 %v4312
    %v4494 = vunpack.c.h.b16 %v4312
    %v4495 = vunpack.c.l.b16 %v4313
    %v4496 = vunpack.c.h.b16 %v4313
    %v4497 = vunpack.c.l.b16 %v4314
    %v4498 = vunpack.c.h.b16 %v4314
    %v4499 = vunpack.c.l.b16 %v4315
    %v4500 = vunpack.c.h.b16 %v4315
    %v4501 = vunpack.c.l.b16 %v4316
    %v4502 = vunpack.c.h.b16 %v4316
    %v4503 = vunpack.c.l.b16 %v4317
    %v4504 = vunpack.c.h.b16 %v4317
    %v4505 = vunpack.c.l.b16 %v4318
    %v4506 = vunpack.c.h.b16 %v4318
    %v4507 = vunpack.c.l.b16 %v4319
    %v4508 = vunpack.c.h.b16 %v4319
    %v4509 = vunpack.c.l.b16 %v4320
    %v4510 = vunpack.c.h.b16 %v4320
    %v4511 = vunpack.c.l.b16 %v4321
    %v4512 = vunpack.c.h.b16 %v4321
    %v4513 = vunpack.c.l.b16 %v4322
    %v4514 = vunpack.c.h.b16 %v4322
    %v4515 = vunpack.c.l.b16 %v4323
    %v4516 = vunpack.c.h.b16 %v4323
    %v4517 = vunpack.c.l.b16 %v4324
    %v4518 = vunpack.c.h.b16 %v4324
    %v4519 = vunpack.c.l.b16 %v4325
    %v4520 = vunpack.c.h.b16 %v4325
    %v4521 = vunpack.c.l.b16 %v4326
    %v4522 = vunpack.c.h.b16 %v4326
    %v4523 = vunpack.c.l.b16 %v4327
    %v4524 = vunpack.c.h.b16 %v4327
    %v4525 = vunpack.c.l.b16 %v4328
    %v4526 = vunpack.c.h.b16 %v4328
    %v4527 = vunpack.c.l.b16 %v4329
    %v4528 = vunpack.c.h.b16 %v4329
    %v4529 = vunpack.c.l.b16 %v4330
    %v4530 = vunpack.c.h.b16 %v4330
    %v4531 = vunpack.c.l.b16 %v4331
    %v4532 = vunpack.c.h.b16 %v4331
    %v4533 = vunpack.c.l.b16 %v4332
    %v4534 = vunpack.c.h.b16 %v4332
    %v4535 = vunpack.c.l.b16 %v4333
    %v4536 = vunpack.c.h.b16 %v4333
    %v4537 = vunpack.c.l.b16 %v4334
    %v4538 = vunpack.c.h.b16 %v4334
    %v4539 = vpack.c.b16 %v4413, %v4411
    %v4540 = vpack.c.b16 %v4414, %v4412
    %v4541 = vpack.c.b16 %v4417, %v4415
    %v4542 = vpack.c.b16 %v4418, %v4416
    %v4543 = vpack.c.b16 %v4421, %v4419
    %v4544 = vpack.c.b16 %v4422, %v4420
    %v4545 = vpack.c.b16 %v4425, %v4423
    %v4546 = vpack.c.b16 %v4426, %v4424
    %v4547 = vpack.c.b16 %v4429, %v4427
    %v4548 = vpack.c.b16 %v4430, %v4428
    %v4549 = vpack.c.b16 %v4433, %v4431
    %v4550 = vpack.c.b16 %v4434, %v4432
    %v4551 = vpack.c.b16 %v4437, %v4435
    %v4552 = vpack.c.b16 %v4438, %v4436
    %v4553 = vpack.c.b16 %v4441, %v4439
    %v4554 = vpack.c.b16 %v4442, %v4440
    %v4555 = vpack.c.b16 %v4445, %v4443
    %v4556 = vpack.c.b16 %v4446, %v4444
    %v4557 = vpack.c.b16 %v4449, %v4447
    %v4558 = vpack.c.b16 %v4450, %v4448
    %v4559 = vpack.c.b16 %v4453, %v4451
    %v4560 = vpack.c.b16 %v4454, %v4452
    %v4561 = vpack.c.b16 %v4457, %v4455
    %v4562 = vpack.c.b16 %v4458, %v4456
    %v4563 = vpack.c.b16 %v4461, %v4459
    %v4564 = vpack.c.b16 %v4462, %v4460
    %v4565 = vpack.c.b16 %v4465, %v4463
    %v4566 = vpack.c.b16 %v4466, %v4464
    %v4567 = vpack.c.b16 %v4469, %v4467
    %v4568 = vpack.c.b16 %v4470, %v4468
    %v4569 = vpack.c.b16 %v4473, %v4471
    %v4570 = vpack.c.b16 %v4474, %v4472
    %v4571 = vpack.c.b16 %v4477, %v4475
    %v4572 = vpack.c.b16 %v4478, %v4476
    %v4573 = vpack.c.b16 %v4481, %v4479
    %v4574 = vpack.c.b16 %v4482, %v4480
    %v4575 = vpack.c.b16 %v4485, %v4483
    %v4576 = vpack.c.b16 %v4486, %v4484
    %v4577 = vpack.c.b16 %v4489, %v4487
    %v4578 = vpack.c.b16 %v4490, %v4488
    %v4579 = vpack.c.b16 %v4493, %v4491
    %v4580 = vpack.c.b16 %v4494, %v4492
    %v4581 = vpack.c.b16 %v4497, %v4495
    %v4582 = vpack.c.b16 %v4498, %v4496
    %v4583 = vpack.c.b16 %v4501, %v4499
    %v4584 = vpack.c.b16 %v4502, %v4500
    %v4585 = vpack.c.b16 %v4505, %v4503
    %v4586 = vpack.c.b16 %v4506, %v4504
    %v4587 = vpack.c.b16 %v4509, %v4507
    %v4588 = vpack.c.b16 %v4510, %v4508
    %v4589 = vpack.c.b16 %v4513, %v4511
    %v4590 = vpack.c.b16 %v4514, %v4512
    %v4591 = vpack.c.b16 %v4517, %v4515
    %v4592 = vpack.c.b16 %v4518, %v4516
    %v4593 = vpack.c.b16 %v4521, %v4519
    %v4594 = vpack.c.b16 %v4522, %v4520
    %v4595 = vpack.c.b16 %v4525, %v4523
    %v4596 = vpack.c.b16 %v4526, %v4524
    %v4597 = vpack.c.b16 %v4529, %v4527
    %v4598 = vpack.c.b16 %v4530, %v4528
    %v4599 = vpack.c.b16 %v4533, %v4531
    %v4600 = vpack.c.b16 %v4534, %v4532
    %v4601 = vpack.c.b16 %v4537, %v4535
    %v4602 = vpack.c.b16 %v4538, %v4536
    %4667 = vmatprep.subr.bf16.mxu0 %v4540
    %4668 = vmatpush1.bf16.msra.mxu0 %v4539
    %4669 = vmatprep.subr.bf16.mxu0 %v4542
    %4670 = vmatpush1.bf16.msra.mxu0 %v4541
    %4671 = vmatprep.subr.bf16.mxu0 %v4544
    %4672 = vmatpush1.bf16.msra.mxu0 %v4543
    %4673 = vmatprep.subr.bf16.mxu0 %v4546
    %4674 = vmatpush1.bf16.msra.mxu0 %v4545
    %4675 = vmatprep.subr.bf16.mxu0 %v4548
    %4676 = vmatpush1.bf16.msra.mxu0 %v4547
    %4677 = vmatprep.subr.bf16.mxu0 %v4550
    %4678 = vmatpush1.bf16.msra.mxu0 %v4549
    %4679 = vmatprep.subr.bf16.mxu0 %v4552
    %4680 = vmatpush1.bf16.msra.mxu0 %v4551
    %4681 = vmatprep.subr.bf16.mxu0 %v4554
    %4682 = vmatpush1.bf16.msra.mxu0 %v4553
    %4683 = vmatprep.subr.bf16.mxu0 %v4556
    %4684 = vmatpush1.bf16.msra.mxu0 %v4555
    %4685 = vmatprep.subr.bf16.mxu0 %v4558
    %4686 = vmatpush1.bf16.msra.mxu0 %v4557
    %4687 = vmatprep.subr.bf16.mxu0 %v4560
    %4688 = vmatpush1.bf16.msra.mxu0 %v4559
    %4689 = vmatprep.subr.bf16.mxu0 %v4562
    %4690 = vmatpush1.bf16.msra.mxu0 %v4561
    %4691 = vmatprep.subr.bf16.mxu0 %v4564
    %4692 = vmatpush1.bf16.msra.mxu0 %v4563
    %4693 = vmatprep.subr.bf16.mxu0 %v4566
    %4694 = vmatpush1.bf16.msra.mxu0 %v4565
    %4695 = vmatprep.subr.bf16.mxu0 %v4568
    %4696 = vmatpush1.bf16.msra.mxu0 %v4567
    %4697 = vmatprep.subr.bf16.mxu0 %v4570
    %4698 = vmatpush1.bf16.msra.mxu0 %v4569
    %4699 = vmatprep.mubr.bf16.mxu0 %v4268
    %4700 = vmatmul.mubr.bf16.gmra.mrb[0].mxu0 %v4267
    %v4701 = vpop.f32.mrb[0].mxu0
    %v4702 = vadd.f32 %v4340, %v4701
    %v4703 = vpop.f32.mrb[0].mxu0
    %v4704 = vadd.f32 %v4344, %v4703
    %v4705 = vpop.f32.mrb[0].mxu0
    %v4706 = vpop.f32.mrb[0].mxu0
    %4707 = vdwg.mxu0
    %4708 = vmatprep.subr.bf16.mxu0 %v4572
    %4709 = vmatpush1.bf16.msra.mxu0 %v4571
    %4710 = vmatprep.subr.bf16.mxu0 %v4574
    %4711 = vmatpush1.bf16.msra.mxu0 %v4573
    %4712 = vmatprep.subr.bf16.mxu0 %v4576
    %4713 = vmatpush1.bf16.msra.mxu0 %v4575
    %4714 = vmatprep.subr.bf16.mxu0 %v4578
    %4715 = vmatpush1.bf16.msra.mxu0 %v4577
    %4716 = vmatprep.subr.bf16.mxu0 %v4580
    %4717 = vmatpush1.bf16.msra.mxu0 %v4579
    %4718 = vmatprep.subr.bf16.mxu0 %v4582
    %4719 = vmatpush1.bf16.msra.mxu0 %v4581
    %4720 = vmatprep.subr.bf16.mxu0 %v4584
    %4721 = vmatpush1.bf16.msra.mxu0 %v4583
    %4722 = vmatprep.subr.bf16.mxu0 %v4586
    %4723 = vmatpush1.bf16.msra.mxu0 %v4585
    %4724 = vmatprep.subr.bf16.mxu0 %v4588
    %4725 = vmatpush1.bf16.msra.mxu0 %v4587
    %4726 = vmatprep.subr.bf16.mxu0 %v4590
    %4727 = vmatpush1.bf16.msra.mxu0 %v4589
    %4728 = vmatprep.subr.bf16.mxu0 %v4592
    %4729 = vmatpush1.bf16.msra.mxu0 %v4591
    %4730 = vmatprep.subr.bf16.mxu0 %v4594
    %4731 = vmatpush1.bf16.msra.mxu0 %v4593
    %4732 = vmatprep.subr.bf16.mxu0 %v4596
    %4733 = vmatpush1.bf16.msra.mxu0 %v4595
    %4734 = vmatprep.subr.bf16.mxu0 %v4598
    %4735 = vmatpush1.bf16.msra.mxu0 %v4597
    %4736 = vmatprep.subr.bf16.mxu0 %v4600
    %4737 = vmatpush1.bf16.msra.mxu0 %v4599
    %4738 = vmatprep.subr.bf16.mxu0 %v4602
    %4739 = vmatpush1.bf16.msra.mxu0 %v4601
    %4740 = vmatprep.mubr.bf16.mxu0 %v4270
    %4741 = vmatmul.mubr.bf16.gmra.mrb[0].mxu0 %v4269
    %v4742 = vpop.f32.mrb[0].mxu0
    %v4743 = vadd.f32 %v4702, %v4742
    %v4744 = vpop.f32.mrb[0].mxu0
    %v4745 = vadd.f32 %v4704, %v4744
    %v4746 = vpop.f32.mrb[0].mxu0
    %v4747 = vpop.f32.mrb[0].mxu0
    %4748 = vdwg.mxu0
    %v4749 = vmax.f32 %v4743, 0.0
    %v4750 = vmax.f32 %v4745, 0.0
    %v4751 = vpack.c.bf16 %v4749, %v4749
    %v4752 = vpack.c.bf16 %v4750, %v4750
    %v4753 = vld [vmem:[#allocation29] sm:$0xf]
    %v4754 = vld [vmem:[#allocation29 + $0x4] sm:$0xf]
    %v4755 = vld [vmem:[#allocation29 + $0x8] sm:$0xf]
    %v4756 = vld [vmem:[#allocation29 + $0xc] sm:$0xf]
    %v4757 = vld [vmem:[#allocation29 + $0x10] sm:$0xf]
    %v4758 = vld [vmem:[#allocation29 + $0x14] sm:$0xf]
    %v4759 = vld [vmem:[#allocation29 + $0x18] sm:$0xf]
    %v4760 = vld [vmem:[#allocation29 + $0x1c] sm:$0xf]
    %v4761 = vld [vmem:[#allocation29 + $0x20] sm:$0xf]
    %v4762 = vld [vmem:[#allocation29 + $0x24] sm:$0xf]
    %v4763 = vld [vmem:[#allocation29 + $0x28] sm:$0xf]
    %v4764 = vld [vmem:[#allocation29 + $0x2c] sm:$0xf]
    %v4765 = vld [vmem:[#allocation29 + $0x30] sm:$0xf]
    %v4766 = vld [vmem:[#allocation29 + $0x34] sm:$0xf]
    %v4767 = vld [vmem:[#allocation29 + $0x38] sm:$0xf]
    %v4768 = vld [vmem:[#allocation29 + $0x3c] sm:$0xf]
    %v4769 = vld [vmem:[#allocation29 + $0x40] sm:$0xf]
    %v4770 = vld [vmem:[#allocation29 + $0x44] sm:$0xf]
    %v4771 = vld [vmem:[#allocation29 + $0x48] sm:$0xf]
    %v4772 = vld [vmem:[#allocation29 + $0x4c] sm:$0xf]
    %v4773 = vld [vmem:[#allocation29 + $0x50] sm:$0xf]
    %v4774 = vld [vmem:[#allocation29 + $0x54] sm:$0xf]
    %v4775 = vld [vmem:[#allocation29 + $0x58] sm:$0xf]
    %v4776 = vld [vmem:[#allocation29 + $0x5c] sm:$0xf]
    %v4777 = vld [vmem:[#allocation29 + $0x60] sm:$0xf]
    %v4778 = vld [vmem:[#allocation29 + $0x64] sm:$0xf]
    %v4779 = vld [vmem:[#allocation29 + $0x68] sm:$0xf]
    %v4780 = vld [vmem:[#allocation29 + $0x6c] sm:$0xf]
    %v4781 = vld [vmem:[#allocation29 + $0x70] sm:$0xf]
    %v4782 = vld [vmem:[#allocation29 + $0x74] sm:$0xf]
    %v4783 = vld [vmem:[#allocation29 + $0x78] sm:$0xf]
    %v4784 = vld [vmem:[#allocation29 + $0x7c] sm:$0xf]
    %v4785 = vld [vmem:[#allocation31] sm:$0x1]
    %v4787 = vlaneseq
    %v4788 = vshrl.u32 %v4787, 7
    %v4789 = vsub.s32 0, %v4788
    %v4790 = vrot.slane %v4785, %v4789
    %v4824 = vunpack.c.l.b16 %v4753
    %v4825 = vunpack.c.l.b16 %v4754
    %v4826 = vunpack.c.l.b16 %v4755
    %v4827 = vunpack.c.l.b16 %v4756
    %v4828 = vunpack.c.l.b16 %v4757
    %v4829 = vunpack.c.l.b16 %v4758
    %v4830 = vunpack.c.l.b16 %v4759
    %v4831 = vunpack.c.l.b16 %v4760
    %v4832 = vunpack.c.l.b16 %v4761
    %v4833 = vunpack.c.l.b16 %v4762
    %v4834 = vunpack.c.l.b16 %v4763
    %v4835 = vunpack.c.l.b16 %v4764
    %v4836 = vunpack.c.l.b16 %v4765
    %v4837 = vunpack.c.l.b16 %v4766
    %v4838 = vunpack.c.l.b16 %v4767
    %v4839 = vunpack.c.l.b16 %v4768
    %v4840 = vunpack.c.l.b16 %v4769
    %v4841 = vunpack.c.l.b16 %v4770
    %v4842 = vunpack.c.l.b16 %v4771
    %v4843 = vunpack.c.l.b16 %v4772
    %v4844 = vunpack.c.l.b16 %v4773
    %v4845 = vunpack.c.l.b16 %v4774
    %v4846 = vunpack.c.l.b16 %v4775
    %v4847 = vunpack.c.l.b16 %v4776
    %v4848 = vunpack.c.l.b16 %v4777
    %v4849 = vunpack.c.l.b16 %v4778
    %v4850 = vunpack.c.l.b16 %v4779
    %v4851 = vunpack.c.l.b16 %v4780
    %v4852 = vunpack.c.l.b16 %v4781
    %v4853 = vunpack.c.l.b16 %v4782
    %v4854 = vunpack.c.l.b16 %v4783
    %v4855 = vunpack.c.l.b16 %v4784
    %v4856 = vpack.c.b16 %v4825, %v4824
    %v4857 = vpack.c.b16 %v4827, %v4826
    %v4858 = vpack.c.b16 %v4829, %v4828
    %v4859 = vpack.c.b16 %v4831, %v4830
    %v4860 = vpack.c.b16 %v4833, %v4832
    %v4861 = vpack.c.b16 %v4835, %v4834
    %v4862 = vpack.c.b16 %v4837, %v4836
    %v4863 = vpack.c.b16 %v4839, %v4838
    %v4864 = vpack.c.b16 %v4841, %v4840
    %v4865 = vpack.c.b16 %v4843, %v4842
    %v4866 = vpack.c.b16 %v4845, %v4844
    %v4867 = vpack.c.b16 %v4847, %v4846
    %v4868 = vpack.c.b16 %v4849, %v4848
    %v4869 = vpack.c.b16 %v4851, %v4850
    %v4870 = vpack.c.b16 %v4853, %v4852
    %v4871 = vpack.c.b16 %v4855, %v4854
    %4888 = vmatprep.subr.bf16.mxu0 0
    %4889 = vmatpush1.bf16.msra.mxu0 %v4856
    %4890 = vmatprep.subr.bf16.mxu0 0
    %4891 = vmatpush1.bf16.msra.mxu0 %v4857
    %4892 = vmatprep.subr.bf16.mxu0 0
    %4893 = vmatpush1.bf16.msra.mxu0 %v4858
    %4894 = vmatprep.subr.bf16.mxu0 0
    %4895 = vmatpush1.bf16.msra.mxu0 %v4859
    %4896 = vmatprep.subr.bf16.mxu0 0
    %4897 = vmatpush1.bf16.msra.mxu0 %v4860
    %4898 = vmatprep.subr.bf16.mxu0 0
    %4899 = vmatpush1.bf16.msra.mxu0 %v4861
    %4900 = vmatprep.subr.bf16.mxu0 0
    %4901 = vmatpush1.bf16.msra.mxu0 %v4862
    %4902 = vmatprep.subr.bf16.mxu0 0
    %4903 = vmatpush1.bf16.msra.mxu0 %v4863
    %4904 = vmatprep.subr.bf16.mxu0 0
    %4905 = vmatpush1.bf16.msra.mxu0 %v4864
    %4906 = vmatprep.subr.bf16.mxu0 0
    %4907 = vmatpush1.bf16.msra.mxu0 %v4865
    %4908 = vmatprep.subr.bf16.mxu0 0
    %4909 = vmatpush1.bf16.msra.mxu0 %v4866
    %4910 = vmatprep.subr.bf16.mxu0 0
    %4911 = vmatpush1.bf16.msra.mxu0 %v4867
    %4912 = vmatprep.subr.bf16.mxu0 0
    %4913 = vmatpush1.bf16.msra.mxu0 %v4868
    %4914 = vmatprep.subr.bf16.mxu0 0
    %4915 = vmatpush1.bf16.msra.mxu0 %v4869
    %4916 = vmatprep.subr.bf16.mxu0 0
    %4917 = vmatpush1.bf16.msra.mxu0 %v4870
    %4918 = vmatprep.subr.bf16.mxu0 0
    %4919 = vmatpush1.bf16.msra.mxu0 %v4871
    %4920 = vmatprep.mubr.bf16.mxu0 %v4752
    %4921 = vmatmul.mubr.bf16.gmra.mrb[0].mxu0 %v4751
    %v4922 = vpop.f32.mrb[0].mxu0
    %v4923 = vadd.f32 %v4790, %v4922
    %v4924 = vpop.f32.mrb[0].mxu0
    %v4925 = vpop.f32.mrb[0].mxu0
    %v4926 = vpop.f32.mrb[0].mxu0
    %4927 = vdwg.mxu0
    %vm4928 = vcmask 60416
    %v4929 = vsel %vm4928, %v4923, -inf
    %4930 = vmax.xlane.f32.xlu0 %v4929
    %v4931 = vpop.xlane.xlu0 %4930
    %v4932 = vsub.f32 %v4923, %v4931
    %v4933 = vmul.f32 %v4932, 1.442695
    %v4934 = vpow.pop %v4933
    %v4935 = vsel %vm4928, %v4934, 0.0
    %4936 = vadd.xlane.f32.xlu0 %v4935
    %v4937 = vpop.xlane.xlu0 %4936
    %v4938 = vlog2.pop %v4937
    %v4939 = vmul.f32 %v4938, 0.6931472
    %v4940 = vsub.f32 %v4932, %v4939
    %4941 = vst.msk [vmem:[#allocation32] sm:$0xf] %vm4928, %v4940
    // Predicated region
    $region154: #{gat_forward.1} parent=1 // pred_check
      _
    $region155: #{gat_forward.1} parent=1 // pred_check_branch
      %4943 = sbr.rel (0) target = $region157
    $region156: #{gat_forward.1} parent=1 // pred_region
      %s4945 = ssub.s32 64, 64
      %4946 = vsyncadd [#allocation4], %s4945
      %s4948 = sshll.u32 [#allocation32], 4
      %s4949 = int_to_ptr.vmem [resolvable:$true] %s4948
      %4951 = dma.vmem_to_hbm [thread:$0]  %s4949, 64, %s19, [#allocation4]
    $region157: #{gat_forward.1} parent=1 // pred_fallthru
      _
    // Predicated region
    $region158: #{gat_forward.1} parent=1 // pred_check
      _
    $region159: #{gat_forward.1} parent=1 // pred_check_branch
      %4953 = sbr.rel (0) target = $region161
    $region160: #{gat_forward.1} parent=1 // pred_region
      %4954 = dma.done [#allocation4], 64
    $region161: #{gat_forward.1} parent=1 // pred_fallthru
      _
    %4955 = vsyncpa [#allocation3], 1
    %4956 = vsyncpa [#allocation6], 1
    %4957 = vsyncpa [#allocation9], 1
    %4958 = vsyncpa [#allocation12], 1
    %4959 = vsyncpa [#allocation15], 1
    %4960 = vsyncpa [#allocation18], 1
    %4961 = vsyncpa [#allocation21], 1
    %4962 = vsyncpa [#allocation24], 1
    %4963 = vsyncpa [#allocation27], 1
    %4964 = vsyncpa [#allocation30], 1
    %4965 = vsyncpa [#allocation4], 1

</llo_original>
